<compile_context>
chip_gen: v5e
topology: v5e:2x2
jax: 0.10.0
libtpu: 0.0.40
codegen_flags: <defaults>
</compile_context>

<pallas_src>
import functools
import math

import jax
import jax.numpy as jnp
from jax.experimental import pallas as pl
from jax.experimental.pallas import tpu as pltpu


# ----------------------------------------------------------------------------
# Small helpers
# ----------------------------------------------------------------------------

def _round_up(x, m):
    return (x + m - 1) // m * m


def _pick_tile(dim, target, align):
    """Return (tile, padded_dim).

    Preference order (to avoid the pad + slice HBM round trips):
      1. dim <= target          -> full-dim block (always legal, no padding)
      2. a divisor of dim that is a multiple of `align` and <= target
      3. pad dim up to a multiple of `target` (rare fallback)
    """
    if dim <= target:
        return dim, dim
    t = (target // align) * align
    while t >= align:
        if dim % t == 0:
            return t, dim
        t -= align
    return target, _round_up(dim, target)


def _pick_seq_tile(L, target):
    """Sequence tile for attention: a divisor of L (multiple of 8) <= target."""
    if L <= target:
        return L
    t = (target // 8) * 8
    while t >= 8:
        if L % t == 0:
            return t
        t -= 8
    # TODO(synk): if L has no aligned divisor, pad L and mask padded KV rows.
    return L


def _pad2(a, rows, cols):
    r, c = a.shape
    if (r, c) == (rows, cols):
        return a
    return jnp.pad(a, ((0, rows - r), (0, cols - c)))


# ----------------------------------------------------------------------------
# Kernel 1: tiled matmul + bias (+ GELU) (+ residual), bf16 in / f32 accumulate
# ----------------------------------------------------------------------------

def _matmul_bias_kernel(x_ref, w_ref, b_ref, *rest, activation, has_residual):
    if has_residual:
        r_ref, o_ref, acc_ref = rest
    else:
        o_ref, acc_ref = rest
    k = pl.program_id(2)

    @pl.when(k == 0)
    def _():
        acc_ref[...] = jnp.zeros_like(acc_ref)

    acc_ref[...] += jnp.dot(x_ref[...], w_ref[...],
                            preferred_element_type=jnp.float32)

    @pl.when(k == pl.num_programs(2) - 1)
    def _():
        acc = acc_ref[...] + b_ref[...].astype(jnp.float32)
        if activation == "gelu":
            # TODO(synk): PyTorch nn.GELU defaults to exact erf; tanh approximation used here.
            acc = jax.nn.gelu(acc)
        if has_residual:
            acc = acc + r_ref[...].astype(jnp.float32)
        o_ref[...] = acc.astype(o_ref.dtype)


def matmul_bias(x, w, b, *, activation="none", residual=None,
                tm=512, tn=512, tk=512, out_dtype=None):
    """(M, K) @ (K, N) + b, optional fused GELU / residual-add epilogue."""
    M, K = x.shape
    K2, N = w.shape
    assert K == K2
    out_dtype = out_dtype or x.dtype

    tm_, Mp = _pick_tile(M, tm, 8)
    tn_, Np = _pick_tile(N, tn, 128)
    tk_, Kp = _pick_tile(K, tk, 128)

    xp = _pad2(x, Mp, Kp)
    wp = _pad2(w, Kp, Np)
    bp = _pad2(b.reshape(1, N), 1, Np)

    args = [xp, wp, bp]
    in_specs = [
        pl.BlockSpec((tm_, tk_), lambda i, j, k: (i, k)),
        pl.BlockSpec((tk_, tn_), lambda i, j, k: (k, j)),
        pl.BlockSpec((1, tn_), lambda i, j, k: (0, j)),
    ]
    if residual is not None:
        # NOTE: the residual tile is double-buffered for the whole K loop although it
        # is only consumed at k == last; counted in the VMEM budget (tiles <= 512).
        args.append(_pad2(residual, Mp, Np))
        in_specs.append(pl.BlockSpec((tm_, tn_), lambda i, j, k: (i, j)))

    kernel = functools.partial(_matmul_bias_kernel, activation=activation,
                               has_residual=residual is not None)
    out = pl.pallas_call(
        kernel,
        out_shape=jax.ShapeDtypeStruct((Mp, Np), out_dtype),
        grid=(Mp // tm_, Np // tn_, Kp // tk_),
        in_specs=in_specs,
        out_specs=pl.BlockSpec((tm_, tn_), lambda i, j, k: (i, j)),
        scratch_shapes=[pltpu.VMEM((tm_, tn_), jnp.float32)],
        compiler_params=pltpu.CompilerParams(
            dimension_semantics=("parallel", "parallel", "arbitrary")),
    )(*args)
    if (Mp, Np) != (M, N):
        out = out[:M, :N]
    return out


# ----------------------------------------------------------------------------
# Kernel 2: fused LayerNorm -> matmul + bias (+ GELU), full-N weight block.
#           LN is computed exactly once per row (grid only over M).
#           Optionally writes the output as `splits` equal lane-dense pieces
#           (used to emit q / k / v separately from the fused QKV projection).
# ----------------------------------------------------------------------------

def _ln_matmul_bias_kernel(x_ref, g_ref, bl_ref, w_ref, b_ref, *o_refs,
                           activation, eps, splits):
    x = x_ref[...].astype(jnp.float32)
    mu = jnp.mean(x, axis=-1, keepdims=True)
    xc = x - mu
    var = jnp.mean(xc * xc, axis=-1, keepdims=True)
    h = xc * jax.lax.rsqrt(var + eps)
    h = h * g_ref[...].astype(jnp.float32) + bl_ref[...].astype(jnp.float32)
    acc = jnp.dot(h.astype(w_ref.dtype), w_ref[...],
                  preferred_element_type=jnp.float32)
    acc = acc + b_ref[...].astype(jnp.float32)
    if activation == "gelu":
        # TODO(synk): PyTorch nn.GELU defaults to exact erf; tanh approximation used here.
        acc = jax.nn.gelu(acc)
    n = acc.shape[-1] // splits
    for s in range(splits):
        o_refs[s][...] = acc[:, s * n:(s + 1) * n].astype(o_refs[s].dtype)


def layernorm_matmul_bias(x, g, bl, w, b, *, activation="none", splits=1,
                          tm=512, out_dtype=None):
    """LayerNorm(x) @ w + b fused in one kernel (LN stats exact over un-padded K)."""
    M, K = x.shape
    K2, N = w.shape
    assert K == K2 and N % splits == 0
    out_dtype = out_dtype or x.dtype

    tm_, Mp = _pick_tile(M, tm, 8)
    xp = _pad2(x, Mp, K)                       # never pad K: LN stats must be exact
    ns = N // splits

    outs = pl.pallas_call(
        functools.partial(_ln_matmul_bias_kernel, activation=activation,
                          eps=1e-5, splits=splits),
        out_shape=tuple(jax.ShapeDtypeStruct((Mp, ns), out_dtype)
                        for _ in range(splits)),
        grid=(Mp // tm_,),
        in_specs=[
            pl.BlockSpec((tm_, K), lambda i: (i, 0)),
            pl.BlockSpec((1, K), lambda i: (0, 0)),
            pl.BlockSpec((1, K), lambda i: (0, 0)),
            pl.BlockSpec((K, N), lambda i: (0, 0)),   # full-N weight block (fits VMEM)
            pl.BlockSpec((1, N), lambda i: (0, 0)),
        ],
        out_specs=tuple(pl.BlockSpec((tm_, ns), lambda i: (i, 0))
                        for _ in range(splits)),
        compiler_params=pltpu.CompilerParams(dimension_semantics=("parallel",)),
    )(xp, g.reshape(1, K), bl.reshape(1, K), w, b.reshape(1, N))

    outs = tuple(o[:M] if Mp != M else o for o in outs)
    return outs[0] if splits == 1 else outs


# ----------------------------------------------------------------------------
# Kernel 3: flash-style multi-head self attention.
#           grid = (batch, q-tiles, kv-tiles); online softmax with m/l/acc scratch.
#           Heads stay on the lane axis (no reshape/transpose relayouts in-kernel).
# ----------------------------------------------------------------------------

def _flash_attn_kernel(q_ref, k_ref, v_ref, o_ref, m_sc, l_sc, acc_sc, *,
                       num_heads, scale):
    ki = pl.program_id(2)

    @pl.when(ki == 0)
    def _():
        m_sc[...] = jnp.full(m_sc.shape, -jnp.inf, jnp.float32)
        l_sc[...] = jnp.zeros(l_sc.shape, jnp.float32)
        acc_sc[...] = jnp.zeros(acc_sc.shape, jnp.float32)

    D = q_ref.shape[-1]
    dh = D // num_heads

    # Per-head lane-contiguous slices of the (tile, D) blocks.  1/sqrt(dh) is folded
    # into q; q @ k^T is expressed as a dot_general contraction on dh so no operand
    # transpose is materialised.  bf16 operands, f32 MXU accumulation; softmax f32.
    for h in range(num_heads):
        lo, hi = h * dh, (h + 1) * dh
        q = q_ref[0, :, lo:hi] * scale                              # (tq, dh) bf16
        k = k_ref[0, :, lo:hi]                                      # (tk, dh) bf16
        v = v_ref[0, :, lo:hi]                                      # (tk, dh) bf16

        s = jax.lax.dot_general(q, k, (((1,), (1,)), ((), ())),
                                preferred_element_type=jnp.float32)  # (tq, tk) f32

        m_prev = m_sc[h]                                            # (tq, 1)
        m_new = jnp.maximum(m_prev, jnp.max(s, axis=-1, keepdims=True))
        alpha = jnp.exp(m_prev - m_new)
        p = jnp.exp(s - m_new)
        l_sc[h] = alpha * l_sc[h] + jnp.sum(p, axis=-1, keepdims=True)
        acc_sc[:, lo:hi] = alpha * acc_sc[:, lo:hi] + jnp.dot(
            p.astype(v.dtype), v, preferred_element_type=jnp.float32)
        m_sc[h] = m_new

    @pl.when(ki == pl.num_programs(2) - 1)
    def _():
        for h in range(num_heads):
            lo, hi = h * dh, (h + 1) * dh
            inv_l = pl.reciprocal(l_sc[h], approx=True)
            o_ref[0, :, lo:hi] = (acc_sc[:, lo:hi] * inv_l).astype(o_ref.dtype)


def attention(q, k, v, num_heads, *, tq=256, tk=512):
    """q, k, v: (B, L, D) with heads packed on the feature (lane) axis -> (B, L, D)."""
    B, L, D = q.shape
    dh = D // num_heads
    scale = 1.0 / math.sqrt(dh)
    tq_ = _pick_seq_tile(L, tq)
    tk_ = _pick_seq_tile(L, tk)
    # VMEM per step ~ O(tq*D + tk*D + H*tq*tk) -- independent of L, fits the v7x budget.
    return pl.pallas_call(
        functools.partial(_flash_attn_kernel, num_heads=num_heads, scale=scale),
        out_shape=jax.ShapeDtypeStruct((B, L, D), q.dtype),
        grid=(B, L // tq_, L // tk_),
        in_specs=[
            pl.BlockSpec((1, tq_, D), lambda b, qi, ki: (b, qi, 0)),
            pl.BlockSpec((1, tk_, D), lambda b, qi, ki: (b, ki, 0)),
            pl.BlockSpec((1, tk_, D), lambda b, qi, ki: (b, ki, 0)),
        ],
        out_specs=pl.BlockSpec((1, tq_, D), lambda b, qi, ki: (b, qi, 0)),
        scratch_shapes=[
            pltpu.VMEM((num_heads, tq_, 1), jnp.float32),   # running max  m
            pltpu.VMEM((num_heads, tq_, 1), jnp.float32),   # running sum  l
            pltpu.VMEM((tq_, D), jnp.float32),              # running acc  (heads on lanes)
        ],
        # Two parallel axes (batch, q-tiles) keep both v7x TensorCores busy even at B<=2.
        compiler_params=pltpu.CompilerParams(
            dimension_semantics=("parallel", "parallel", "arbitrary")),
    )(q, k, v)


# ----------------------------------------------------------------------------
# Model pieces (plain-JAX glue between the fused Pallas kernels)
# ----------------------------------------------------------------------------

def patch_embedding(x, p, patch_size):
    """PatchEmbedding: non-overlapping Conv2d (kernel = stride = patch) + flatten."""
    B, C, F, T = x.shape
    ph, pw = patch_size
    Hp, Wp = F // ph, T // pw
    xp = x.reshape(B, C, Hp, ph, Wp, pw).transpose(0, 2, 4, 1, 3, 5)
    xp = xp.reshape(B * Hp * Wp, C * ph * pw).astype(p["patch_w"].dtype)
    emb = matmul_bias(xp, p["patch_w"], p["patch_b"])
    D = p["patch_w"].shape[1]
    return emb.reshape(B, Hp * Wp, D), Hp, Wp


def transformer_block(x, p, num_heads):
    """Pre-LN transformer block: x + MHSA(LN(x)); x + MLP(LN(x)).
    LN / bias / GELU / residual are fused into the matmul kernels; the QKV projection
    emits q, k, v separately so attention reads lane-dense (B, L, D) slabs directly."""
    B, L, D = x.shape
    x2 = x.reshape(B * L, D)

    # fused LN + QKV projection  -> three (B*L, D) outputs (no packed-QKV HBM repack)
    q, k, v = layernorm_matmul_bias(x2, p["ln1_g"], p["ln1_b"],
                                    p["qkv_w"], p["qkv_b"], splits=3)
    attn = attention(q.reshape(B, L, D), k.reshape(B, L, D), v.reshape(B, L, D),
                     num_heads)                                     # (B, L, D)
    # output projection with fused residual add
    x2 = matmul_bias(attn.reshape(B * L, D), p["proj_w"], p["proj_b"], residual=x2)

    # fused LN + MLP1 + GELU, then MLP2 with fused residual add
    h = layernorm_matmul_bias(x2, p["ln2_g"], p["ln2_b"], p["mlp_w1"], p["mlp_b1"],
                              activation="gelu")
    x2 = matmul_bias(h, p["mlp_w2"], p["mlp_b2"], residual=x2)
    return x2.reshape(B, L, D)


def patch_merging(x, Hp, Wp, p):
    """Swin-style 2x2 patch merging: concat 4 neighbours, fused LN + linear 4D -> 2D."""
    B, L, D = x.shape
    xg = x.reshape(B, Hp, Wp, D)
    x0 = xg[:, 0::2, 0::2]
    x1 = xg[:, 1::2, 0::2]
    x2 = xg[:, 0::2, 1::2]
    x3 = xg[:, 1::2, 1::2]
    xc = jnp.concatenate([x0, x1, x2, x3], axis=-1)                 # (B, Hp/2, Wp/2, 4D)
    Hd, Wd = Hp // 2, Wp // 2
    xc = xc.reshape(B * Hd * Wd, 4 * D)
    xc = layernorm_matmul_bias(xc, p["merge_ln_g"], p["merge_ln_b"],
                               p["merge_w"], p["merge_b"])
    D_out = p["merge_w"].shape[1]
    return xc.reshape(B, Hd * Wd, D_out), Hd, Wd


def clap_audio_encoder_forward(params, x, *, patch_size, num_heads):
    """Forward of MicrosoftCLAPAudioEncoder2023 (aggregator=None, head=None)."""
    # TODO(synk): Swin windowed / shifted attention and relative position bias of the real
    #             HTSAT backbone are not modeled; global MHSA blocks are used instead.
    emb, Hp, Wp = patch_embedding(x, params["embedding"], patch_size)   # (B, Hp*Wp, D)
    h = transformer_block(emb, params["backbone"]["block1"], num_heads)
    h, Hd, Wd = patch_merging(h, Hp, Wp, params["backbone"]["merge"])
    out = transformer_block(h, params["backbone"]["block2"], num_heads)
    # aggregator is None and head is None -> return backbone output (B, patches, dim)
    # TODO(synk): aggregator / head variants (mean-pool + projection) omitted since the
    #             reference forward defaults to None for both.
    return out.astype(jnp.float32)


# ----------------------------------------------------------------------------
# Deterministic parameter construction (matmul weights bf16, LN/bias params f32)
# TODO(synk): for peak TPU throughput, choose embed_dim / head_dim as multiples of 128
#             at the config level (lane-dense stores); small demo dims kept here.
# ----------------------------------------------------------------------------

def make_params(key, *, in_channels, patch_size, embed_dim, num_heads, mlp_ratio=2):
    ph, pw = patch_size
    patch_dim = in_channels * ph * pw
    D = embed_dim
    D2 = 2 * embed_dim

    def normal(k, shape, scale=0.02):
        return (scale * jax.random.normal(k, shape, dtype=jnp.float32)).astype(jnp.bfloat16)

    keys = jax.random.split(key, 16)

    def block_params(kb, dim):
        ks = jax.random.split(kb, 4)
        hid = mlp_ratio * dim
        return {
            "ln1_g": jnp.ones((dim,), jnp.float32),
            "ln1_b": jnp.zeros((dim,), jnp.float32),
            "qkv_w": normal(ks[0], (dim, 3 * dim)),
            "qkv_b": jnp.zeros((3 * dim,), jnp.float32),
            "proj_w": normal(ks[1], (dim, dim)),
            "proj_b": jnp.zeros((dim,), jnp.float32),
            "ln2_g": jnp.ones((dim,), jnp.float32),
            "ln2_b": jnp.zeros((dim,), jnp.float32),
            "mlp_w1": normal(ks[2], (dim, hid)),
            "mlp_b1": jnp.zeros((hid,), jnp.float32),
            "mlp_w2": normal(ks[3], (hid, dim)),
            "mlp_b2": jnp.zeros((dim,), jnp.float32),
        }

    params = {
        "embedding": {
            "patch_w": normal(keys[0], (patch_dim, D)),
            "patch_b": jnp.zeros((D,), jnp.float32),
        },
        "backbone": {
            "block1": block_params(keys[1], D),
            "merge": {
                "merge_ln_g": jnp.ones((4 * D,), jnp.float32),
                "merge_ln_b": jnp.zeros((4 * D,), jnp.float32),
                "merge_w": normal(keys[2], (4 * D, D2)),
                "merge_b": jnp.zeros((D2,), jnp.float32),
            },
            "block2": block_params(keys[3], D2),
        },
    }
    return params


# ----------------------------------------------------------------------------
# Main
# ----------------------------------------------------------------------------

if __name__ == "__main__":
    # Small shapes consistent with the module: (batch, fused_chunks, n_bins, n_frames)
    B, C, F, T = 2, 4, 16, 16
    PATCH_SIZE = (4, 4)
    EMBED_DIM = 32
    NUM_HEADS = 4

    key = jax.random.PRNGKey(0)
    k_in, k_par = jax.random.split(key)

    x = jax.random.normal(k_in, (B, C, F, T), dtype=jnp.float32)
    params = make_params(
        k_par,
        in_channels=C,
        patch_size=PATCH_SIZE,
        embed_dim=EMBED_DIM,
        num_heads=NUM_HEADS,
    )

    fwd = jax.jit(
        functools.partial(
            clap_audio_encoder_forward, patch_size=PATCH_SIZE, num_heads=NUM_HEADS
        )
    )
    out = fwd(params, x)
    out = jax.block_until_ready(out)

    # Expected: (batch, num_downsampled_patches, embedding_dim) = (2, 4, 64)
    assert out.shape == (B, (F // PATCH_SIZE[0] // 2) * (T // PATCH_SIZE[1] // 2),
                         2 * EMBED_DIM), out.shape
    assert jnp.all(jnp.isfinite(out))
    print("KERNEL_OK")
</pallas_src>

<mosaic_0001>
module attributes {stable_mosaic.version = 11 : i64} {
  func.func @_matmul_bias_kernel(%arg0: i32, %arg1: i32, %arg2: i32, %arg3: memref<32x64xbf16, #tpu.memory_space<vmem>>, %arg4: memref<64x32xbf16, #tpu.memory_space<vmem>>, %arg5: memref<1x32xf32, #tpu.memory_space<vmem>>, %arg6: memref<32x32xbf16, #tpu.memory_space<vmem>>, %arg7: memref<32x32xf32, #tpu.memory_space<vmem>>) attributes {dimension_semantics = [#tpu.dimension_semantics<parallel>, #tpu.dimension_semantics<parallel>, #tpu.dimension_semantics<arbitrary>], iteration_bounds = array<i64: 1, 1, 1>, scalar_prefetch = 0 : i64, scratch_operands = 1 : i64, tpu.core_type = #tpu.core_type<tc>, window_params = [{transform_indices = @transform_0, window_bounds = array<i64: 32, 64>}, {transform_indices = @transform_1, window_bounds = array<i64: 64, 32>}, {transform_indices = @transform_2, window_bounds = array<i64: 1, 32>}, {transform_indices = @transform_3, window_bounds = array<i64: 32, 32>}]} {
    %c0_i32 = arith.constant 0 : i32
    %0 = arith.cmpi eq, %arg2, %c0_i32 : i32
    %1 = arith.extui %0 : i1 to i32
    %c0_i32_0 = arith.constant 0 : i32
    %2 = arith.cmpi ne, %1, %c0_i32_0 : i32
    scf.if %2 {
      %cst_10 = arith.constant 0.000000e+00 : f32
      %12 = vector.broadcast %cst_10 : f32 to vector<32x32xf32>
      %c0_11 = arith.constant 0 : index
      %c0_12 = arith.constant 0 : index
      %13 = vector.load %arg7[%c0_11, %c0_12] : memref<32x32xf32, #tpu.memory_space<vmem>>, vector<32x32xf32>
      tpu.vector_store %arg7[%c0_11, %c0_12], %12 {strides = array<i32>} : memref<32x32xf32, #tpu.memory_space<vmem>>, vector<32x32xf32>,
    } else {
    }
    %c0 = arith.constant 0 : index
    %c0_1 = arith.constant 0 : index
    %3 = vector.load %arg7[%c0, %c0_1] : memref<32x32xf32, #tpu.memory_space<vmem>>, vector<32x32xf32>
    %c0_2 = arith.constant 0 : index
    %c0_3 = arith.constant 0 : index
    %4 = vector.load %arg3[%c0_2, %c0_3] : memref<32x64xbf16, #tpu.memory_space<vmem>>, vector<32x64xbf16>
    %c0_4 = arith.constant 0 : index
    %c0_5 = arith.constant 0 : index
    %5 = vector.load %arg4[%c0_4, %c0_5] : memref<64x32xbf16, #tpu.memory_space<vmem>>, vector<64x32xbf16>
    %cst = arith.constant dense<0.000000e+00> : vector<32x32xf32>
    %6 = tpu.matmul %4, %5, %cst {dimension_numbers = #tpu.dot_dimension_numbers<[1], [0], [0], [1], [0, 0, 1, 1], [], []>} : vector<32x64xbf16>, vector<64x32xbf16>, vector<32x32xf32> -> vector<32x32xf32>
    %7 = arith.addf %3, %6 : vector<32x32xf32>
    %c0_6 = arith.constant 0 : index
    %c0_7 = arith.constant 0 : index
    %8 = vector.load %arg7[%c0_6, %c0_7] : memref<32x32xf32, #tpu.memory_space<vmem>>, vector<32x32xf32>
    tpu.vector_store %arg7[%c0_6, %c0_7], %7 {strides = array<i32>} : memref<32x32xf32, #tpu.memory_space<vmem>>, vector<32x32xf32>,
    %c0_i32_8 = arith.constant 0 : i32
    %9 = arith.cmpi eq, %arg2, %c0_i32_8 : i32
    %10 = arith.extui %9 : i1 to i32
    %c0_i32_9 = arith.constant 0 : i32
    %11 = arith.cmpi ne, %10, %c0_i32_9 : i32
    scf.if %11 {
      %c0_10 = arith.constant 0 : index
      %c0_11 = arith.constant 0 : index
      %12 = vector.load %arg7[%c0_10, %c0_11] : memref<32x32xf32, #tpu.memory_space<vmem>>, vector<32x32xf32>
      %c0_12 = arith.constant 0 : index
      %c0_13 = arith.constant 0 : index
      %13 = vector.load %arg5[%c0_12, %c0_13] : memref<1x32xf32, #tpu.memory_space<vmem>>, vector<1x32xf32>
      %14 = vector.broadcast %13 : vector<1x32xf32> to vector<32x32xf32>
      %15 = arith.addf %12, %14 : vector<32x32xf32>
      %16 = arith.truncf %15 : vector<32x32xf32> to vector<32x32xbf16>
      %c0_14 = arith.constant 0 : index
      %c0_15 = arith.constant 0 : index
      %17 = vector.load %arg6[%c0_14, %c0_15] : memref<32x32xbf16, #tpu.memory_space<vmem>>, vector<32x32xbf16>
      tpu.vector_store %arg6[%c0_14, %c0_15], %16 {strides = array<i32>} : memref<32x32xbf16, #tpu.memory_space<vmem>>, vector<32x32xbf16>,
    } else {
    }
    return
  }
  func.func @transform_0(%arg0: i32, %arg1: i32, %arg2: i32) -> (i32, i32) {
    %c0_i32 = arith.constant 0 : i32
    return %arg0, %arg2 : i32, i32
  }
  func.func @transform_1(%arg0: i32, %arg1: i32, %arg2: i32) -> (i32, i32) {
    %c0_i32 = arith.constant 0 : i32
    return %arg2, %arg1 : i32, i32
  }
  func.func @transform_2(%arg0: i32, %arg1: i32, %arg2: i32) -> (i32, i32) {
    %c0_i32 = arith.constant 0 : i32
    %c0_i32_0 = arith.constant 0 : i32
    return %c0_i32, %arg1 : i32, i32
  }
  func.func @transform_3(%arg0: i32, %arg1: i32, %arg2: i32) -> (i32, i32) {
    %c0_i32 = arith.constant 0 : i32
    return %arg0, %arg1 : i32, i32
  }
}

module attributes {stable_mosaic.version = 11 : i64} {
  func.func @_ln_matmul_bias_kernel(%arg0: i32, %arg1: memref<32x32xbf16, #tpu.memory_space<vmem>>, %arg2: memref<1x32xf32, #tpu.memory_space<vmem>>, %arg3: memref<1x32xf32, #tpu.memory_space<vmem>>, %arg4: memref<32x96xbf16, #tpu.memory_space<vmem>>, %arg5: memref<1x96xf32, #tpu.memory_space<vmem>>, %arg6: memref<32x32xbf16, #tpu.memory_space<vmem>>, %arg7: memref<32x32xbf16, #tpu.memory_space<vmem>>, %arg8: memref<32x32xbf16, #tpu.memory_space<vmem>>) attributes {dimension_semantics = [#tpu.dimension_semantics<parallel>], iteration_bounds = array<i64: 1>, scalar_prefetch = 0 : i64, scratch_operands = 0 : i64, tpu.core_type = #tpu.core_type<tc>, window_params = [{transform_indices = @transform_0, window_bounds = array<i64: 32, 32>}, {pipeline_mode = #tpu.pipeline_mode<synchronous>, transform_indices = @transform_1, window_bounds = array<i64: 1, 32>}, {pipeline_mode = #tpu.pipeline_mode<synchronous>, transform_indices = @transform_2, window_bounds = array<i64: 1, 32>}, {pipeline_mode = #tpu.pipeline_mode<synchronous>, transform_indices = @transform_3, window_bounds = array<i64: 32, 96>}, {pipeline_mode = #tpu.pipeline_mode<synchronous>, transform_indices = @transform_4, window_bounds = array<i64: 1, 96>}, {transform_indices = @transform_5, window_bounds = array<i64: 32, 32>}, {transform_indices = @transform_6, window_bounds = array<i64: 32, 32>}, {transform_indices = @transform_7, window_bounds = array<i64: 32, 32>}]} {
    %c0 = arith.constant 0 : index
    %c0_0 = arith.constant 0 : index
    %0 = vector.load %arg1[%c0, %c0_0] : memref<32x32xbf16, #tpu.memory_space<vmem>>, vector<32x32xbf16>
    %1 = arith.extf %0 : vector<32x32xbf16> to vector<32x32xf32>
    %cst = arith.constant dense<0.000000e+00> : vector<32xf32>
    %2 = vector.multi_reduction <add>, %1, %cst [1] : vector<32x32xf32> to vector<32xf32>
    %3 = vector.shape_cast %2 : vector<32xf32> to vector<32x1xf32>
    %cst_1 = arith.constant 3.200000e+01 : f32
    %4 = vector.broadcast %cst_1 : f32 to vector<32x1xf32>
    %5 = arith.divf %3, %4 : vector<32x1xf32>
    %6 = vector.broadcast %5 : vector<32x1xf32> to vector<32x32xf32>
    %7 = arith.subf %1, %6 : vector<32x32xf32>
    %8 = arith.mulf %7, %7 : vector<32x32xf32>
    %cst_2 = arith.constant dense<0.000000e+00> : vector<32xf32>
    %9 = vector.multi_reduction <add>, %8, %cst_2 [1] : vector<32x32xf32> to vector<32xf32>
    %10 = vector.shape_cast %9 : vector<32xf32> to vector<32x1xf32>
    %cst_3 = arith.constant 3.200000e+01 : f32
    %11 = vector.broadcast %cst_3 : f32 to vector<32x1xf32>
    %12 = arith.divf %10, %11 : vector<32x1xf32>
    %cst_4 = arith.constant 9.99999974E-6 : f32
    %13 = vector.broadcast %cst_4 : f32 to vector<32x1xf32>
    %14 = arith.addf %12, %13 : vector<32x1xf32>
    %15 = math.rsqrt %14 : vector<32x1xf32>
    %16 = vector.broadcast %15 : vector<32x1xf32> to vector<32x32xf32>
    %17 = arith.mulf %7, %16 : vector<32x32xf32>
    %c0_5 = arith.constant 0 : index
    %c0_6 = arith.constant 0 : index
    %18 = vector.load %arg2[%c0_5, %c0_6] : memref<1x32xf32, #tpu.memory_space<vmem>>, vector<1x32xf32>
    %19 = vector.broadcast %18 : vector<1x32xf32> to vector<32x32xf32>
    %20 = arith.mulf %17, %19 : vector<32x32xf32>
    %c0_7 = arith.constant 0 : index
    %c0_8 = arith.constant 0 : index
    %21 = vector.load %arg3[%c0_7, %c0_8] : memref<1x32xf32, #tpu.memory_space<vmem>>, vector<1x32xf32>
    %22 = vector.broadcast %21 : vector<1x32xf32> to vector<32x32xf32>
    %23 = arith.addf %20, %22 : vector<32x32xf32>
    %24 = arith.truncf %23 : vector<32x32xf32> to vector<32x32xbf16>
    %c0_9 = arith.constant 0 : index
    %c0_10 = arith.constant 0 : index
    %25 = vector.load %arg4[%c0_9, %c0_10] : memref<32x96xbf16, #tpu.memory_space<vmem>>, vector<32x96xbf16>
    %cst_11 = arith.constant dense<0.000000e+00> : vector<32x96xf32>
    %26 = tpu.matmul %24, %25, %cst_11 {dimension_numbers = #tpu.dot_dimension_numbers<[1], [0], [0], [1], [0, 0, 1, 1], [], []>} : vector<32x32xbf16>, vector<32x96xbf16>, vector<32x96xf32> -> vector<32x96xf32>
    %c0_12 = arith.constant 0 : index
    %c0_13 = arith.constant 0 : index
    %27 = vector.load %arg5[%c0_12, %c0_13] : memref<1x96xf32, #tpu.memory_space<vmem>>, vector<1x96xf32>
    %28 = vector.broadcast %27 : vector<1x96xf32> to vector<32x96xf32>
    %29 = arith.addf %26, %28 : vector<32x96xf32>
    %30 = vector.extract_strided_slice %29 {offsets = [0, 0], sizes = [32, 32], strides = [1, 1]} : vector<32x96xf32> to vector<32x32xf32>
    %31 = arith.truncf %30 : vector<32x32xf32> to vector<32x32xbf16>
    %c0_14 = arith.constant 0 : index
    %c0_15 = arith.constant 0 : index
    %32 = vector.load %arg6[%c0_14, %c0_15] : memref<32x32xbf16, #tpu.memory_space<vmem>>, vector<32x32xbf16>
    tpu.vector_store %arg6[%c0_14, %c0_15], %31 {strides = array<i32>} : memref<32x32xbf16, #tpu.memory_space<vmem>>, vector<32x32xbf16>,
    %33 = vector.extract_strided_slice %29 {offsets = [0, 32], sizes = [32, 32], strides = [1, 1]} : vector<32x96xf32> to vector<32x32xf32>
    %34 = arith.truncf %33 : vector<32x32xf32> to vector<32x32xbf16>
    %c0_16 = arith.constant 0 : index
    %c0_17 = arith.constant 0 : index
    %35 = vector.load %arg7[%c0_16, %c0_17] : memref<32x32xbf16, #tpu.memory_space<vmem>>, vector<32x32xbf16>
    tpu.vector_store %arg7[%c0_16, %c0_17], %34 {strides = array<i32>} : memref<32x32xbf16, #tpu.memory_space<vmem>>, vector<32x32xbf16>,
    %36 = vector.extract_strided_slice %29 {offsets = [0, 64], sizes = [32, 32], strides = [1, 1]} : vector<32x96xf32> to vector<32x32xf32>
    %37 = arith.truncf %36 : vector<32x32xf32> to vector<32x32xbf16>
    %c0_18 = arith.constant 0 : index
    %c0_19 = arith.constant 0 : index
    %38 = vector.load %arg8[%c0_18, %c0_19] : memref<32x32xbf16, #tpu.memory_space<vmem>>, vector<32x32xbf16>
    tpu.vector_store %arg8[%c0_18, %c0_19], %37 {strides = array<i32>} : memref<32x32xbf16, #tpu.memory_space<vmem>>, vector<32x32xbf16>,
    return
  }
  func.func @transform_0(%arg0: i32) -> (i32, i32) {
    %c0_i32 = arith.constant 0 : i32
    %c0_i32_0 = arith.constant 0 : i32
    return %arg0, %c0_i32 : i32, i32
  }
  func.func @transform_1(%arg0: i32) -> (i32, i32) {
    %c0_i32 = arith.constant 0 : i32
    %c0_i32_0 = arith.constant 0 : i32
    %c0_i32_1 = arith.constant 0 : i32
    return %c0_i32, %c0_i32_0 : i32, i32
  }
  func.func @transform_2(%arg0: i32) -> (i32, i32) {
    %c0_i32 = arith.constant 0 : i32
    %c0_i32_0 = arith.constant 0 : i32
    %c0_i32_1 = arith.constant 0 : i32
    return %c0_i32, %c0_i32_0 : i32, i32
  }
  func.func @transform_3(%arg0: i32) -> (i32, i32) {
    %c0_i32 = arith.constant 0 : i32
    %c0_i32_0 = arith.constant 0 : i32
    %c0_i32_1 = arith.constant 0 : i32
    return %c0_i32, %c0_i32_0 : i32, i32
  }
  func.func @transform_4(%arg0: i32) -> (i32, i32) {
    %c0_i32 = arith.constant 0 : i32
    %c0_i32_0 = arith.constant 0 : i32
    %c0_i32_1 = arith.constant 0 : i32
    return %c0_i32, %c0_i32_0 : i32, i32
  }
  func.func @transform_5(%arg0: i32) -> (i32, i32) {
    %c0_i32 = arith.constant 0 : i32
    %c0_i32_0 = arith.constant 0 : i32
    return %arg0, %c0_i32 : i32, i32
  }
  func.func @transform_6(%arg0: i32) -> (i32, i32) {
    %c0_i32 = arith.constant 0 : i32
    %c0_i32_0 = arith.constant 0 : i32
    return %arg0, %c0_i32 : i32, i32
  }
  func.func @transform_7(%arg0: i32) -> (i32, i32) {
    %c0_i32 = arith.constant 0 : i32
    %c0_i32_0 = arith.constant 0 : i32
    return %arg0, %c0_i32 : i32, i32
  }
}

module attributes {stable_mosaic.version = 11 : i64} {
  func.func @_flash_attn_kernel(%arg0: i32, %arg1: i32, %arg2: i32, %arg3: memref<1x16x32xbf16, #tpu.memory_space<vmem>>, %arg4: memref<1x16x32xbf16, #tpu.memory_space<vmem>>, %arg5: memref<1x16x32xbf16, #tpu.memory_space<vmem>>, %arg6: memref<1x16x32xbf16, #tpu.memory_space<vmem>>, %arg7: memref<4x16x1xf32, #tpu.memory_space<vmem>>, %arg8: memref<4x16x1xf32, #tpu.memory_space<vmem>>, %arg9: memref<16x32xf32, #tpu.memory_space<vmem>>) attributes {dimension_semantics = [#tpu.dimension_semantics<parallel>, #tpu.dimension_semantics<parallel>, #tpu.dimension_semantics<arbitrary>], iteration_bounds = array<i64: 2, 1, 1>, scalar_prefetch = 0 : i64, scratch_operands = 3 : i64, tpu.core_type = #tpu.core_type<tc>, window_params = [{transform_indices = @transform_0, window_bounds = array<i64: 1, 16, 32>}, {transform_indices = @transform_1, window_bounds = array<i64: 1, 16, 32>}, {transform_indices = @transform_2, window_bounds = array<i64: 1, 16, 32>}, {transform_indices = @transform_3, window_bounds = array<i64: 1, 16, 32>}]} {
    %c0_i32 = arith.constant 0 : i32
    %0 = arith.cmpi eq, %arg2, %c0_i32 : i32
    %1 = arith.extui %0 : i1 to i32
    %c0_i32_0 = arith.constant 0 : i32
    %2 = arith.cmpi ne, %1, %c0_i32_0 : i32
    scf.if %2 {
      %cst_115 = arith.constant 0xFF800000 : f32
      %158 = vector.broadcast %cst_115 : f32 to vector<4x16x1xf32>
      %c0_116 = arith.constant 0 : index
      %c0_117 = arith.constant 0 : index
      %c0_118 = arith.constant 0 : index
      %159 = vector.load %arg7[%c0_116, %c0_117, %c0_118] : memref<4x16x1xf32, #tpu.memory_space<vmem>>, vector<4x16x1xf32>
      tpu.vector_store %arg7[%c0_116, %c0_117, %c0_118], %158 {strides = array<i32>} : memref<4x16x1xf32, #tpu.memory_space<vmem>>, vector<4x16x1xf32>,
      %cst_119 = arith.constant 0.000000e+00 : f32
      %160 = vector.broadcast %cst_119 : f32 to vector<4x16x1xf32>
      %c0_120 = arith.constant 0 : index
      %c0_121 = arith.constant 0 : index
      %c0_122 = arith.constant 0 : index
      %161 = vector.load %arg8[%c0_120, %c0_121, %c0_122] : memref<4x16x1xf32, #tpu.memory_space<vmem>>, vector<4x16x1xf32>
      tpu.vector_store %arg8[%c0_120, %c0_121, %c0_122], %160 {strides = array<i32>} : memref<4x16x1xf32, #tpu.memory_space<vmem>>, vector<4x16x1xf32>,
      %cst_123 = arith.constant 0.000000e+00 : f32
      %162 = vector.broadcast %cst_123 : f32 to vector<16x32xf32>
      %c0_124 = arith.constant 0 : index
      %c0_125 = arith.constant 0 : index
      %163 = vector.load %arg9[%c0_124, %c0_125] : memref<16x32xf32, #tpu.memory_space<vmem>>, vector<16x32xf32>
      tpu.vector_store %arg9[%c0_124, %c0_125], %162 {strides = array<i32>} : memref<16x32xf32, #tpu.memory_space<vmem>>, vector<16x32xf32>,
    } else {
    }
    %c0 = arith.constant 0 : index
    %c0_1 = arith.constant 0 : index
    %c0_2 = arith.constant 0 : index
    %3 = vector.load %arg3[%c0, %c0_1, %c0_2] : memref<1x16x32xbf16, #tpu.memory_space<vmem>>, vector<1x16x8xbf16>
    %4 = vector.shape_cast %3 : vector<1x16x8xbf16> to vector<16x8xbf16>
    %cst = arith.constant 3.535160e-01 : bf16
    %5 = vector.broadcast %cst : bf16 to vector<16x8xbf16>
    %6 = arith.mulf %4, %5 : vector<16x8xbf16>
    %c0_3 = arith.constant 0 : index
    %c0_4 = arith.constant 0 : index
    %c0_5 = arith.constant 0 : index
    %7 = vector.load %arg4[%c0_3, %c0_4, %c0_5] : memref<1x16x32xbf16, #tpu.memory_space<vmem>>, vector<1x16x8xbf16>
    %8 = vector.shape_cast %7 : vector<1x16x8xbf16> to vector<16x8xbf16>
    %c0_6 = arith.constant 0 : index
    %c0_7 = arith.constant 0 : index
    %c0_8 = arith.constant 0 : index
    %9 = vector.load %arg5[%c0_6, %c0_7, %c0_8] : memref<1x16x32xbf16, #tpu.memory_space<vmem>>, vector<1x16x8xbf16>
    %10 = vector.shape_cast %9 : vector<1x16x8xbf16> to vector<16x8xbf16>
    %cst_9 = arith.constant dense<0.000000e+00> : vector<16x16xf32>
    %11 = tpu.matmul %6, %8, %cst_9 {dimension_numbers = #tpu.dot_dimension_numbers<[1], [1], [0], [0], [0, 0, 1, 0], [], []>} : vector<16x8xbf16>, vector<16x8xbf16>, vector<16x16xf32> -> vector<16x16xf32>
    %c0_10 = arith.constant 0 : index
    %c0_11 = arith.constant 0 : index
    %c0_12 = arith.constant 0 : index
    %12 = vector.load %arg7[%c0_10, %c0_11, %c0_12] : memref<4x16x1xf32, #tpu.memory_space<vmem>>, vector<1x16x1xf32>
    %13 = vector.shape_cast %12 : vector<1x16x1xf32> to vector<16x1xf32>
    %cst_13 = arith.constant dense<0xFF800000> : vector<16xf32>
    %14 = vector.multi_reduction <maximumf>, %11, %cst_13 [1] : vector<16x16xf32> to vector<16xf32>
    %15 = vector.shape_cast %14 : vector<16xf32> to vector<16x1xf32>
    %16 = arith.maximumf %13, %15 : vector<16x1xf32>
    %17 = arith.subf %13, %16 : vector<16x1xf32>
    %18 = math.exp %17 : vector<16x1xf32>
    %19 = vector.broadcast %16 : vector<16x1xf32> to vector<16x16xf32>
    %20 = arith.subf %11, %19 : vector<16x16xf32>
    %21 = math.exp %20 : vector<16x16xf32>
    %c0_14 = arith.constant 0 : index
    %c0_15 = arith.constant 0 : index
    %c0_16 = arith.constant 0 : index
    %22 = vector.load %arg8[%c0_14, %c0_15, %c0_16] : memref<4x16x1xf32, #tpu.memory_space<vmem>>, vector<1x16x1xf32>
    %23 = vector.shape_cast %22 : vector<1x16x1xf32> to vector<16x1xf32>
    %24 = arith.mulf %18, %23 : vector<16x1xf32>
    %cst_17 = arith.constant dense<0.000000e+00> : vector<16xf32>
    %25 = vector.multi_reduction <add>, %21, %cst_17 [1] : vector<16x16xf32> to vector<16xf32>
    %26 = vector.shape_cast %25 : vector<16xf32> to vector<16x1xf32>
    %27 = arith.addf %24, %26 : vector<16x1xf32>
    %c0_18 = arith.constant 0 : index
    %c0_19 = arith.constant 0 : index
    %c0_20 = arith.constant 0 : index
    %28 = vector.load %arg8[%c0_18, %c0_19, %c0_20] : memref<4x16x1xf32, #tpu.memory_space<vmem>>, vector<1x16x1xf32>
    %29 = vector.shape_cast %28 : vector<1x16x1xf32> to vector<16x1xf32>
    %30 = vector.shape_cast %27 : vector<16x1xf32> to vector<1x16x1xf32>
    tpu.vector_store %arg8[%c0_18, %c0_19, %c0_20], %30 {strides = array<i32>} : memref<4x16x1xf32, #tpu.memory_space<vmem>>, vector<1x16x1xf32>,
    %c0_21 = arith.constant 0 : index
    %c0_22 = arith.constant 0 : index
    %31 = vector.load %arg9[%c0_21, %c0_22] : memref<16x32xf32, #tpu.memory_space<vmem>>, vector<16x8xf32>
    %32 = vector.broadcast %18 : vector<16x1xf32> to vector<16x8xf32>
    %33 = arith.mulf %32, %31 : vector<16x8xf32>
    %34 = arith.truncf %21 : vector<16x16xf32> to vector<16x16xbf16>
    %cst_23 = arith.constant dense<0.000000e+00> : vector<16x8xf32>
    %35 = tpu.matmul %34, %10, %cst_23 {dimension_numbers = #tpu.dot_dimension_numbers<[1], [0], [0], [1], [0, 0, 1, 1], [], []>} : vector<16x16xbf16>, vector<16x8xbf16>, vector<16x8xf32> -> vector<16x8xf32>
    %36 = arith.addf %33, %35 : vector<16x8xf32>
    %c0_24 = arith.constant 0 : index
    %c0_25 = arith.constant 0 : index
    %37 = vector.load %arg9[%c0_24, %c0_25] : memref<16x32xf32, #tpu.memory_space<vmem>>, vector<16x8xf32>
    tpu.vector_store %arg9[%c0_24, %c0_25], %36 {strides = array<i32>} : memref<16x32xf32, #tpu.memory_space<vmem>>, vector<16x8xf32>,
    %c0_26 = arith.constant 0 : index
    %c0_27 = arith.constant 0 : index
    %c0_28 = arith.constant 0 : index
    %38 = vector.load %arg7[%c0_26, %c0_27, %c0_28] : memref<4x16x1xf32, #tpu.memory_space<vmem>>, vector<1x16x1xf32>
    %39 = vector.shape_cast %38 : vector<1x16x1xf32> to vector<16x1xf32>
    %40 = vector.shape_cast %16 : vector<16x1xf32> to vector<1x16x1xf32>
    tpu.vector_store %arg7[%c0_26, %c0_27, %c0_28], %40 {strides = array<i32>} : memref<4x16x1xf32, #tpu.memory_space<vmem>>, vector<1x16x1xf32>,
    %c0_29 = arith.constant 0 : index
    %c0_30 = arith.constant 0 : index
    %c8 = arith.constant 8 : index
    %41 = vector.load %arg3[%c0_29, %c0_30, %c8] : memref<1x16x32xbf16, #tpu.memory_space<vmem>>, vector<1x16x8xbf16>
    %42 = vector.shape_cast %41 : vector<1x16x8xbf16> to vector<16x8xbf16>
    %cst_31 = arith.constant 3.535160e-01 : bf16
    %43 = vector.broadcast %cst_31 : bf16 to vector<16x8xbf16>
    %44 = arith.mulf %42, %43 : vector<16x8xbf16>
    %c0_32 = arith.constant 0 : index
    %c0_33 = arith.constant 0 : index
    %c8_34 = arith.constant 8 : index
    %45 = vector.load %arg4[%c0_32, %c0_33, %c8_34] : memref<1x16x32xbf16, #tpu.memory_space<vmem>>, vector<1x16x8xbf16>
    %46 = vector.shape_cast %45 : vector<1x16x8xbf16> to vector<16x8xbf16>
    %c0_35 = arith.constant 0 : index
    %c0_36 = arith.constant 0 : index
    %c8_37 = arith.constant 8 : index
    %47 = vector.load %arg5[%c0_35, %c0_36, %c8_37] : memref<1x16x32xbf16, #tpu.memory_space<vmem>>, vector<1x16x8xbf16>
    %48 = vector.shape_cast %47 : vector<1x16x8xbf16> to vector<16x8xbf16>
    %cst_38 = arith.constant dense<0.000000e+00> : vector<16x16xf32>
    %49 = tpu.matmul %44, %46, %cst_38 {dimension_numbers = #tpu.dot_dimension_numbers<[1], [1], [0], [0], [0, 0, 1, 0], [], []>} : vector<16x8xbf16>, vector<16x8xbf16>, vector<16x16xf32> -> vector<16x16xf32>
    %c1 = arith.constant 1 : index
    %c0_39 = arith.constant 0 : index
    %c0_40 = arith.constant 0 : index
    %50 = vector.load %arg7[%c1, %c0_39, %c0_40] : memref<4x16x1xf32, #tpu.memory_space<vmem>>, vector<1x16x1xf32>
    %51 = vector.shape_cast %50 : vector<1x16x1xf32> to vector<16x1xf32>
    %cst_41 = arith.constant dense<0xFF800000> : vector<16xf32>
    %52 = vector.multi_reduction <maximumf>, %49, %cst_41 [1] : vector<16x16xf32> to vector<16xf32>
    %53 = vector.shape_cast %52 : vector<16xf32> to vector<16x1xf32>
    %54 = arith.maximumf %51, %53 : vector<16x1xf32>
    %55 = arith.subf %51, %54 : vector<16x1xf32>
    %56 = math.exp %55 : vector<16x1xf32>
    %57 = vector.broadcast %54 : vector<16x1xf32> to vector<16x16xf32>
    %58 = arith.subf %49, %57 : vector<16x16xf32>
    %59 = math.exp %58 : vector<16x16xf32>
    %c1_42 = arith.constant 1 : index
    %c0_43 = arith.constant 0 : index
    %c0_44 = arith.constant 0 : index
    %60 = vector.load %arg8[%c1_42, %c0_43, %c0_44] : memref<4x16x1xf32, #tpu.memory_space<vmem>>, vector<1x16x1xf32>
    %61 = vector.shape_cast %60 : vector<1x16x1xf32> to vector<16x1xf32>
    %62 = arith.mulf %56, %61 : vector<16x1xf32>
    %cst_45 = arith.constant dense<0.000000e+00> : vector<16xf32>
    %63 = vector.multi_reduction <add>, %59, %cst_45 [1] : vector<16x16xf32> to vector<16xf32>
    %64 = vector.shape_cast %63 : vector<16xf32> to vector<16x1xf32>
    %65 = arith.addf %62, %64 : vector<16x1xf32>
    %c1_46 = arith.constant 1 : index
    %c0_47 = arith.constant 0 : index
    %c0_48 = arith.constant 0 : index
    %66 = vector.load %arg8[%c1_46, %c0_47, %c0_48] : memref<4x16x1xf32, #tpu.memory_space<vmem>>, vector<1x16x1xf32>
    %67 = vector.shape_cast %66 : vector<1x16x1xf32> to vector<16x1xf32>
    %68 = vector.shape_cast %65 : vector<16x1xf32> to vector<1x16x1xf32>
    tpu.vector_store %arg8[%c1_46, %c0_47, %c0_48], %68 {strides = array<i32>} : memref<4x16x1xf32, #tpu.memory_space<vmem>>, vector<1x16x1xf32>,
    %c0_49 = arith.constant 0 : index
    %c8_50 = arith.constant 8 : index
    %69 = vector.load %arg9[%c0_49, %c8_50] : memref<16x32xf32, #tpu.memory_space<vmem>>, vector<16x8xf32>
    %70 = vector.broadcast %56 : vector<16x1xf32> to vector<16x8xf32>
    %71 = arith.mulf %70, %69 : vector<16x8xf32>
    %72 = arith.truncf %59 : vector<16x16xf32> to vector<16x16xbf16>
    %cst_51 = arith.constant dense<0.000000e+00> : vector<16x8xf32>
    %73 = tpu.matmul %72, %48, %cst_51 {dimension_numbers = #tpu.dot_dimension_numbers<[1], [0], [0], [1], [0, 0, 1, 1], [], []>} : vector<16x16xbf16>, vector<16x8xbf16>, vector<16x8xf32> -> vector<16x8xf32>
    %74 = arith.addf %71, %73 : vector<16x8xf32>
    %c0_52 = arith.constant 0 : index
    %c8_53 = arith.constant 8 : index
    %75 = vector.load %arg9[%c0_52, %c8_53] : memref<16x32xf32, #tpu.memory_space<vmem>>, vector<16x8xf32>
    tpu.vector_store %arg9[%c0_52, %c8_53], %74 {strides = array<i32>} : memref<16x32xf32, #tpu.memory_space<vmem>>, vector<16x8xf32>,
    %c1_54 = arith.constant 1 : index
    %c0_55 = arith.constant 0 : index
    %c0_56 = arith.constant 0 : index
    %76 = vector.load %arg7[%c1_54, %c0_55, %c0_56] : memref<4x16x1xf32, #tpu.memory_space<vmem>>, vector<1x16x1xf32>
    %77 = vector.shape_cast %76 : vector<1x16x1xf32> to vector<16x1xf32>
    %78 = vector.shape_cast %54 : vector<16x1xf32> to vector<1x16x1xf32>
    tpu.vector_store %arg7[%c1_54, %c0_55, %c0_56], %78 {strides = array<i32>} : memref<4x16x1xf32, #tpu.memory_space<vmem>>, vector<1x16x1xf32>,
    %c0_57 = arith.constant 0 : index
    %c0_58 = arith.constant 0 : index
    %c16 = arith.constant 16 : index
    %79 = vector.load %arg3[%c0_57, %c0_58, %c16] : memref<1x16x32xbf16, #tpu.memory_space<vmem>>, vector<1x16x8xbf16>
    %80 = vector.shape_cast %79 : vector<1x16x8xbf16> to vector<16x8xbf16>
    %cst_59 = arith.constant 3.535160e-01 : bf16
    %81 = vector.broadcast %cst_59 : bf16 to vector<16x8xbf16>
    %82 = arith.mulf %80, %81 : vector<16x8xbf16>
    %c0_60 = arith.constant 0 : index
    %c0_61 = arith.constant 0 : index
    %c16_62 = arith.constant 16 : index
    %83 = vector.load %arg4[%c0_60, %c0_61, %c16_62] : memref<1x16x32xbf16, #tpu.memory_space<vmem>>, vector<1x16x8xbf16>
    %84 = vector.shape_cast %83 : vector<1x16x8xbf16> to vector<16x8xbf16>
    %c0_63 = arith.constant 0 : index
    %c0_64 = arith.constant 0 : index
    %c16_65 = arith.constant 16 : index
    %85 = vector.load %arg5[%c0_63, %c0_64, %c16_65] : memref<1x16x32xbf16, #tpu.memory_space<vmem>>, vector<1x16x8xbf16>
    %86 = vector.shape_cast %85 : vector<1x16x8xbf16> to vector<16x8xbf16>
    %cst_66 = arith.constant dense<0.000000e+00> : vector<16x16xf32>
    %87 = tpu.matmul %82, %84, %cst_66 {dimension_numbers = #tpu.dot_dimension_numbers<[1], [1], [0], [0], [0, 0, 1, 0], [], []>} : vector<16x8xbf16>, vector<16x8xbf16>, vector<16x16xf32> -> vector<16x16xf32>
    %c2 = arith.constant 2 : index
    %c0_67 = arith.constant 0 : index
    %c0_68 = arith.constant 0 : index
    %88 = vector.load %arg7[%c2, %c0_67, %c0_68] : memref<4x16x1xf32, #tpu.memory_space<vmem>>, vector<1x16x1xf32>
    %89 = vector.shape_cast %88 : vector<1x16x1xf32> to vector<16x1xf32>
    %cst_69 = arith.constant dense<0xFF800000> : vector<16xf32>
    %90 = vector.multi_reduction <maximumf>, %87, %cst_69 [1] : vector<16x16xf32> to vector<16xf32>
    %91 = vector.shape_cast %90 : vector<16xf32> to vector<16x1xf32>
    %92 = arith.maximumf %89, %91 : vector<16x1xf32>
    %93 = arith.subf %89, %92 : vector<16x1xf32>
    %94 = math.exp %93 : vector<16x1xf32>
    %95 = vector.broadcast %92 : vector<16x1xf32> to vector<16x16xf32>
    %96 = arith.subf %87, %95 : vector<16x16xf32>
    %97 = math.exp %96 : vector<16x16xf32>
    %c2_70 = arith.constant 2 : index
    %c0_71 = arith.constant 0 : index
    %c0_72 = arith.constant 0 : index
    %98 = vector.load %arg8[%c2_70, %c0_71, %c0_72] : memref<4x16x1xf32, #tpu.memory_space<vmem>>, vector<1x16x1xf32>
    %99 = vector.shape_cast %98 : vector<1x16x1xf32> to vector<16x1xf32>
    %100 = arith.mulf %94, %99 : vector<16x1xf32>
    %cst_73 = arith.constant dense<0.000000e+00> : vector<16xf32>
    %101 = vector.multi_reduction <add>, %97, %cst_73 [1] : vector<16x16xf32> to vector<16xf32>
    %102 = vector.shape_cast %101 : vector<16xf32> to vector<16x1xf32>
    %103 = arith.addf %100, %102 : vector<16x1xf32>
    %c2_74 = arith.constant 2 : index
    %c0_75 = arith.constant 0 : index
    %c0_76 = arith.constant 0 : index
    %104 = vector.load %arg8[%c2_74, %c0_75, %c0_76] : memref<4x16x1xf32, #tpu.memory_space<vmem>>, vector<1x16x1xf32>
    %105 = vector.shape_cast %104 : vector<1x16x1xf32> to vector<16x1xf32>
    %106 = vector.shape_cast %103 : vector<16x1xf32> to vector<1x16x1xf32>
    tpu.vector_store %arg8[%c2_74, %c0_75, %c0_76], %106 {strides = array<i32>} : memref<4x16x1xf32, #tpu.memory_space<vmem>>, vector<1x16x1xf32>,
    %c0_77 = arith.constant 0 : index
    %c16_78 = arith.constant 16 : index
    %107 = vector.load %arg9[%c0_77, %c16_78] : memref<16x32xf32, #tpu.memory_space<vmem>>, vector<16x8xf32>
    %108 = vector.broadcast %94 : vector<16x1xf32> to vector<16x8xf32>
    %109 = arith.mulf %108, %107 : vector<16x8xf32>
    %110 = arith.truncf %97 : vector<16x16xf32> to vector<16x16xbf16>
    %cst_79 = arith.constant dense<0.000000e+00> : vector<16x8xf32>
    %111 = tpu.matmul %110, %86, %cst_79 {dimension_numbers = #tpu.dot_dimension_numbers<[1], [0], [0], [1], [0, 0, 1, 1], [], []>} : vector<16x16xbf16>, vector<16x8xbf16>, vector<16x8xf32> -> vector<16x8xf32>
    %112 = arith.addf %109, %111 : vector<16x8xf32>
    %c0_80 = arith.constant 0 : index
    %c16_81 = arith.constant 16 : index
    %113 = vector.load %arg9[%c0_80, %c16_81] : memref<16x32xf32, #tpu.memory_space<vmem>>, vector<16x8xf32>
    tpu.vector_store %arg9[%c0_80, %c16_81], %112 {strides = array<i32>} : memref<16x32xf32, #tpu.memory_space<vmem>>, vector<16x8xf32>,
    %c2_82 = arith.constant 2 : index
    %c0_83 = arith.constant 0 : index
    %c0_84 = arith.constant 0 : index
    %114 = vector.load %arg7[%c2_82, %c0_83, %c0_84] : memref<4x16x1xf32, #tpu.memory_space<vmem>>, vector<1x16x1xf32>
    %115 = vector.shape_cast %114 : vector<1x16x1xf32> to vector<16x1xf32>
    %116 = vector.shape_cast %92 : vector<16x1xf32> to vector<1x16x1xf32>
    tpu.vector_store %arg7[%c2_82, %c0_83, %c0_84], %116 {strides = array<i32>} : memref<4x16x1xf32, #tpu.memory_space<vmem>>, vector<1x16x1xf32>,
    %c0_85 = arith.constant 0 : index
    %c0_86 = arith.constant 0 : index
    %c24 = arith.constant 24 : index
    %117 = vector.load %arg3[%c0_85, %c0_86, %c24] : memref<1x16x32xbf16, #tpu.memory_space<vmem>>, vector<1x16x8xbf16>
    %118 = vector.shape_cast %117 : vector<1x16x8xbf16> to vector<16x8xbf16>
    %cst_87 = arith.constant 3.535160e-01 : bf16
    %119 = vector.broadcast %cst_87 : bf16 to vector<16x8xbf16>
    %120 = arith.mulf %118, %119 : vector<16x8xbf16>
    %c0_88 = arith.constant 0 : index
    %c0_89 = arith.constant 0 : index
    %c24_90 = arith.constant 24 : index
    %121 = vector.load %arg4[%c0_88, %c0_89, %c24_90] : memref<1x16x32xbf16, #tpu.memory_space<vmem>>, vector<1x16x8xbf16>
    %122 = vector.shape_cast %121 : vector<1x16x8xbf16> to vector<16x8xbf16>
    %c0_91 = arith.constant 0 : index
    %c0_92 = arith.constant 0 : index
    %c24_93 = arith.constant 24 : index
    %123 = vector.load %arg5[%c0_91, %c0_92, %c24_93] : memref<1x16x32xbf16, #tpu.memory_space<vmem>>, vector<1x16x8xbf16>
    %124 = vector.shape_cast %123 : vector<1x16x8xbf16> to vector<16x8xbf16>
    %cst_94 = arith.constant dense<0.000000e+00> : vector<16x16xf32>
    %125 = tpu.matmul %120, %122, %cst_94 {dimension_numbers = #tpu.dot_dimension_numbers<[1], [1], [0], [0], [0, 0, 1, 0], [], []>} : vector<16x8xbf16>, vector<16x8xbf16>, vector<16x16xf32> -> vector<16x16xf32>
    %c3 = arith.constant 3 : index
    %c0_95 = arith.constant 0 : index
    %c0_96 = arith.constant 0 : index
    %126 = vector.load %arg7[%c3, %c0_95, %c0_96] : memref<4x16x1xf32, #tpu.memory_space<vmem>>, vector<1x16x1xf32>
    %127 = vector.shape_cast %126 : vector<1x16x1xf32> to vector<16x1xf32>
    %cst_97 = arith.constant dense<0xFF800000> : vector<16xf32>
    %128 = vector.multi_reduction <maximumf>, %125, %cst_97 [1] : vector<16x16xf32> to vector<16xf32>
    %129 = vector.shape_cast %128 : vector<16xf32> to vector<16x1xf32>
    %130 = arith.maximumf %127, %129 : vector<16x1xf32>
    %131 = arith.subf %127, %130 : vector<16x1xf32>
    %132 = math.exp %131 : vector<16x1xf32>
    %133 = vector.broadcast %130 : vector<16x1xf32> to vector<16x16xf32>
    %134 = arith.subf %125, %133 : vector<16x16xf32>
    %135 = math.exp %134 : vector<16x16xf32>
    %c3_98 = arith.constant 3 : index
    %c0_99 = arith.constant 0 : index
    %c0_100 = arith.constant 0 : index
    %136 = vector.load %arg8[%c3_98, %c0_99, %c0_100] : memref<4x16x1xf32, #tpu.memory_space<vmem>>, vector<1x16x1xf32>
    %137 = vector.shape_cast %136 : vector<1x16x1xf32> to vector<16x1xf32>
    %138 = arith.mulf %132, %137 : vector<16x1xf32>
    %cst_101 = arith.constant dense<0.000000e+00> : vector<16xf32>
    %139 = vector.multi_reduction <add>, %135, %cst_101 [1] : vector<16x16xf32> to vector<16xf32>
    %140 = vector.shape_cast %139 : vector<16xf32> to vector<16x1xf32>
    %141 = arith.addf %138, %140 : vector<16x1xf32>
    %c3_102 = arith.constant 3 : index
    %c0_103 = arith.constant 0 : index
    %c0_104 = arith.constant 0 : index
    %142 = vector.load %arg8[%c3_102, %c0_103, %c0_104] : memref<4x16x1xf32, #tpu.memory_space<vmem>>, vector<1x16x1xf32>
    %143 = vector.shape_cast %142 : vector<1x16x1xf32> to vector<16x1xf32>
    %144 = vector.shape_cast %141 : vector<16x1xf32> to vector<1x16x1xf32>
    tpu.vector_store %arg8[%c3_102, %c0_103, %c0_104], %144 {strides = array<i32>} : memref<4x16x1xf32, #tpu.memory_space<vmem>>, vector<1x16x1xf32>,
    %c0_105 = arith.constant 0 : index
    %c24_106 = arith.constant 24 : index
    %145 = vector.load %arg9[%c0_105, %c24_106] : memref<16x32xf32, #tpu.memory_space<vmem>>, vector<16x8xf32>
    %146 = vector.broadcast %132 : vector<16x1xf32> to vector<16x8xf32>
    %147 = arith.mulf %146, %145 : vector<16x8xf32>
    %148 = arith.truncf %135 : vector<16x16xf32> to vector<16x16xbf16>
    %cst_107 = arith.constant dense<0.000000e+00> : vector<16x8xf32>
    %149 = tpu.matmul %148, %124, %cst_107 {dimension_numbers = #tpu.dot_dimension_numbers<[1], [0], [0], [1], [0, 0, 1, 1], [], []>} : vector<16x16xbf16>, vector<16x8xbf16>, vector<16x8xf32> -> vector<16x8xf32>
    %150 = arith.addf %147, %149 : vector<16x8xf32>
    %c0_108 = arith.constant 0 : index
    %c24_109 = arith.constant 24 : index
    %151 = vector.load %arg9[%c0_108, %c24_109] : memref<16x32xf32, #tpu.memory_space<vmem>>, vector<16x8xf32>
    tpu.vector_store %arg9[%c0_108, %c24_109], %150 {strides = array<i32>} : memref<16x32xf32, #tpu.memory_space<vmem>>, vector<16x8xf32>,
    %c3_110 = arith.constant 3 : index
    %c0_111 = arith.constant 0 : index
    %c0_112 = arith.constant 0 : index
    %152 = vector.load %arg7[%c3_110, %c0_111, %c0_112] : memref<4x16x1xf32, #tpu.memory_space<vmem>>, vector<1x16x1xf32>
    %153 = vector.shape_cast %152 : vector<1x16x1xf32> to vector<16x1xf32>
    %154 = vector.shape_cast %130 : vector<16x1xf32> to vector<1x16x1xf32>
    tpu.vector_store %arg7[%c3_110, %c0_111, %c0_112], %154 {strides = array<i32>} : memref<4x16x1xf32, #tpu.memory_space<vmem>>, vector<1x16x1xf32>,
    %c0_i32_113 = arith.constant 0 : i32
    %155 = arith.cmpi eq, %arg2, %c0_i32_113 : i32
    %156 = arith.extui %155 : i1 to i32
    %c0_i32_114 = arith.constant 0 : i32
    %157 = arith.cmpi ne, %156, %c0_i32_114 : i32
    scf.if %157 {
      %c0_115 = arith.constant 0 : index
      %c0_116 = arith.constant 0 : index
      %c0_117 = arith.constant 0 : index
      %158 = vector.load %arg8[%c0_115, %c0_116, %c0_117] : memref<4x16x1xf32, #tpu.memory_space<vmem>>, vector<1x16x1xf32>
      %159 = vector.shape_cast %158 : vector<1x16x1xf32> to vector<16x1xf32>
      %160 = tpu.reciprocal %159 {approx = true} : vector<16x1xf32> -> vector<16x1xf32>
      %c0_118 = arith.constant 0 : index
      %c0_119 = arith.constant 0 : index
      %161 = vector.load %arg9[%c0_118, %c0_119] : memref<16x32xf32, #tpu.memory_space<vmem>>, vector<16x8xf32>
      %162 = vector.broadcast %160 : vector<16x1xf32> to vector<16x8xf32>
      %163 = arith.mulf %161, %162 : vector<16x8xf32>
      %164 = arith.truncf %163 : vector<16x8xf32> to vector<16x8xbf16>
      %c0_120 = arith.constant 0 : index
      %c0_121 = arith.constant 0 : index
      %c0_122 = arith.constant 0 : index
      %165 = vector.load %arg6[%c0_120, %c0_121, %c0_122] : memref<1x16x32xbf16, #tpu.memory_space<vmem>>, vector<1x16x8xbf16>
      %166 = vector.shape_cast %165 : vector<1x16x8xbf16> to vector<16x8xbf16>
      %167 = vector.shape_cast %164 : vector<16x8xbf16> to vector<1x16x8xbf16>
      tpu.vector_store %arg6[%c0_120, %c0_121, %c0_122], %167 {strides = array<i32>} : memref<1x16x32xbf16, #tpu.memory_space<vmem>>, vector<1x16x8xbf16>,
      %c1_123 = arith.constant 1 : index
      %c0_124 = arith.constant 0 : index
      %c0_125 = arith.constant 0 : index
      %168 = vector.load %arg8[%c1_123, %c0_124, %c0_125] : memref<4x16x1xf32, #tpu.memory_space<vmem>>, vector<1x16x1xf32>
      %169 = vector.shape_cast %168 : vector<1x16x1xf32> to vector<16x1xf32>
      %170 = tpu.reciprocal %169 {approx = true} : vector<16x1xf32> -> vector<16x1xf32>
      %c0_126 = arith.constant 0 : index
      %c8_127 = arith.constant 8 : index
      %171 = vector.load %arg9[%c0_126, %c8_127] : memref<16x32xf32, #tpu.memory_space<vmem>>, vector<16x8xf32>
      %172 = vector.broadcast %170 : vector<16x1xf32> to vector<16x8xf32>
      %173 = arith.mulf %171, %172 : vector<16x8xf32>
      %174 = arith.truncf %173 : vector<16x8xf32> to vector<16x8xbf16>
      %c0_128 = arith.constant 0 : index
      %c0_129 = arith.constant 0 : index
      %c8_130 = arith.constant 8 : index
      %175 = vector.load %arg6[%c0_128, %c0_129, %c8_130] : memref<1x16x32xbf16, #tpu.memory_space<vmem>>, vector<1x16x8xbf16>
      %176 = vector.shape_cast %175 : vector<1x16x8xbf16> to vector<16x8xbf16>
      %177 = vector.shape_cast %174 : vector<16x8xbf16> to vector<1x16x8xbf16>
      tpu.vector_store %arg6[%c0_128, %c0_129, %c8_130], %177 {strides = array<i32>} : memref<1x16x32xbf16, #tpu.memory_space<vmem>>, vector<1x16x8xbf16>,
      %c2_131 = arith.constant 2 : index
      %c0_132 = arith.constant 0 : index
      %c0_133 = arith.constant 0 : index
      %178 = vector.load %arg8[%c2_131, %c0_132, %c0_133] : memref<4x16x1xf32, #tpu.memory_space<vmem>>, vector<1x16x1xf32>
      %179 = vector.shape_cast %178 : vector<1x16x1xf32> to vector<16x1xf32>
      %180 = tpu.reciprocal %179 {approx = true} : vector<16x1xf32> -> vector<16x1xf32>
      %c0_134 = arith.constant 0 : index
      %c16_135 = arith.constant 16 : index
      %181 = vector.load %arg9[%c0_134, %c16_135] : memref<16x32xf32, #tpu.memory_space<vmem>>, vector<16x8xf32>
      %182 = vector.broadcast %180 : vector<16x1xf32> to vector<16x8xf32>
      %183 = arith.mulf %181, %182 : vector<16x8xf32>
      %184 = arith.truncf %183 : vector<16x8xf32> to vector<16x8xbf16>
      %c0_136 = arith.constant 0 : index
      %c0_137 = arith.constant 0 : index
      %c16_138 = arith.constant 16 : index
      %185 = vector.load %arg6[%c0_136, %c0_137, %c16_138] : memref<1x16x32xbf16, #tpu.memory_space<vmem>>, vector<1x16x8xbf16>
      %186 = vector.shape_cast %185 : vector<1x16x8xbf16> to vector<16x8xbf16>
      %187 = vector.shape_cast %184 : vector<16x8xbf16> to vector<1x16x8xbf16>
      tpu.vector_store %arg6[%c0_136, %c0_137, %c16_138], %187 {strides = array<i32>} : memref<1x16x32xbf16, #tpu.memory_space<vmem>>, vector<1x16x8xbf16>,
      %c3_139 = arith.constant 3 : index
      %c0_140 = arith.constant 0 : index
      %c0_141 = arith.constant 0 : index
      %188 = vector.load %arg8[%c3_139, %c0_140, %c0_141] : memref<4x16x1xf32, #tpu.memory_space<vmem>>, vector<1x16x1xf32>
      %189 = vector.shape_cast %188 : vector<1x16x1xf32> to vector<16x1xf32>
      %190 = tpu.reciprocal %189 {approx = true} : vector<16x1xf32> -> vector<16x1xf32>
      %c0_142 = arith.constant 0 : index
      %c24_143 = arith.constant 24 : index
      %191 = vector.load %arg9[%c0_142, %c24_143] : memref<16x32xf32, #tpu.memory_space<vmem>>, vector<16x8xf32>
      %192 = vector.broadcast %190 : vector<16x1xf32> to vector<16x8xf32>
      %193 = arith.mulf %191, %192 : vector<16x8xf32>
      %194 = arith.truncf %193 : vector<16x8xf32> to vector<16x8xbf16>
      %c0_144 = arith.constant 0 : index
      %c0_145 = arith.constant 0 : index
      %c24_146 = arith.constant 24 : index
      %195 = vector.load %arg6[%c0_144, %c0_145, %c24_146] : memref<1x16x32xbf16, #tpu.memory_space<vmem>>, vector<1x16x8xbf16>
      %196 = vector.shape_cast %195 : vector<1x16x8xbf16> to vector<16x8xbf16>
      %197 = vector.shape_cast %194 : vector<16x8xbf16> to vector<1x16x8xbf16>
      tpu.vector_store %arg6[%c0_144, %c0_145, %c24_146], %197 {strides = array<i32>} : memref<1x16x32xbf16, #tpu.memory_space<vmem>>, vector<1x16x8xbf16>,
    } else {
    }
    return
  }
  func.func @transform_0(%arg0: i32, %arg1: i32, %arg2: i32) -> (i32, i32, i32) {
    %c0_i32 = arith.constant 0 : i32
    %c0_i32_0 = arith.constant 0 : i32
    return %arg0, %arg1, %c0_i32 : i32, i32, i32
  }
  func.func @transform_1(%arg0: i32, %arg1: i32, %arg2: i32) -> (i32, i32, i32) {
    %c0_i32 = arith.constant 0 : i32
    %c0_i32_0 = arith.constant 0 : i32
    return %arg0, %arg2, %c0_i32 : i32, i32, i32
  }
  func.func @transform_2(%arg0: i32, %arg1: i32, %arg2: i32) -> (i32, i32, i32) {
    %c0_i32 = arith.constant 0 : i32
    %c0_i32_0 = arith.constant 0 : i32
    return %arg0, %arg2, %c0_i32 : i32, i32, i32
  }
  func.func @transform_3(%arg0: i32, %arg1: i32, %arg2: i32) -> (i32, i32, i32) {
    %c0_i32 = arith.constant 0 : i32
    %c0_i32_0 = arith.constant 0 : i32
    return %arg0, %arg1, %c0_i32 : i32, i32, i32
  }
}

module attributes {stable_mosaic.version = 11 : i64} {
  func.func @_matmul_bias_kernel(%arg0: i32, %arg1: i32, %arg2: i32, %arg3: memref<32x32xbf16, #tpu.memory_space<vmem>>, %arg4: memref<32x32xbf16, #tpu.memory_space<vmem>>, %arg5: memref<1x32xf32, #tpu.memory_space<vmem>>, %arg6: memref<32x32xbf16, #tpu.memory_space<vmem>>, %arg7: memref<32x32xbf16, #tpu.memory_space<vmem>>, %arg8: memref<32x32xf32, #tpu.memory_space<vmem>>) attributes {dimension_semantics = [#tpu.dimension_semantics<parallel>, #tpu.dimension_semantics<parallel>, #tpu.dimension_semantics<arbitrary>], iteration_bounds = array<i64: 1, 1, 1>, scalar_prefetch = 0 : i64, scratch_operands = 1 : i64, tpu.core_type = #tpu.core_type<tc>, window_params = [{transform_indices = @transform_0, window_bounds = array<i64: 32, 32>}, {transform_indices = @transform_1, window_bounds = array<i64: 32, 32>}, {transform_indices = @transform_2, window_bounds = array<i64: 1, 32>}, {transform_indices = @transform_3, window_bounds = array<i64: 32, 32>}, {transform_indices = @transform_4, window_bounds = array<i64: 32, 32>}]} {
    %c0_i32 = arith.constant 0 : i32
    %0 = arith.cmpi eq, %arg2, %c0_i32 : i32
    %1 = arith.extui %0 : i1 to i32
    %c0_i32_0 = arith.constant 0 : i32
    %2 = arith.cmpi ne, %1, %c0_i32_0 : i32
    scf.if %2 {
      %cst_10 = arith.constant 0.000000e+00 : f32
      %12 = vector.broadcast %cst_10 : f32 to vector<32x32xf32>
      %c0_11 = arith.constant 0 : index
      %c0_12 = arith.constant 0 : index
      %13 = vector.load %arg8[%c0_11, %c0_12] : memref<32x32xf32, #tpu.memory_space<vmem>>, vector<32x32xf32>
      tpu.vector_store %arg8[%c0_11, %c0_12], %12 {strides = array<i32>} : memref<32x32xf32, #tpu.memory_space<vmem>>, vector<32x32xf32>,
    } else {
    }
    %c0 = arith.constant 0 : index
    %c0_1 = arith.constant 0 : index
    %3 = vector.load %arg8[%c0, %c0_1] : memref<32x32xf32, #tpu.memory_space<vmem>>, vector<32x32xf32>
    %c0_2 = arith.constant 0 : index
    %c0_3 = arith.constant 0 : index
    %4 = vector.load %arg3[%c0_2, %c0_3] : memref<32x32xbf16, #tpu.memory_space<vmem>>, vector<32x32xbf16>
    %c0_4 = arith.constant 0 : index
    %c0_5 = arith.constant 0 : index
    %5 = vector.load %arg4[%c0_4, %c0_5] : memref<32x32xbf16, #tpu.memory_space<vmem>>, vector<32x32xbf16>
    %cst = arith.constant dense<0.000000e+00> : vector<32x32xf32>
    %6 = tpu.matmul %4, %5, %cst {dimension_numbers = #tpu.dot_dimension_numbers<[1], [0], [0], [1], [0, 0, 1, 1], [], []>} : vector<32x32xbf16>, vector<32x32xbf16>, vector<32x32xf32> -> vector<32x32xf32>
    %7 = arith.addf %3, %6 : vector<32x32xf32>
    %c0_6 = arith.constant 0 : index
    %c0_7 = arith.constant 0 : index
    %8 = vector.load %arg8[%c0_6, %c0_7] : memref<32x32xf32, #tpu.memory_space<vmem>>, vector<32x32xf32>
    tpu.vector_store %arg8[%c0_6, %c0_7], %7 {strides = array<i32>} : memref<32x32xf32, #tpu.memory_space<vmem>>, vector<32x32xf32>,
    %c0_i32_8 = arith.constant 0 : i32
    %9 = arith.cmpi eq, %arg2, %c0_i32_8 : i32
    %10 = arith.extui %9 : i1 to i32
    %c0_i32_9 = arith.constant 0 : i32
    %11 = arith.cmpi ne, %10, %c0_i32_9 : i32
    scf.if %11 {
      %c0_10 = arith.constant 0 : index
      %c0_11 = arith.constant 0 : index
      %12 = vector.load %arg8[%c0_10, %c0_11] : memref<32x32xf32, #tpu.memory_space<vmem>>, vector<32x32xf32>
      %c0_12 = arith.constant 0 : index
      %c0_13 = arith.constant 0 : index
      %13 = vector.load %arg5[%c0_12, %c0_13] : memref<1x32xf32, #tpu.memory_space<vmem>>, vector<1x32xf32>
      %14 = vector.broadcast %13 : vector<1x32xf32> to vector<32x32xf32>
      %15 = arith.addf %12, %14 : vector<32x32xf32>
      %c0_14 = arith.constant 0 : index
      %c0_15 = arith.constant 0 : index
      %16 = vector.load %arg6[%c0_14, %c0_15] : memref<32x32xbf16, #tpu.memory_space<vmem>>, vector<32x32xbf16>
      %17 = arith.extf %16 : vector<32x32xbf16> to vector<32x32xf32>
      %18 = arith.addf %15, %17 : vector<32x32xf32>
      %19 = arith.truncf %18 : vector<32x32xf32> to vector<32x32xbf16>
      %c0_16 = arith.constant 0 : index
      %c0_17 = arith.constant 0 : index
      %20 = vector.load %arg7[%c0_16, %c0_17] : memref<32x32xbf16, #tpu.memory_space<vmem>>, vector<32x32xbf16>
      tpu.vector_store %arg7[%c0_16, %c0_17], %19 {strides = array<i32>} : memref<32x32xbf16, #tpu.memory_space<vmem>>, vector<32x32xbf16>,
    } else {
    }
    return
  }
  func.func @transform_0(%arg0: i32, %arg1: i32, %arg2: i32) -> (i32, i32) {
    %c0_i32 = arith.constant 0 : i32
    return %arg0, %arg2 : i32, i32
  }
  func.func @transform_1(%arg0: i32, %arg1: i32, %arg2: i32) -> (i32, i32) {
    %c0_i32 = arith.constant 0 : i32
    return %arg2, %arg1 : i32, i32
  }
  func.func @transform_2(%arg0: i32, %arg1: i32, %arg2: i32) -> (i32, i32) {
    %c0_i32 = arith.constant 0 : i32
    %c0_i32_0 = arith.constant 0 : i32
    return %c0_i32, %arg1 : i32, i32
  }
  func.func @transform_3(%arg0: i32, %arg1: i32, %arg2: i32) -> (i32, i32) {
    %c0_i32 = arith.constant 0 : i32
    return %arg0, %arg1 : i32, i32
  }
  func.func @transform_4(%arg0: i32, %arg1: i32, %arg2: i32) -> (i32, i32) {
    %c0_i32 = arith.constant 0 : i32
    return %arg0, %arg1 : i32, i32
  }
}

module attributes {stable_mosaic.version = 11 : i64} {
  func.func @_ln_matmul_bias_kernel(%arg0: i32, %arg1: memref<32x32xbf16, #tpu.memory_space<vmem>>, %arg2: memref<1x32xf32, #tpu.memory_space<vmem>>, %arg3: memref<1x32xf32, #tpu.memory_space<vmem>>, %arg4: memref<32x64xbf16, #tpu.memory_space<vmem>>, %arg5: memref<1x64xf32, #tpu.memory_space<vmem>>, %arg6: memref<32x64xbf16, #tpu.memory_space<vmem>>) attributes {dimension_semantics = [#tpu.dimension_semantics<parallel>], iteration_bounds = array<i64: 1>, scalar_prefetch = 0 : i64, scratch_operands = 0 : i64, tpu.core_type = #tpu.core_type<tc>, window_params = [{transform_indices = @transform_0, window_bounds = array<i64: 32, 32>}, {pipeline_mode = #tpu.pipeline_mode<synchronous>, transform_indices = @transform_1, window_bounds = array<i64: 1, 32>}, {pipeline_mode = #tpu.pipeline_mode<synchronous>, transform_indices = @transform_2, window_bounds = array<i64: 1, 32>}, {pipeline_mode = #tpu.pipeline_mode<synchronous>, transform_indices = @transform_3, window_bounds = array<i64: 32, 64>}, {pipeline_mode = #tpu.pipeline_mode<synchronous>, transform_indices = @transform_4, window_bounds = array<i64: 1, 64>}, {transform_indices = @transform_5, window_bounds = array<i64: 32, 64>}]} {
    %c0 = arith.constant 0 : index
    %c0_0 = arith.constant 0 : index
    %0 = vector.load %arg1[%c0, %c0_0] : memref<32x32xbf16, #tpu.memory_space<vmem>>, vector<32x32xbf16>
    %1 = arith.extf %0 : vector<32x32xbf16> to vector<32x32xf32>
    %cst = arith.constant dense<0.000000e+00> : vector<32xf32>
    %2 = vector.multi_reduction <add>, %1, %cst [1] : vector<32x32xf32> to vector<32xf32>
    %3 = vector.shape_cast %2 : vector<32xf32> to vector<32x1xf32>
    %cst_1 = arith.constant 3.200000e+01 : f32
    %4 = vector.broadcast %cst_1 : f32 to vector<32x1xf32>
    %5 = arith.divf %3, %4 : vector<32x1xf32>
    %6 = vector.broadcast %5 : vector<32x1xf32> to vector<32x32xf32>
    %7 = arith.subf %1, %6 : vector<32x32xf32>
    %8 = arith.mulf %7, %7 : vector<32x32xf32>
    %cst_2 = arith.constant dense<0.000000e+00> : vector<32xf32>
    %9 = vector.multi_reduction <add>, %8, %cst_2 [1] : vector<32x32xf32> to vector<32xf32>
    %10 = vector.shape_cast %9 : vector<32xf32> to vector<32x1xf32>
    %cst_3 = arith.constant 3.200000e+01 : f32
    %11 = vector.broadcast %cst_3 : f32 to vector<32x1xf32>
    %12 = arith.divf %10, %11 : vector<32x1xf32>
    %cst_4 = arith.constant 9.99999974E-6 : f32
    %13 = vector.broadcast %cst_4 : f32 to vector<32x1xf32>
    %14 = arith.addf %12, %13 : vector<32x1xf32>
    %15 = math.rsqrt %14 : vector<32x1xf32>
    %16 = vector.broadcast %15 : vector<32x1xf32> to vector<32x32xf32>
    %17 = arith.mulf %7, %16 : vector<32x32xf32>
    %c0_5 = arith.constant 0 : index
    %c0_6 = arith.constant 0 : index
    %18 = vector.load %arg2[%c0_5, %c0_6] : memref<1x32xf32, #tpu.memory_space<vmem>>, vector<1x32xf32>
    %19 = vector.broadcast %18 : vector<1x32xf32> to vector<32x32xf32>
    %20 = arith.mulf %17, %19 : vector<32x32xf32>
    %c0_7 = arith.constant 0 : index
    %c0_8 = arith.constant 0 : index
    %21 = vector.load %arg3[%c0_7, %c0_8] : memref<1x32xf32, #tpu.memory_space<vmem>>, vector<1x32xf32>
    %22 = vector.broadcast %21 : vector<1x32xf32> to vector<32x32xf32>
    %23 = arith.addf %20, %22 : vector<32x32xf32>
    %24 = arith.truncf %23 : vector<32x32xf32> to vector<32x32xbf16>
    %c0_9 = arith.constant 0 : index
    %c0_10 = arith.constant 0 : index
    %25 = vector.load %arg4[%c0_9, %c0_10] : memref<32x64xbf16, #tpu.memory_space<vmem>>, vector<32x64xbf16>
    %cst_11 = arith.constant dense<0.000000e+00> : vector<32x64xf32>
    %26 = tpu.matmul %24, %25, %cst_11 {dimension_numbers = #tpu.dot_dimension_numbers<[1], [0], [0], [1], [0, 0, 1, 1], [], []>} : vector<32x32xbf16>, vector<32x64xbf16>, vector<32x64xf32> -> vector<32x64xf32>
    %c0_12 = arith.constant 0 : index
    %c0_13 = arith.constant 0 : index
    %27 = vector.load %arg5[%c0_12, %c0_13] : memref<1x64xf32, #tpu.memory_space<vmem>>, vector<1x64xf32>
    %28 = vector.broadcast %27 : vector<1x64xf32> to vector<32x64xf32>
    %29 = arith.addf %26, %28 : vector<32x64xf32>
    %30 = arith.mulf %29, %29 : vector<32x64xf32>
    %31 = arith.mulf %29, %30 : vector<32x64xf32>
    %cst_14 = arith.constant 4.471500e-02 : f32
    %32 = vector.broadcast %cst_14 : f32 to vector<32x64xf32>
    %33 = arith.mulf %32, %31 : vector<32x64xf32>
    %34 = arith.addf %29, %33 : vector<32x64xf32>
    %cst_15 = arith.constant 0.797884583 : f32
    %35 = vector.broadcast %cst_15 : f32 to vector<32x64xf32>
    %36 = arith.mulf %35, %34 : vector<32x64xf32>
    %37 = math.tanh %36 : vector<32x64xf32>
    %cst_16 = arith.constant 1.000000e+00 : f32
    %38 = vector.broadcast %cst_16 : f32 to vector<32x64xf32>
    %39 = arith.addf %38, %37 : vector<32x64xf32>
    %cst_17 = arith.constant 5.000000e-01 : f32
    %40 = vector.broadcast %cst_17 : f32 to vector<32x64xf32>
    %41 = arith.mulf %40, %39 : vector<32x64xf32>
    %42 = arith.mulf %29, %41 : vector<32x64xf32>
    %43 = arith.truncf %42 : vector<32x64xf32> to vector<32x64xbf16>
    %c0_18 = arith.constant 0 : index
    %c0_19 = arith.constant 0 : index
    %44 = vector.load %arg6[%c0_18, %c0_19] : memref<32x64xbf16, #tpu.memory_space<vmem>>, vector<32x64xbf16>
    tpu.vector_store %arg6[%c0_18, %c0_19], %43 {strides = array<i32>} : memref<32x64xbf16, #tpu.memory_space<vmem>>, vector<32x64xbf16>,
    return
  }
  func.func @transform_0(%arg0: i32) -> (i32, i32) {
    %c0_i32 = arith.constant 0 : i32
    %c0_i32_0 = arith.constant 0 : i32
    return %arg0, %c0_i32 : i32, i32
  }
  func.func @transform_1(%arg0: i32) -> (i32, i32) {
    %c0_i32 = arith.constant 0 : i32
    %c0_i32_0 = arith.constant 0 : i32
    %c0_i32_1 = arith.constant 0 : i32
    return %c0_i32, %c0_i32_0 : i32, i32
  }
  func.func @transform_2(%arg0: i32) -> (i32, i32) {
    %c0_i32 = arith.constant 0 : i32
    %c0_i32_0 = arith.constant 0 : i32
    %c0_i32_1 = arith.constant 0 : i32
    return %c0_i32, %c0_i32_0 : i32, i32
  }
  func.func @transform_3(%arg0: i32) -> (i32, i32) {
    %c0_i32 = arith.constant 0 : i32
    %c0_i32_0 = arith.constant 0 : i32
    %c0_i32_1 = arith.constant 0 : i32
    return %c0_i32, %c0_i32_0 : i32, i32
  }
  func.func @transform_4(%arg0: i32) -> (i32, i32) {
    %c0_i32 = arith.constant 0 : i32
    %c0_i32_0 = arith.constant 0 : i32
    %c0_i32_1 = arith.constant 0 : i32
    return %c0_i32, %c0_i32_0 : i32, i32
  }
  func.func @transform_5(%arg0: i32) -> (i32, i32) {
    %c0_i32 = arith.constant 0 : i32
    %c0_i32_0 = arith.constant 0 : i32
    return %arg0, %c0_i32 : i32, i32
  }
}

module attributes {stable_mosaic.version = 11 : i64} {
  func.func @_matmul_bias_kernel(%arg0: i32, %arg1: i32, %arg2: i32, %arg3: memref<32x64xbf16, #tpu.memory_space<vmem>>, %arg4: memref<64x32xbf16, #tpu.memory_space<vmem>>, %arg5: memref<1x32xf32, #tpu.memory_space<vmem>>, %arg6: memref<32x32xbf16, #tpu.memory_space<vmem>>, %arg7: memref<32x32xbf16, #tpu.memory_space<vmem>>, %arg8: memref<32x32xf32, #tpu.memory_space<vmem>>) attributes {dimension_semantics = [#tpu.dimension_semantics<parallel>, #tpu.dimension_semantics<parallel>, #tpu.dimension_semantics<arbitrary>], iteration_bounds = array<i64: 1, 1, 1>, scalar_prefetch = 0 : i64, scratch_operands = 1 : i64, tpu.core_type = #tpu.core_type<tc>, window_params = [{transform_indices = @transform_0, window_bounds = array<i64: 32, 64>}, {transform_indices = @transform_1, window_bounds = array<i64: 64, 32>}, {transform_indices = @transform_2, window_bounds = array<i64: 1, 32>}, {transform_indices = @transform_3, window_bounds = array<i64: 32, 32>}, {transform_indices = @transform_4, window_bounds = array<i64: 32, 32>}]} {
    %c0_i32 = arith.constant 0 : i32
    %0 = arith.cmpi eq, %arg2, %c0_i32 : i32
    %1 = arith.extui %0 : i1 to i32
    %c0_i32_0 = arith.constant 0 : i32
    %2 = arith.cmpi ne, %1, %c0_i32_0 : i32
    scf.if %2 {
      %cst_10 = arith.constant 0.000000e+00 : f32
      %12 = vector.broadcast %cst_10 : f32 to vector<32x32xf32>
      %c0_11 = arith.constant 0 : index
      %c0_12 = arith.constant 0 : index
      %13 = vector.load %arg8[%c0_11, %c0_12] : memref<32x32xf32, #tpu.memory_space<vmem>>, vector<32x32xf32>
      tpu.vector_store %arg8[%c0_11, %c0_12], %12 {strides = array<i32>} : memref<32x32xf32, #tpu.memory_space<vmem>>, vector<32x32xf32>,
    } else {
    }
    %c0 = arith.constant 0 : index
    %c0_1 = arith.constant 0 : index
    %3 = vector.load %arg8[%c0, %c0_1] : memref<32x32xf32, #tpu.memory_space<vmem>>, vector<32x32xf32>
    %c0_2 = arith.constant 0 : index
    %c0_3 = arith.constant 0 : index
    %4 = vector.load %arg3[%c0_2, %c0_3] : memref<32x64xbf16, #tpu.memory_space<vmem>>, vector<32x64xbf16>
    %c0_4 = arith.constant 0 : index
    %c0_5 = arith.constant 0 : index
    %5 = vector.load %arg4[%c0_4, %c0_5] : memref<64x32xbf16, #tpu.memory_space<vmem>>, vector<64x32xbf16>
    %cst = arith.constant dense<0.000000e+00> : vector<32x32xf32>
    %6 = tpu.matmul %4, %5, %cst {dimension_numbers = #tpu.dot_dimension_numbers<[1], [0], [0], [1], [0, 0, 1, 1], [], []>} : vector<32x64xbf16>, vector<64x32xbf16>, vector<32x32xf32> -> vector<32x32xf32>
    %7 = arith.addf %3, %6 : vector<32x32xf32>
    %c0_6 = arith.constant 0 : index
    %c0_7 = arith.constant 0 : index
    %8 = vector.load %arg8[%c0_6, %c0_7] : memref<32x32xf32, #tpu.memory_space<vmem>>, vector<32x32xf32>
    tpu.vector_store %arg8[%c0_6, %c0_7], %7 {strides = array<i32>} : memref<32x32xf32, #tpu.memory_space<vmem>>, vector<32x32xf32>,
    %c0_i32_8 = arith.constant 0 : i32
    %9 = arith.cmpi eq, %arg2, %c0_i32_8 : i32
    %10 = arith.extui %9 : i1 to i32
    %c0_i32_9 = arith.constant 0 : i32
    %11 = arith.cmpi ne, %10, %c0_i32_9 : i32
    scf.if %11 {
      %c0_10 = arith.constant 0 : index
      %c0_11 = arith.constant 0 : index
      %12 = vector.load %arg8[%c0_10, %c0_11] : memref<32x32xf32, #tpu.memory_space<vmem>>, vector<32x32xf32>
      %c0_12 = arith.constant 0 : index
      %c0_13 = arith.constant 0 : index
      %13 = vector.load %arg5[%c0_12, %c0_13] : memref<1x32xf32, #tpu.memory_space<vmem>>, vector<1x32xf32>
      %14 = vector.broadcast %13 : vector<1x32xf32> to vector<32x32xf32>
      %15 = arith.addf %12, %14 : vector<32x32xf32>
      %c0_14 = arith.constant 0 : index
      %c0_15 = arith.constant 0 : index
      %16 = vector.load %arg6[%c0_14, %c0_15] : memref<32x32xbf16, #tpu.memory_space<vmem>>, vector<32x32xbf16>
      %17 = arith.extf %16 : vector<32x32xbf16> to vector<32x32xf32>
      %18 = arith.addf %15, %17 : vector<32x32xf32>
      %19 = arith.truncf %18 : vector<32x32xf32> to vector<32x32xbf16>
      %c0_16 = arith.constant 0 : index
      %c0_17 = arith.constant 0 : index
      %20 = vector.load %arg7[%c0_16, %c0_17] : memref<32x32xbf16, #tpu.memory_space<vmem>>, vector<32x32xbf16>
      tpu.vector_store %arg7[%c0_16, %c0_17], %19 {strides = array<i32>} : memref<32x32xbf16, #tpu.memory_space<vmem>>, vector<32x32xbf16>,
    } else {
    }
    return
  }
  func.func @transform_0(%arg0: i32, %arg1: i32, %arg2: i32) -> (i32, i32) {
    %c0_i32 = arith.constant 0 : i32
    return %arg0, %arg2 : i32, i32
  }
  func.func @transform_1(%arg0: i32, %arg1: i32, %arg2: i32) -> (i32, i32) {
    %c0_i32 = arith.constant 0 : i32
    return %arg2, %arg1 : i32, i32
  }
  func.func @transform_2(%arg0: i32, %arg1: i32, %arg2: i32) -> (i32, i32) {
    %c0_i32 = arith.constant 0 : i32
    %c0_i32_0 = arith.constant 0 : i32
    return %c0_i32, %arg1 : i32, i32
  }
  func.func @transform_3(%arg0: i32, %arg1: i32, %arg2: i32) -> (i32, i32) {
    %c0_i32 = arith.constant 0 : i32
    return %arg0, %arg1 : i32, i32
  }
  func.func @transform_4(%arg0: i32, %arg1: i32, %arg2: i32) -> (i32, i32) {
    %c0_i32 = arith.constant 0 : i32
    return %arg0, %arg1 : i32, i32
  }
}

module attributes {stable_mosaic.version = 11 : i64} {
  func.func @_ln_matmul_bias_kernel(%arg0: i32, %arg1: memref<8x128xbf16, #tpu.memory_space<vmem>>, %arg2: memref<1x128xf32, #tpu.memory_space<vmem>>, %arg3: memref<1x128xf32, #tpu.memory_space<vmem>>, %arg4: memref<128x64xbf16, #tpu.memory_space<vmem>>, %arg5: memref<1x64xf32, #tpu.memory_space<vmem>>, %arg6: memref<8x64xbf16, #tpu.memory_space<vmem>>) attributes {dimension_semantics = [#tpu.dimension_semantics<parallel>], iteration_bounds = array<i64: 1>, scalar_prefetch = 0 : i64, scratch_operands = 0 : i64, tpu.core_type = #tpu.core_type<tc>, window_params = [{transform_indices = @transform_0, window_bounds = array<i64: 8, 128>}, {pipeline_mode = #tpu.pipeline_mode<synchronous>, transform_indices = @transform_1, window_bounds = array<i64: 1, 128>}, {pipeline_mode = #tpu.pipeline_mode<synchronous>, transform_indices = @transform_2, window_bounds = array<i64: 1, 128>}, {pipeline_mode = #tpu.pipeline_mode<synchronous>, transform_indices = @transform_3, window_bounds = array<i64: 128, 64>}, {pipeline_mode = #tpu.pipeline_mode<synchronous>, transform_indices = @transform_4, window_bounds = array<i64: 1, 64>}, {transform_indices = @transform_5, window_bounds = array<i64: 8, 64>}]} {
    %c0 = arith.constant 0 : index
    %c0_0 = arith.constant 0 : index
    %0 = vector.load %arg1[%c0, %c0_0] : memref<8x128xbf16, #tpu.memory_space<vmem>>, vector<8x128xbf16>
    %1 = arith.extf %0 : vector<8x128xbf16> to vector<8x128xf32>
    %cst = arith.constant dense<0.000000e+00> : vector<8xf32>
    %2 = vector.multi_reduction <add>, %1, %cst [1] : vector<8x128xf32> to vector<8xf32>
    %3 = vector.shape_cast %2 : vector<8xf32> to vector<8x1xf32>
    %cst_1 = arith.constant 1.280000e+02 : f32
    %4 = vector.broadcast %cst_1 : f32 to vector<8x1xf32>
    %5 = arith.divf %3, %4 : vector<8x1xf32>
    %6 = vector.broadcast %5 : vector<8x1xf32> to vector<8x128xf32>
    %7 = arith.subf %1, %6 : vector<8x128xf32>
    %8 = arith.mulf %7, %7 : vector<8x128xf32>
    %cst_2 = arith.constant dense<0.000000e+00> : vector<8xf32>
    %9 = vector.multi_reduction <add>, %8, %cst_2 [1] : vector<8x128xf32> to vector<8xf32>
    %10 = vector.shape_cast %9 : vector<8xf32> to vector<8x1xf32>
    %cst_3 = arith.constant 1.280000e+02 : f32
    %11 = vector.broadcast %cst_3 : f32 to vector<8x1xf32>
    %12 = arith.divf %10, %11 : vector<8x1xf32>
    %cst_4 = arith.constant 9.99999974E-6 : f32
    %13 = vector.broadcast %cst_4 : f32 to vector<8x1xf32>
    %14 = arith.addf %12, %13 : vector<8x1xf32>
    %15 = math.rsqrt %14 : vector<8x1xf32>
    %16 = vector.broadcast %15 : vector<8x1xf32> to vector<8x128xf32>
    %17 = arith.mulf %7, %16 : vector<8x128xf32>
    %c0_5 = arith.constant 0 : index
    %c0_6 = arith.constant 0 : index
    %18 = vector.load %arg2[%c0_5, %c0_6] : memref<1x128xf32, #tpu.memory_space<vmem>>, vector<1x128xf32>
    %19 = vector.broadcast %18 : vector<1x128xf32> to vector<8x128xf32>
    %20 = arith.mulf %17, %19 : vector<8x128xf32>
    %c0_7 = arith.constant 0 : index
    %c0_8 = arith.constant 0 : index
    %21 = vector.load %arg3[%c0_7, %c0_8] : memref<1x128xf32, #tpu.memory_space<vmem>>, vector<1x128xf32>
    %22 = vector.broadcast %21 : vector<1x128xf32> to vector<8x128xf32>
    %23 = arith.addf %20, %22 : vector<8x128xf32>
    %24 = arith.truncf %23 : vector<8x128xf32> to vector<8x128xbf16>
    %c0_9 = arith.constant 0 : index
    %c0_10 = arith.constant 0 : index
    %25 = vector.load %arg4[%c0_9, %c0_10] : memref<128x64xbf16, #tpu.memory_space<vmem>>, vector<128x64xbf16>
    %cst_11 = arith.constant dense<0.000000e+00> : vector<8x64xf32>
    %26 = tpu.matmul %24, %25, %cst_11 {dimension_numbers = #tpu.dot_dimension_numbers<[1], [0], [0], [1], [0, 0, 1, 1], [], []>} : vector<8x128xbf16>, vector<128x64xbf16>, vector<8x64xf32> -> vector<8x64xf32>
    %c0_12 = arith.constant 0 : index
    %c0_13 = arith.constant 0 : index
    %27 = vector.load %arg5[%c0_12, %c0_13] : memref<1x64xf32, #tpu.memory_space<vmem>>, vector<1x64xf32>
    %28 = vector.broadcast %27 : vector<1x64xf32> to vector<8x64xf32>
    %29 = arith.addf %26, %28 : vector<8x64xf32>
    %30 = arith.truncf %29 : vector<8x64xf32> to vector<8x64xbf16>
    %c0_14 = arith.constant 0 : index
    %c0_15 = arith.constant 0 : index
    %31 = vector.load %arg6[%c0_14, %c0_15] : memref<8x64xbf16, #tpu.memory_space<vmem>>, vector<8x64xbf16>
    tpu.vector_store %arg6[%c0_14, %c0_15], %30 {strides = array<i32>} : memref<8x64xbf16, #tpu.memory_space<vmem>>, vector<8x64xbf16>,
    return
  }
  func.func @transform_0(%arg0: i32) -> (i32, i32) {
    %c0_i32 = arith.constant 0 : i32
    %c0_i32_0 = arith.constant 0 : i32
    return %arg0, %c0_i32 : i32, i32
  }
  func.func @transform_1(%arg0: i32) -> (i32, i32) {
    %c0_i32 = arith.constant 0 : i32
    %c0_i32_0 = arith.constant 0 : i32
    %c0_i32_1 = arith.constant 0 : i32
    return %c0_i32, %c0_i32_0 : i32, i32
  }
  func.func @transform_2(%arg0: i32) -> (i32, i32) {
    %c0_i32 = arith.constant 0 : i32
    %c0_i32_0 = arith.constant 0 : i32
    %c0_i32_1 = arith.constant 0 : i32
    return %c0_i32, %c0_i32_0 : i32, i32
  }
  func.func @transform_3(%arg0: i32) -> (i32, i32) {
    %c0_i32 = arith.constant 0 : i32
    %c0_i32_0 = arith.constant 0 : i32
    %c0_i32_1 = arith.constant 0 : i32
    return %c0_i32, %c0_i32_0 : i32, i32
  }
  func.func @transform_4(%arg0: i32) -> (i32, i32) {
    %c0_i32 = arith.constant 0 : i32
    %c0_i32_0 = arith.constant 0 : i32
    %c0_i32_1 = arith.constant 0 : i32
    return %c0_i32, %c0_i32_0 : i32, i32
  }
  func.func @transform_5(%arg0: i32) -> (i32, i32) {
    %c0_i32 = arith.constant 0 : i32
    %c0_i32_0 = arith.constant 0 : i32
    return %arg0, %c0_i32 : i32, i32
  }
}

module attributes {stable_mosaic.version = 11 : i64} {
  func.func @_ln_matmul_bias_kernel(%arg0: i32, %arg1: memref<8x64xbf16, #tpu.memory_space<vmem>>, %arg2: memref<1x64xf32, #tpu.memory_space<vmem>>, %arg3: memref<1x64xf32, #tpu.memory_space<vmem>>, %arg4: memref<64x192xbf16, #tpu.memory_space<vmem>>, %arg5: memref<1x192xf32, #tpu.memory_space<vmem>>, %arg6: memref<8x64xbf16, #tpu.memory_space<vmem>>, %arg7: memref<8x64xbf16, #tpu.memory_space<vmem>>, %arg8: memref<8x64xbf16, #tpu.memory_space<vmem>>) attributes {dimension_semantics = [#tpu.dimension_semantics<parallel>], iteration_bounds = array<i64: 1>, scalar_prefetch = 0 : i64, scratch_operands = 0 : i64, tpu.core_type = #tpu.core_type<tc>, window_params = [{transform_indices = @transform_0, window_bounds = array<i64: 8, 64>}, {pipeline_mode = #tpu.pipeline_mode<synchronous>, transform_indices = @transform_1, window_bounds = array<i64: 1, 64>}, {pipeline_mode = #tpu.pipeline_mode<synchronous>, transform_indices = @transform_2, window_bounds = array<i64: 1, 64>}, {pipeline_mode = #tpu.pipeline_mode<synchronous>, transform_indices = @transform_3, window_bounds = array<i64: 64, 192>}, {pipeline_mode = #tpu.pipeline_mode<synchronous>, transform_indices = @transform_4, window_bounds = array<i64: 1, 192>}, {transform_indices = @transform_5, window_bounds = array<i64: 8, 64>}, {transform_indices = @transform_6, window_bounds = array<i64: 8, 64>}, {transform_indices = @transform_7, window_bounds = array<i64: 8, 64>}]} {
    %c0 = arith.constant 0 : index
    %c0_0 = arith.constant 0 : index
    %0 = vector.load %arg1[%c0, %c0_0] : memref<8x64xbf16, #tpu.memory_space<vmem>>, vector<8x64xbf16>
    %1 = arith.extf %0 : vector<8x64xbf16> to vector<8x64xf32>
    %cst = arith.constant dense<0.000000e+00> : vector<8xf32>
    %2 = vector.multi_reduction <add>, %1, %cst [1] : vector<8x64xf32> to vector<8xf32>
    %3 = vector.shape_cast %2 : vector<8xf32> to vector<8x1xf32>
    %cst_1 = arith.constant 6.400000e+01 : f32
    %4 = vector.broadcast %cst_1 : f32 to vector<8x1xf32>
    %5 = arith.divf %3, %4 : vector<8x1xf32>
    %6 = vector.broadcast %5 : vector<8x1xf32> to vector<8x64xf32>
    %7 = arith.subf %1, %6 : vector<8x64xf32>
    %8 = arith.mulf %7, %7 : vector<8x64xf32>
    %cst_2 = arith.constant dense<0.000000e+00> : vector<8xf32>
    %9 = vector.multi_reduction <add>, %8, %cst_2 [1] : vector<8x64xf32> to vector<8xf32>
    %10 = vector.shape_cast %9 : vector<8xf32> to vector<8x1xf32>
    %cst_3 = arith.constant 6.400000e+01 : f32
    %11 = vector.broadcast %cst_3 : f32 to vector<8x1xf32>
    %12 = arith.divf %10, %11 : vector<8x1xf32>
    %cst_4 = arith.constant 9.99999974E-6 : f32
    %13 = vector.broadcast %cst_4 : f32 to vector<8x1xf32>
    %14 = arith.addf %12, %13 : vector<8x1xf32>
    %15 = math.rsqrt %14 : vector<8x1xf32>
    %16 = vector.broadcast %15 : vector<8x1xf32> to vector<8x64xf32>
    %17 = arith.mulf %7, %16 : vector<8x64xf32>
    %c0_5 = arith.constant 0 : index
    %c0_6 = arith.constant 0 : index
    %18 = vector.load %arg2[%c0_5, %c0_6] : memref<1x64xf32, #tpu.memory_space<vmem>>, vector<1x64xf32>
    %19 = vector.broadcast %18 : vector<1x64xf32> to vector<8x64xf32>
    %20 = arith.mulf %17, %19 : vector<8x64xf32>
    %c0_7 = arith.constant 0 : index
    %c0_8 = arith.constant 0 : index
    %21 = vector.load %arg3[%c0_7, %c0_8] : memref<1x64xf32, #tpu.memory_space<vmem>>, vector<1x64xf32>
    %22 = vector.broadcast %21 : vector<1x64xf32> to vector<8x64xf32>
    %23 = arith.addf %20, %22 : vector<8x64xf32>
    %24 = arith.truncf %23 : vector<8x64xf32> to vector<8x64xbf16>
    %c0_9 = arith.constant 0 : index
    %c0_10 = arith.constant 0 : index
    %25 = vector.load %arg4[%c0_9, %c0_10] : memref<64x192xbf16, #tpu.memory_space<vmem>>, vector<64x192xbf16>
    %cst_11 = arith.constant dense<0.000000e+00> : vector<8x192xf32>
    %26 = tpu.matmul %24, %25, %cst_11 {dimension_numbers = #tpu.dot_dimension_numbers<[1], [0], [0], [1], [0, 0, 1, 1], [], []>} : vector<8x64xbf16>, vector<64x192xbf16>, vector<8x192xf32> -> vector<8x192xf32>
    %c0_12 = arith.constant 0 : index
    %c0_13 = arith.constant 0 : index
    %27 = vector.load %arg5[%c0_12, %c0_13] : memref<1x192xf32, #tpu.memory_space<vmem>>, vector<1x192xf32>
    %28 = vector.broadcast %27 : vector<1x192xf32> to vector<8x192xf32>
    %29 = arith.addf %26, %28 : vector<8x192xf32>
    %30 = vector.extract_strided_slice %29 {offsets = [0, 0], sizes = [8, 64], strides = [1, 1]} : vector<8x192xf32> to vector<8x64xf32>
    %31 = arith.truncf %30 : vector<8x64xf32> to vector<8x64xbf16>
    %c0_14 = arith.constant 0 : index
    %c0_15 = arith.constant 0 : index
    %32 = vector.load %arg6[%c0_14, %c0_15] : memref<8x64xbf16, #tpu.memory_space<vmem>>, vector<8x64xbf16>
    tpu.vector_store %arg6[%c0_14, %c0_15], %31 {strides = array<i32>} : memref<8x64xbf16, #tpu.memory_space<vmem>>, vector<8x64xbf16>,
    %33 = vector.extract_strided_slice %29 {offsets = [0, 64], sizes = [8, 64], strides = [1, 1]} : vector<8x192xf32> to vector<8x64xf32>
    %34 = arith.truncf %33 : vector<8x64xf32> to vector<8x64xbf16>
    %c0_16 = arith.constant 0 : index
    %c0_17 = arith.constant 0 : index
    %35 = vector.load %arg7[%c0_16, %c0_17] : memref<8x64xbf16, #tpu.memory_space<vmem>>, vector<8x64xbf16>
    tpu.vector_store %arg7[%c0_16, %c0_17], %34 {strides = array<i32>} : memref<8x64xbf16, #tpu.memory_space<vmem>>, vector<8x64xbf16>,
    %36 = vector.extract_strided_slice %29 {offsets = [0, 128], sizes = [8, 64], strides = [1, 1]} : vector<8x192xf32> to vector<8x64xf32>
    %37 = arith.truncf %36 : vector<8x64xf32> to vector<8x64xbf16>
    %c0_18 = arith.constant 0 : index
    %c0_19 = arith.constant 0 : index
    %38 = vector.load %arg8[%c0_18, %c0_19] : memref<8x64xbf16, #tpu.memory_space<vmem>>, vector<8x64xbf16>
    tpu.vector_store %arg8[%c0_18, %c0_19], %37 {strides = array<i32>} : memref<8x64xbf16, #tpu.memory_space<vmem>>, vector<8x64xbf16>,
    return
  }
  func.func @transform_0(%arg0: i32) -> (i32, i32) {
    %c0_i32 = arith.constant 0 : i32
    %c0_i32_0 = arith.constant 0 : i32
    return %arg0, %c0_i32 : i32, i32
  }
  func.func @transform_1(%arg0: i32) -> (i32, i32) {
    %c0_i32 = arith.constant 0 : i32
    %c0_i32_0 = arith.constant 0 : i32
    %c0_i32_1 = arith.constant 0 : i32
    return %c0_i32, %c0_i32_0 : i32, i32
  }
  func.func @transform_2(%arg0: i32) -> (i32, i32) {
    %c0_i32 = arith.constant 0 : i32
    %c0_i32_0 = arith.constant 0 : i32
    %c0_i32_1 = arith.constant 0 : i32
    return %c0_i32, %c0_i32_0 : i32, i32
  }
  func.func @transform_3(%arg0: i32) -> (i32, i32) {
    %c0_i32 = arith.constant 0 : i32
    %c0_i32_0 = arith.constant 0 : i32
    %c0_i32_1 = arith.constant 0 : i32
    return %c0_i32, %c0_i32_0 : i32, i32
  }
  func.func @transform_4(%arg0: i32) -> (i32, i32) {
    %c0_i32 = arith.constant 0 : i32
    %c0_i32_0 = arith.constant 0 : i32
    %c0_i32_1 = arith.constant 0 : i32
    return %c0_i32, %c0_i32_0 : i32, i32
  }
  func.func @transform_5(%arg0: i32) -> (i32, i32) {
    %c0_i32 = arith.constant 0 : i32
    %c0_i32_0 = arith.constant 0 : i32
    return %arg0, %c0_i32 : i32, i32
  }
  func.func @transform_6(%arg0: i32) -> (i32, i32) {
    %c0_i32 = arith.constant 0 : i32
    %c0_i32_0 = arith.constant 0 : i32
    return %arg0, %c0_i32 : i32, i32
  }
  func.func @transform_7(%arg0: i32) -> (i32, i32) {
    %c0_i32 = arith.constant 0 : i32
    %c0_i32_0 = arith.constant 0 : i32
    return %arg0, %c0_i32 : i32, i32
  }
}

module attributes {stable_mosaic.version = 11 : i64} {
  func.func @_flash_attn_kernel(%arg0: i32, %arg1: i32, %arg2: i32, %arg3: memref<1x4x64xbf16, #tpu.memory_space<vmem>>, %arg4: memref<1x4x64xbf16, #tpu.memory_space<vmem>>, %arg5: memref<1x4x64xbf16, #tpu.memory_space<vmem>>, %arg6: memref<1x4x64xbf16, #tpu.memory_space<vmem>>, %arg7: memref<4x4x1xf32, #tpu.memory_space<vmem>>, %arg8: memref<4x4x1xf32, #tpu.memory_space<vmem>>, %arg9: memref<4x64xf32, #tpu.memory_space<vmem>>) attributes {dimension_semantics = [#tpu.dimension_semantics<parallel>, #tpu.dimension_semantics<parallel>, #tpu.dimension_semantics<arbitrary>], iteration_bounds = array<i64: 2, 1, 1>, scalar_prefetch = 0 : i64, scratch_operands = 3 : i64, tpu.core_type = #tpu.core_type<tc>, window_params = [{transform_indices = @transform_0, window_bounds = array<i64: 1, 4, 64>}, {transform_indices = @transform_1, window_bounds = array<i64: 1, 4, 64>}, {transform_indices = @transform_2, window_bounds = array<i64: 1, 4, 64>}, {transform_indices = @transform_3, window_bounds = array<i64: 1, 4, 64>}]} {
    %c0_i32 = arith.constant 0 : i32
    %0 = arith.cmpi eq, %arg2, %c0_i32 : i32
    %1 = arith.extui %0 : i1 to i32
    %c0_i32_0 = arith.constant 0 : i32
    %2 = arith.cmpi ne, %1, %c0_i32_0 : i32
    scf.if %2 {
      %cst_115 = arith.constant 0xFF800000 : f32
      %158 = vector.broadcast %cst_115 : f32 to vector<4x4x1xf32>
      %c0_116 = arith.constant 0 : index
      %c0_117 = arith.constant 0 : index
      %c0_118 = arith.constant 0 : index
      %159 = vector.load %arg7[%c0_116, %c0_117, %c0_118] : memref<4x4x1xf32, #tpu.memory_space<vmem>>, vector<4x4x1xf32>
      tpu.vector_store %arg7[%c0_116, %c0_117, %c0_118], %158 {strides = array<i32>} : memref<4x4x1xf32, #tpu.memory_space<vmem>>, vector<4x4x1xf32>,
      %cst_119 = arith.constant 0.000000e+00 : f32
      %160 = vector.broadcast %cst_119 : f32 to vector<4x4x1xf32>
      %c0_120 = arith.constant 0 : index
      %c0_121 = arith.constant 0 : index
      %c0_122 = arith.constant 0 : index
      %161 = vector.load %arg8[%c0_120, %c0_121, %c0_122] : memref<4x4x1xf32, #tpu.memory_space<vmem>>, vector<4x4x1xf32>
      tpu.vector_store %arg8[%c0_120, %c0_121, %c0_122], %160 {strides = array<i32>} : memref<4x4x1xf32, #tpu.memory_space<vmem>>, vector<4x4x1xf32>,
      %cst_123 = arith.constant 0.000000e+00 : f32
      %162 = vector.broadcast %cst_123 : f32 to vector<4x64xf32>
      %c0_124 = arith.constant 0 : index
      %c0_125 = arith.constant 0 : index
      %163 = vector.load %arg9[%c0_124, %c0_125] : memref<4x64xf32, #tpu.memory_space<vmem>>, vector<4x64xf32>
      tpu.vector_store %arg9[%c0_124, %c0_125], %162 {strides = array<i32>} : memref<4x64xf32, #tpu.memory_space<vmem>>, vector<4x64xf32>,
    } else {
    }
    %c0 = arith.constant 0 : index
    %c0_1 = arith.constant 0 : index
    %c0_2 = arith.constant 0 : index
    %3 = vector.load %arg3[%c0, %c0_1, %c0_2] : memref<1x4x64xbf16, #tpu.memory_space<vmem>>, vector<1x4x16xbf16>
    %4 = vector.shape_cast %3 : vector<1x4x16xbf16> to vector<4x16xbf16>
    %cst = arith.constant 2.500000e-01 : bf16
    %5 = vector.broadcast %cst : bf16 to vector<4x16xbf16>
    %6 = arith.mulf %4, %5 : vector<4x16xbf16>
    %c0_3 = arith.constant 0 : index
    %c0_4 = arith.constant 0 : index
    %c0_5 = arith.constant 0 : index
    %7 = vector.load %arg4[%c0_3, %c0_4, %c0_5] : memref<1x4x64xbf16, #tpu.memory_space<vmem>>, vector<1x4x16xbf16>
    %8 = vector.shape_cast %7 : vector<1x4x16xbf16> to vector<4x16xbf16>
    %c0_6 = arith.constant 0 : index
    %c0_7 = arith.constant 0 : index
    %c0_8 = arith.constant 0 : index
    %9 = vector.load %arg5[%c0_6, %c0_7, %c0_8] : memref<1x4x64xbf16, #tpu.memory_space<vmem>>, vector<1x4x16xbf16>
    %10 = vector.shape_cast %9 : vector<1x4x16xbf16> to vector<4x16xbf16>
    %cst_9 = arith.constant dense<0.000000e+00> : vector<4x4xf32>
    %11 = tpu.matmul %6, %8, %cst_9 {dimension_numbers = #tpu.dot_dimension_numbers<[1], [1], [0], [0], [0, 0, 1, 0], [], []>} : vector<4x16xbf16>, vector<4x16xbf16>, vector<4x4xf32> -> vector<4x4xf32>
    %c0_10 = arith.constant 0 : index
    %c0_11 = arith.constant 0 : index
    %c0_12 = arith.constant 0 : index
    %12 = vector.load %arg7[%c0_10, %c0_11, %c0_12] : memref<4x4x1xf32, #tpu.memory_space<vmem>>, vector<1x4x1xf32>
    %13 = vector.shape_cast %12 : vector<1x4x1xf32> to vector<4x1xf32>
    %cst_13 = arith.constant dense<0xFF800000> : vector<4xf32>
    %14 = vector.multi_reduction <maximumf>, %11, %cst_13 [1] : vector<4x4xf32> to vector<4xf32>
    %15 = vector.shape_cast %14 : vector<4xf32> to vector<4x1xf32>
    %16 = arith.maximumf %13, %15 : vector<4x1xf32>
    %17 = arith.subf %13, %16 : vector<4x1xf32>
    %18 = math.exp %17 : vector<4x1xf32>
    %19 = vector.broadcast %16 : vector<4x1xf32> to vector<4x4xf32>
    %20 = arith.subf %11, %19 : vector<4x4xf32>
    %21 = math.exp %20 : vector<4x4xf32>
    %c0_14 = arith.constant 0 : index
    %c0_15 = arith.constant 0 : index
    %c0_16 = arith.constant 0 : index
    %22 = vector.load %arg8[%c0_14, %c0_15, %c0_16] : memref<4x4x1xf32, #tpu.memory_space<vmem>>, vector<1x4x1xf32>
    %23 = vector.shape_cast %22 : vector<1x4x1xf32> to vector<4x1xf32>
    %24 = arith.mulf %18, %23 : vector<4x1xf32>
    %cst_17 = arith.constant dense<0.000000e+00> : vector<4xf32>
    %25 = vector.multi_reduction <add>, %21, %cst_17 [1] : vector<4x4xf32> to vector<4xf32>
    %26 = vector.shape_cast %25 : vector<4xf32> to vector<4x1xf32>
    %27 = arith.addf %24, %26 : vector<4x1xf32>
    %c0_18 = arith.constant 0 : index
    %c0_19 = arith.constant 0 : index
    %c0_20 = arith.constant 0 : index
    %28 = vector.load %arg8[%c0_18, %c0_19, %c0_20] : memref<4x4x1xf32, #tpu.memory_space<vmem>>, vector<1x4x1xf32>
    %29 = vector.shape_cast %28 : vector<1x4x1xf32> to vector<4x1xf32>
    %30 = vector.shape_cast %27 : vector<4x1xf32> to vector<1x4x1xf32>
    tpu.vector_store %arg8[%c0_18, %c0_19, %c0_20], %30 {strides = array<i32>} : memref<4x4x1xf32, #tpu.memory_space<vmem>>, vector<1x4x1xf32>,
    %c0_21 = arith.constant 0 : index
    %c0_22 = arith.constant 0 : index
    %31 = vector.load %arg9[%c0_21, %c0_22] : memref<4x64xf32, #tpu.memory_space<vmem>>, vector<4x16xf32>
    %32 = vector.broadcast %18 : vector<4x1xf32> to vector<4x16xf32>
    %33 = arith.mulf %32, %31 : vector<4x16xf32>
    %34 = arith.truncf %21 : vector<4x4xf32> to vector<4x4xbf16>
    %cst_23 = arith.constant dense<0.000000e+00> : vector<4x16xf32>
    %35 = tpu.matmul %34, %10, %cst_23 {dimension_numbers = #tpu.dot_dimension_numbers<[1], [0], [0], [1], [0, 0, 1, 1], [], []>} : vector<4x4xbf16>, vector<4x16xbf16>, vector<4x16xf32> -> vector<4x16xf32>
    %36 = arith.addf %33, %35 : vector<4x16xf32>
    %c0_24 = arith.constant 0 : index
    %c0_25 = arith.constant 0 : index
    %37 = vector.load %arg9[%c0_24, %c0_25] : memref<4x64xf32, #tpu.memory_space<vmem>>, vector<4x16xf32>
    tpu.vector_store %arg9[%c0_24, %c0_25], %36 {strides = array<i32>} : memref<4x64xf32, #tpu.memory_space<vmem>>, vector<4x16xf32>,
    %c0_26 = arith.constant 0 : index
    %c0_27 = arith.constant 0 : index
    %c0_28 = arith.constant 0 : index
    %38 = vector.load %arg7[%c0_26, %c0_27, %c0_28] : memref<4x4x1xf32, #tpu.memory_space<vmem>>, vector<1x4x1xf32>
    %39 = vector.shape_cast %38 : vector<1x4x1xf32> to vector<4x1xf32>
    %40 = vector.shape_cast %16 : vector<4x1xf32> to vector<1x4x1xf32>
    tpu.vector_store %arg7[%c0_26, %c0_27, %c0_28], %40 {strides = array<i32>} : memref<4x4x1xf32, #tpu.memory_space<vmem>>, vector<1x4x1xf32>,
    %c0_29 = arith.constant 0 : index
    %c0_30 = arith.constant 0 : index
    %c16 = arith.constant 16 : index
    %41 = vector.load %arg3[%c0_29, %c0_30, %c16] : memref<1x4x64xbf16, #tpu.memory_space<vmem>>, vector<1x4x16xbf16>
    %42 = vector.shape_cast %41 : vector<1x4x16xbf16> to vector<4x16xbf16>
    %cst_31 = arith.constant 2.500000e-01 : bf16
    %43 = vector.broadcast %cst_31 : bf16 to vector<4x16xbf16>
    %44 = arith.mulf %42, %43 : vector<4x16xbf16>
    %c0_32 = arith.constant 0 : index
    %c0_33 = arith.constant 0 : index
    %c16_34 = arith.constant 16 : index
    %45 = vector.load %arg4[%c0_32, %c0_33, %c16_34] : memref<1x4x64xbf16, #tpu.memory_space<vmem>>, vector<1x4x16xbf16>
    %46 = vector.shape_cast %45 : vector<1x4x16xbf16> to vector<4x16xbf16>
    %c0_35 = arith.constant 0 : index
    %c0_36 = arith.constant 0 : index
    %c16_37 = arith.constant 16 : index
    %47 = vector.load %arg5[%c0_35, %c0_36, %c16_37] : memref<1x4x64xbf16, #tpu.memory_space<vmem>>, vector<1x4x16xbf16>
    %48 = vector.shape_cast %47 : vector<1x4x16xbf16> to vector<4x16xbf16>
    %cst_38 = arith.constant dense<0.000000e+00> : vector<4x4xf32>
    %49 = tpu.matmul %44, %46, %cst_38 {dimension_numbers = #tpu.dot_dimension_numbers<[1], [1], [0], [0], [0, 0, 1, 0], [], []>} : vector<4x16xbf16>, vector<4x16xbf16>, vector<4x4xf32> -> vector<4x4xf32>
    %c1 = arith.constant 1 : index
    %c0_39 = arith.constant 0 : index
    %c0_40 = arith.constant 0 : index
    %50 = vector.load %arg7[%c1, %c0_39, %c0_40] : memref<4x4x1xf32, #tpu.memory_space<vmem>>, vector<1x4x1xf32>
    %51 = vector.shape_cast %50 : vector<1x4x1xf32> to vector<4x1xf32>
    %cst_41 = arith.constant dense<0xFF800000> : vector<4xf32>
    %52 = vector.multi_reduction <maximumf>, %49, %cst_41 [1] : vector<4x4xf32> to vector<4xf32>
    %53 = vector.shape_cast %52 : vector<4xf32> to vector<4x1xf32>
    %54 = arith.maximumf %51, %53 : vector<4x1xf32>
    %55 = arith.subf %51, %54 : vector<4x1xf32>
    %56 = math.exp %55 : vector<4x1xf32>
    %57 = vector.broadcast %54 : vector<4x1xf32> to vector<4x4xf32>
    %58 = arith.subf %49, %57 : vector<4x4xf32>
    %59 = math.exp %58 : vector<4x4xf32>
    %c1_42 = arith.constant 1 : index
    %c0_43 = arith.constant 0 : index
    %c0_44 = arith.constant 0 : index
    %60 = vector.load %arg8[%c1_42, %c0_43, %c0_44] : memref<4x4x1xf32, #tpu.memory_space<vmem>>, vector<1x4x1xf32>
    %61 = vector.shape_cast %60 : vector<1x4x1xf32> to vector<4x1xf32>
    %62 = arith.mulf %56, %61 : vector<4x1xf32>
    %cst_45 = arith.constant dense<0.000000e+00> : vector<4xf32>
    %63 = vector.multi_reduction <add>, %59, %cst_45 [1] : vector<4x4xf32> to vector<4xf32>
    %64 = vector.shape_cast %63 : vector<4xf32> to vector<4x1xf32>
    %65 = arith.addf %62, %64 : vector<4x1xf32>
    %c1_46 = arith.constant 1 : index
    %c0_47 = arith.constant 0 : index
    %c0_48 = arith.constant 0 : index
    %66 = vector.load %arg8[%c1_46, %c0_47, %c0_48] : memref<4x4x1xf32, #tpu.memory_space<vmem>>, vector<1x4x1xf32>
    %67 = vector.shape_cast %66 : vector<1x4x1xf32> to vector<4x1xf32>
    %68 = vector.shape_cast %65 : vector<4x1xf32> to vector<1x4x1xf32>
    tpu.vector_store %arg8[%c1_46, %c0_47, %c0_48], %68 {strides = array<i32>} : memref<4x4x1xf32, #tpu.memory_space<vmem>>, vector<1x4x1xf32>,
    %c0_49 = arith.constant 0 : index
    %c16_50 = arith.constant 16 : index
    %69 = vector.load %arg9[%c0_49, %c16_50] : memref<4x64xf32, #tpu.memory_space<vmem>>, vector<4x16xf32>
    %70 = vector.broadcast %56 : vector<4x1xf32> to vector<4x16xf32>
    %71 = arith.mulf %70, %69 : vector<4x16xf32>
    %72 = arith.truncf %59 : vector<4x4xf32> to vector<4x4xbf16>
    %cst_51 = arith.constant dense<0.000000e+00> : vector<4x16xf32>
    %73 = tpu.matmul %72, %48, %cst_51 {dimension_numbers = #tpu.dot_dimension_numbers<[1], [0], [0], [1], [0, 0, 1, 1], [], []>} : vector<4x4xbf16>, vector<4x16xbf16>, vector<4x16xf32> -> vector<4x16xf32>
    %74 = arith.addf %71, %73 : vector<4x16xf32>
    %c0_52 = arith.constant 0 : index
    %c16_53 = arith.constant 16 : index
    %75 = vector.load %arg9[%c0_52, %c16_53] : memref<4x64xf32, #tpu.memory_space<vmem>>, vector<4x16xf32>
    tpu.vector_store %arg9[%c0_52, %c16_53], %74 {strides = array<i32>} : memref<4x64xf32, #tpu.memory_space<vmem>>, vector<4x16xf32>,
    %c1_54 = arith.constant 1 : index
    %c0_55 = arith.constant 0 : index
    %c0_56 = arith.constant 0 : index
    %76 = vector.load %arg7[%c1_54, %c0_55, %c0_56] : memref<4x4x1xf32, #tpu.memory_space<vmem>>, vector<1x4x1xf32>
    %77 = vector.shape_cast %76 : vector<1x4x1xf32> to vector<4x1xf32>
    %78 = vector.shape_cast %54 : vector<4x1xf32> to vector<1x4x1xf32>
    tpu.vector_store %arg7[%c1_54, %c0_55, %c0_56], %78 {strides = array<i32>} : memref<4x4x1xf32, #tpu.memory_space<vmem>>, vector<1x4x1xf32>,
    %c0_57 = arith.constant 0 : index
    %c0_58 = arith.constant 0 : index
    %c32 = arith.constant 32 : index
    %79 = vector.load %arg3[%c0_57, %c0_58, %c32] : memref<1x4x64xbf16, #tpu.memory_space<vmem>>, vector<1x4x16xbf16>
    %80 = vector.shape_cast %79 : vector<1x4x16xbf16> to vector<4x16xbf16>
    %cst_59 = arith.constant 2.500000e-01 : bf16
    %81 = vector.broadcast %cst_59 : bf16 to vector<4x16xbf16>
    %82 = arith.mulf %80, %81 : vector<4x16xbf16>
    %c0_60 = arith.constant 0 : index
    %c0_61 = arith.constant 0 : index
    %c32_62 = arith.constant 32 : index
    %83 = vector.load %arg4[%c0_60, %c0_61, %c32_62] : memref<1x4x64xbf16, #tpu.memory_space<vmem>>, vector<1x4x16xbf16>
    %84 = vector.shape_cast %83 : vector<1x4x16xbf16> to vector<4x16xbf16>
    %c0_63 = arith.constant 0 : index
    %c0_64 = arith.constant 0 : index
    %c32_65 = arith.constant 32 : index
    %85 = vector.load %arg5[%c0_63, %c0_64, %c32_65] : memref<1x4x64xbf16, #tpu.memory_space<vmem>>, vector<1x4x16xbf16>
    %86 = vector.shape_cast %85 : vector<1x4x16xbf16> to vector<4x16xbf16>
    %cst_66 = arith.constant dense<0.000000e+00> : vector<4x4xf32>
    %87 = tpu.matmul %82, %84, %cst_66 {dimension_numbers = #tpu.dot_dimension_numbers<[1], [1], [0], [0], [0, 0, 1, 0], [], []>} : vector<4x16xbf16>, vector<4x16xbf16>, vector<4x4xf32> -> vector<4x4xf32>
    %c2 = arith.constant 2 : index
    %c0_67 = arith.constant 0 : index
    %c0_68 = arith.constant 0 : index
    %88 = vector.load %arg7[%c2, %c0_67, %c0_68] : memref<4x4x1xf32, #tpu.memory_space<vmem>>, vector<1x4x1xf32>
    %89 = vector.shape_cast %88 : vector<1x4x1xf32> to vector<4x1xf32>
    %cst_69 = arith.constant dense<0xFF800000> : vector<4xf32>
    %90 = vector.multi_reduction <maximumf>, %87, %cst_69 [1] : vector<4x4xf32> to vector<4xf32>
    %91 = vector.shape_cast %90 : vector<4xf32> to vector<4x1xf32>
    %92 = arith.maximumf %89, %91 : vector<4x1xf32>
    %93 = arith.subf %89, %92 : vector<4x1xf32>
    %94 = math.exp %93 : vector<4x1xf32>
    %95 = vector.broadcast %92 : vector<4x1xf32> to vector<4x4xf32>
    %96 = arith.subf %87, %95 : vector<4x4xf32>
    %97 = math.exp %96 : vector<4x4xf32>
    %c2_70 = arith.constant 2 : index
    %c0_71 = arith.constant 0 : index
    %c0_72 = arith.constant 0 : index
    %98 = vector.load %arg8[%c2_70, %c0_71, %c0_72] : memref<4x4x1xf32, #tpu.memory_space<vmem>>, vector<1x4x1xf32>
    %99 = vector.shape_cast %98 : vector<1x4x1xf32> to vector<4x1xf32>
    %100 = arith.mulf %94, %99 : vector<4x1xf32>
    %cst_73 = arith.constant dense<0.000000e+00> : vector<4xf32>
    %101 = vector.multi_reduction <add>, %97, %cst_73 [1] : vector<4x4xf32> to vector<4xf32>
    %102 = vector.shape_cast %101 : vector<4xf32> to vector<4x1xf32>
    %103 = arith.addf %100, %102 : vector<4x1xf32>
    %c2_74 = arith.constant 2 : index
    %c0_75 = arith.constant 0 : index
    %c0_76 = arith.constant 0 : index
    %104 = vector.load %arg8[%c2_74, %c0_75, %c0_76] : memref<4x4x1xf32, #tpu.memory_space<vmem>>, vector<1x4x1xf32>
    %105 = vector.shape_cast %104 : vector<1x4x1xf32> to vector<4x1xf32>
    %106 = vector.shape_cast %103 : vector<4x1xf32> to vector<1x4x1xf32>
    tpu.vector_store %arg8[%c2_74, %c0_75, %c0_76], %106 {strides = array<i32>} : memref<4x4x1xf32, #tpu.memory_space<vmem>>, vector<1x4x1xf32>,
    %c0_77 = arith.constant 0 : index
    %c32_78 = arith.constant 32 : index
    %107 = vector.load %arg9[%c0_77, %c32_78] : memref<4x64xf32, #tpu.memory_space<vmem>>, vector<4x16xf32>
    %108 = vector.broadcast %94 : vector<4x1xf32> to vector<4x16xf32>
    %109 = arith.mulf %108, %107 : vector<4x16xf32>
    %110 = arith.truncf %97 : vector<4x4xf32> to vector<4x4xbf16>
    %cst_79 = arith.constant dense<0.000000e+00> : vector<4x16xf32>
    %111 = tpu.matmul %110, %86, %cst_79 {dimension_numbers = #tpu.dot_dimension_numbers<[1], [0], [0], [1], [0, 0, 1, 1], [], []>} : vector<4x4xbf16>, vector<4x16xbf16>, vector<4x16xf32> -> vector<4x16xf32>
    %112 = arith.addf %109, %111 : vector<4x16xf32>
    %c0_80 = arith.constant 0 : index
    %c32_81 = arith.constant 32 : index
    %113 = vector.load %arg9[%c0_80, %c32_81] : memref<4x64xf32, #tpu.memory_space<vmem>>, vector<4x16xf32>
    tpu.vector_store %arg9[%c0_80, %c32_81], %112 {strides = array<i32>} : memref<4x64xf32, #tpu.memory_space<vmem>>, vector<4x16xf32>,
    %c2_82 = arith.constant 2 : index
    %c0_83 = arith.constant 0 : index
    %c0_84 = arith.constant 0 : index
    %114 = vector.load %arg7[%c2_82, %c0_83, %c0_84] : memref<4x4x1xf32, #tpu.memory_space<vmem>>, vector<1x4x1xf32>
    %115 = vector.shape_cast %114 : vector<1x4x1xf32> to vector<4x1xf32>
    %116 = vector.shape_cast %92 : vector<4x1xf32> to vector<1x4x1xf32>
    tpu.vector_store %arg7[%c2_82, %c0_83, %c0_84], %116 {strides = array<i32>} : memref<4x4x1xf32, #tpu.memory_space<vmem>>, vector<1x4x1xf32>,
    %c0_85 = arith.constant 0 : index
    %c0_86 = arith.constant 0 : index
    %c48 = arith.constant 48 : index
    %117 = vector.load %arg3[%c0_85, %c0_86, %c48] : memref<1x4x64xbf16, #tpu.memory_space<vmem>>, vector<1x4x16xbf16>
    %118 = vector.shape_cast %117 : vector<1x4x16xbf16> to vector<4x16xbf16>
    %cst_87 = arith.constant 2.500000e-01 : bf16
    %119 = vector.broadcast %cst_87 : bf16 to vector<4x16xbf16>
    %120 = arith.mulf %118, %119 : vector<4x16xbf16>
    %c0_88 = arith.constant 0 : index
    %c0_89 = arith.constant 0 : index
    %c48_90 = arith.constant 48 : index
    %121 = vector.load %arg4[%c0_88, %c0_89, %c48_90] : memref<1x4x64xbf16, #tpu.memory_space<vmem>>, vector<1x4x16xbf16>
    %122 = vector.shape_cast %121 : vector<1x4x16xbf16> to vector<4x16xbf16>
    %c0_91 = arith.constant 0 : index
    %c0_92 = arith.constant 0 : index
    %c48_93 = arith.constant 48 : index
    %123 = vector.load %arg5[%c0_91, %c0_92, %c48_93] : memref<1x4x64xbf16, #tpu.memory_space<vmem>>, vector<1x4x16xbf16>
    %124 = vector.shape_cast %123 : vector<1x4x16xbf16> to vector<4x16xbf16>
    %cst_94 = arith.constant dense<0.000000e+00> : vector<4x4xf32>
    %125 = tpu.matmul %120, %122, %cst_94 {dimension_numbers = #tpu.dot_dimension_numbers<[1], [1], [0], [0], [0, 0, 1, 0], [], []>} : vector<4x16xbf16>, vector<4x16xbf16>, vector<4x4xf32> -> vector<4x4xf32>
    %c3 = arith.constant 3 : index
    %c0_95 = arith.constant 0 : index
    %c0_96 = arith.constant 0 : index
    %126 = vector.load %arg7[%c3, %c0_95, %c0_96] : memref<4x4x1xf32, #tpu.memory_space<vmem>>, vector<1x4x1xf32>
    %127 = vector.shape_cast %126 : vector<1x4x1xf32> to vector<4x1xf32>
    %cst_97 = arith.constant dense<0xFF800000> : vector<4xf32>
    %128 = vector.multi_reduction <maximumf>, %125, %cst_97 [1] : vector<4x4xf32> to vector<4xf32>
    %129 = vector.shape_cast %128 : vector<4xf32> to vector<4x1xf32>
    %130 = arith.maximumf %127, %129 : vector<4x1xf32>
    %131 = arith.subf %127, %130 : vector<4x1xf32>
    %132 = math.exp %131 : vector<4x1xf32>
    %133 = vector.broadcast %130 : vector<4x1xf32> to vector<4x4xf32>
    %134 = arith.subf %125, %133 : vector<4x4xf32>
    %135 = math.exp %134 : vector<4x4xf32>
    %c3_98 = arith.constant 3 : index
    %c0_99 = arith.constant 0 : index
    %c0_100 = arith.constant 0 : index
    %136 = vector.load %arg8[%c3_98, %c0_99, %c0_100] : memref<4x4x1xf32, #tpu.memory_space<vmem>>, vector<1x4x1xf32>
    %137 = vector.shape_cast %136 : vector<1x4x1xf32> to vector<4x1xf32>
    %138 = arith.mulf %132, %137 : vector<4x1xf32>
    %cst_101 = arith.constant dense<0.000000e+00> : vector<4xf32>
    %139 = vector.multi_reduction <add>, %135, %cst_101 [1] : vector<4x4xf32> to vector<4xf32>
    %140 = vector.shape_cast %139 : vector<4xf32> to vector<4x1xf32>
    %141 = arith.addf %138, %140 : vector<4x1xf32>
    %c3_102 = arith.constant 3 : index
    %c0_103 = arith.constant 0 : index
    %c0_104 = arith.constant 0 : index
    %142 = vector.load %arg8[%c3_102, %c0_103, %c0_104] : memref<4x4x1xf32, #tpu.memory_space<vmem>>, vector<1x4x1xf32>
    %143 = vector.shape_cast %142 : vector<1x4x1xf32> to vector<4x1xf32>
    %144 = vector.shape_cast %141 : vector<4x1xf32> to vector<1x4x1xf32>
    tpu.vector_store %arg8[%c3_102, %c0_103, %c0_104], %144 {strides = array<i32>} : memref<4x4x1xf32, #tpu.memory_space<vmem>>, vector<1x4x1xf32>,
    %c0_105 = arith.constant 0 : index
    %c48_106 = arith.constant 48 : index
    %145 = vector.load %arg9[%c0_105, %c48_106] : memref<4x64xf32, #tpu.memory_space<vmem>>, vector<4x16xf32>
    %146 = vector.broadcast %132 : vector<4x1xf32> to vector<4x16xf32>
    %147 = arith.mulf %146, %145 : vector<4x16xf32>
    %148 = arith.truncf %135 : vector<4x4xf32> to vector<4x4xbf16>
    %cst_107 = arith.constant dense<0.000000e+00> : vector<4x16xf32>
    %149 = tpu.matmul %148, %124, %cst_107 {dimension_numbers = #tpu.dot_dimension_numbers<[1], [0], [0], [1], [0, 0, 1, 1], [], []>} : vector<4x4xbf16>, vector<4x16xbf16>, vector<4x16xf32> -> vector<4x16xf32>
    %150 = arith.addf %147, %149 : vector<4x16xf32>
    %c0_108 = arith.constant 0 : index
    %c48_109 = arith.constant 48 : index
    %151 = vector.load %arg9[%c0_108, %c48_109] : memref<4x64xf32, #tpu.memory_space<vmem>>, vector<4x16xf32>
    tpu.vector_store %arg9[%c0_108, %c48_109], %150 {strides = array<i32>} : memref<4x64xf32, #tpu.memory_space<vmem>>, vector<4x16xf32>,
    %c3_110 = arith.constant 3 : index
    %c0_111 = arith.constant 0 : index
    %c0_112 = arith.constant 0 : index
    %152 = vector.load %arg7[%c3_110, %c0_111, %c0_112] : memref<4x4x1xf32, #tpu.memory_space<vmem>>, vector<1x4x1xf32>
    %153 = vector.shape_cast %152 : vector<1x4x1xf32> to vector<4x1xf32>
    %154 = vector.shape_cast %130 : vector<4x1xf32> to vector<1x4x1xf32>
    tpu.vector_store %arg7[%c3_110, %c0_111, %c0_112], %154 {strides = array<i32>} : memref<4x4x1xf32, #tpu.memory_space<vmem>>, vector<1x4x1xf32>,
    %c0_i32_113 = arith.constant 0 : i32
    %155 = arith.cmpi eq, %arg2, %c0_i32_113 : i32
    %156 = arith.extui %155 : i1 to i32
    %c0_i32_114 = arith.constant 0 : i32
    %157 = arith.cmpi ne, %156, %c0_i32_114 : i32
    scf.if %157 {
      %c0_115 = arith.constant 0 : index
      %c0_116 = arith.constant 0 : index
      %c0_117 = arith.constant 0 : index
      %158 = vector.load %arg8[%c0_115, %c0_116, %c0_117] : memref<4x4x1xf32, #tpu.memory_space<vmem>>, vector<1x4x1xf32>
      %159 = vector.shape_cast %158 : vector<1x4x1xf32> to vector<4x1xf32>
      %160 = tpu.reciprocal %159 {approx = true} : vector<4x1xf32> -> vector<4x1xf32>
      %c0_118 = arith.constant 0 : index
      %c0_119 = arith.constant 0 : index
      %161 = vector.load %arg9[%c0_118, %c0_119] : memref<4x64xf32, #tpu.memory_space<vmem>>, vector<4x16xf32>
      %162 = vector.broadcast %160 : vector<4x1xf32> to vector<4x16xf32>
      %163 = arith.mulf %161, %162 : vector<4x16xf32>
      %164 = arith.truncf %163 : vector<4x16xf32> to vector<4x16xbf16>
      %c0_120 = arith.constant 0 : index
      %c0_121 = arith.constant 0 : index
      %c0_122 = arith.constant 0 : index
      %165 = vector.load %arg6[%c0_120, %c0_121, %c0_122] : memref<1x4x64xbf16, #tpu.memory_space<vmem>>, vector<1x4x16xbf16>
      %166 = vector.shape_cast %165 : vector<1x4x16xbf16> to vector<4x16xbf16>
      %167 = vector.shape_cast %164 : vector<4x16xbf16> to vector<1x4x16xbf16>
      tpu.vector_store %arg6[%c0_120, %c0_121, %c0_122], %167 {strides = array<i32>} : memref<1x4x64xbf16, #tpu.memory_space<vmem>>, vector<1x4x16xbf16>,
      %c1_123 = arith.constant 1 : index
      %c0_124 = arith.constant 0 : index
      %c0_125 = arith.constant 0 : index
      %168 = vector.load %arg8[%c1_123, %c0_124, %c0_125] : memref<4x4x1xf32, #tpu.memory_space<vmem>>, vector<1x4x1xf32>
      %169 = vector.shape_cast %168 : vector<1x4x1xf32> to vector<4x1xf32>
      %170 = tpu.reciprocal %169 {approx = true} : vector<4x1xf32> -> vector<4x1xf32>
      %c0_126 = arith.constant 0 : index
      %c16_127 = arith.constant 16 : index
      %171 = vector.load %arg9[%c0_126, %c16_127] : memref<4x64xf32, #tpu.memory_space<vmem>>, vector<4x16xf32>
      %172 = vector.broadcast %170 : vector<4x1xf32> to vector<4x16xf32>
      %173 = arith.mulf %171, %172 : vector<4x16xf32>
      %174 = arith.truncf %173 : vector<4x16xf32> to vector<4x16xbf16>
      %c0_128 = arith.constant 0 : index
      %c0_129 = arith.constant 0 : index
      %c16_130 = arith.constant 16 : index
      %175 = vector.load %arg6[%c0_128, %c0_129, %c16_130] : memref<1x4x64xbf16, #tpu.memory_space<vmem>>, vector<1x4x16xbf16>
      %176 = vector.shape_cast %175 : vector<1x4x16xbf16> to vector<4x16xbf16>
      %177 = vector.shape_cast %174 : vector<4x16xbf16> to vector<1x4x16xbf16>
      tpu.vector_store %arg6[%c0_128, %c0_129, %c16_130], %177 {strides = array<i32>} : memref<1x4x64xbf16, #tpu.memory_space<vmem>>, vector<1x4x16xbf16>,
      %c2_131 = arith.constant 2 : index
      %c0_132 = arith.constant 0 : index
      %c0_133 = arith.constant 0 : index
      %178 = vector.load %arg8[%c2_131, %c0_132, %c0_133] : memref<4x4x1xf32, #tpu.memory_space<vmem>>, vector<1x4x1xf32>
      %179 = vector.shape_cast %178 : vector<1x4x1xf32> to vector<4x1xf32>
      %180 = tpu.reciprocal %179 {approx = true} : vector<4x1xf32> -> vector<4x1xf32>
      %c0_134 = arith.constant 0 : index
      %c32_135 = arith.constant 32 : index
      %181 = vector.load %arg9[%c0_134, %c32_135] : memref<4x64xf32, #tpu.memory_space<vmem>>, vector<4x16xf32>
      %182 = vector.broadcast %180 : vector<4x1xf32> to vector<4x16xf32>
      %183 = arith.mulf %181, %182 : vector<4x16xf32>
      %184 = arith.truncf %183 : vector<4x16xf32> to vector<4x16xbf16>
      %c0_136 = arith.constant 0 : index
      %c0_137 = arith.constant 0 : index
      %c32_138 = arith.constant 32 : index
      %185 = vector.load %arg6[%c0_136, %c0_137, %c32_138] : memref<1x4x64xbf16, #tpu.memory_space<vmem>>, vector<1x4x16xbf16>
      %186 = vector.shape_cast %185 : vector<1x4x16xbf16> to vector<4x16xbf16>
      %187 = vector.shape_cast %184 : vector<4x16xbf16> to vector<1x4x16xbf16>
      tpu.vector_store %arg6[%c0_136, %c0_137, %c32_138], %187 {strides = array<i32>} : memref<1x4x64xbf16, #tpu.memory_space<vmem>>, vector<1x4x16xbf16>,
      %c3_139 = arith.constant 3 : index
      %c0_140 = arith.constant 0 : index
      %c0_141 = arith.constant 0 : index
      %188 = vector.load %arg8[%c3_139, %c0_140, %c0_141] : memref<4x4x1xf32, #tpu.memory_space<vmem>>, vector<1x4x1xf32>
      %189 = vector.shape_cast %188 : vector<1x4x1xf32> to vector<4x1xf32>
      %190 = tpu.reciprocal %189 {approx = true} : vector<4x1xf32> -> vector<4x1xf32>
      %c0_142 = arith.constant 0 : index
      %c48_143 = arith.constant 48 : index
      %191 = vector.load %arg9[%c0_142, %c48_143] : memref<4x64xf32, #tpu.memory_space<vmem>>, vector<4x16xf32>
      %192 = vector.broadcast %190 : vector<4x1xf32> to vector<4x16xf32>
      %193 = arith.mulf %191, %192 : vector<4x16xf32>
      %194 = arith.truncf %193 : vector<4x16xf32> to vector<4x16xbf16>
      %c0_144 = arith.constant 0 : index
      %c0_145 = arith.constant 0 : index
      %c48_146 = arith.constant 48 : index
      %195 = vector.load %arg6[%c0_144, %c0_145, %c48_146] : memref<1x4x64xbf16, #tpu.memory_space<vmem>>, vector<1x4x16xbf16>
      %196 = vector.shape_cast %195 : vector<1x4x16xbf16> to vector<4x16xbf16>
      %197 = vector.shape_cast %194 : vector<4x16xbf16> to vector<1x4x16xbf16>
      tpu.vector_store %arg6[%c0_144, %c0_145, %c48_146], %197 {strides = array<i32>} : memref<1x4x64xbf16, #tpu.memory_space<vmem>>, vector<1x4x16xbf16>,
    } else {
    }
    return
  }
  func.func @transform_0(%arg0: i32, %arg1: i32, %arg2: i32) -> (i32, i32, i32) {
    %c0_i32 = arith.constant 0 : i32
    %c0_i32_0 = arith.constant 0 : i32
    return %arg0, %arg1, %c0_i32 : i32, i32, i32
  }
  func.func @transform_1(%arg0: i32, %arg1: i32, %arg2: i32) -> (i32, i32, i32) {
    %c0_i32 = arith.constant 0 : i32
    %c0_i32_0 = arith.constant 0 : i32
    return %arg0, %arg2, %c0_i32 : i32, i32, i32
  }
  func.func @transform_2(%arg0: i32, %arg1: i32, %arg2: i32) -> (i32, i32, i32) {
    %c0_i32 = arith.constant 0 : i32
    %c0_i32_0 = arith.constant 0 : i32
    return %arg0, %arg2, %c0_i32 : i32, i32, i32
  }
  func.func @transform_3(%arg0: i32, %arg1: i32, %arg2: i32) -> (i32, i32, i32) {
    %c0_i32 = arith.constant 0 : i32
    %c0_i32_0 = arith.constant 0 : i32
    return %arg0, %arg1, %c0_i32 : i32, i32, i32
  }
}

module attributes {stable_mosaic.version = 11 : i64} {
  func.func @_matmul_bias_kernel(%arg0: i32, %arg1: i32, %arg2: i32, %arg3: memref<8x64xbf16, #tpu.memory_space<vmem>>, %arg4: memref<64x64xbf16, #tpu.memory_space<vmem>>, %arg5: memref<1x64xf32, #tpu.memory_space<vmem>>, %arg6: memref<8x64xbf16, #tpu.memory_space<vmem>>, %arg7: memref<8x64xbf16, #tpu.memory_space<vmem>>, %arg8: memref<8x64xf32, #tpu.memory_space<vmem>>) attributes {dimension_semantics = [#tpu.dimension_semantics<parallel>, #tpu.dimension_semantics<parallel>, #tpu.dimension_semantics<arbitrary>], iteration_bounds = array<i64: 1, 1, 1>, scalar_prefetch = 0 : i64, scratch_operands = 1 : i64, tpu.core_type = #tpu.core_type<tc>, window_params = [{transform_indices = @transform_0, window_bounds = array<i64: 8, 64>}, {transform_indices = @transform_1, window_bounds = array<i64: 64, 64>}, {transform_indices = @transform_2, window_bounds = array<i64: 1, 64>}, {transform_indices = @transform_3, window_bounds = array<i64: 8, 64>}, {transform_indices = @transform_4, window_bounds = array<i64: 8, 64>}]} {
    %c0_i32 = arith.constant 0 : i32
    %0 = arith.cmpi eq, %arg2, %c0_i32 : i32
    %1 = arith.extui %0 : i1 to i32
    %c0_i32_0 = arith.constant 0 : i32
    %2 = arith.cmpi ne, %1, %c0_i32_0 : i32
    scf.if %2 {
      %cst_10 = arith.constant 0.000000e+00 : f32
      %12 = vector.broadcast %cst_10 : f32 to vector<8x64xf32>
      %c0_11 = arith.constant 0 : index
      %c0_12 = arith.constant 0 : index
      %13 = vector.load %arg8[%c0_11, %c0_12] : memref<8x64xf32, #tpu.memory_space<vmem>>, vector<8x64xf32>
      tpu.vector_store %arg8[%c0_11, %c0_12], %12 {strides = array<i32>} : memref<8x64xf32, #tpu.memory_space<vmem>>, vector<8x64xf32>,
    } else {
    }
    %c0 = arith.constant 0 : index
    %c0_1 = arith.constant 0 : index
    %3 = vector.load %arg8[%c0, %c0_1] : memref<8x64xf32, #tpu.memory_space<vmem>>, vector<8x64xf32>
    %c0_2 = arith.constant 0 : index
    %c0_3 = arith.constant 0 : index
    %4 = vector.load %arg3[%c0_2, %c0_3] : memref<8x64xbf16, #tpu.memory_space<vmem>>, vector<8x64xbf16>
    %c0_4 = arith.constant 0 : index
    %c0_5 = arith.constant 0 : index
    %5 = vector.load %arg4[%c0_4, %c0_5] : memref<64x64xbf16, #tpu.memory_space<vmem>>, vector<64x64xbf16>
    %cst = arith.constant dense<0.000000e+00> : vector<8x64xf32>
    %6 = tpu.matmul %4, %5, %cst {dimension_numbers = #tpu.dot_dimension_numbers<[1], [0], [0], [1], [0, 0, 1, 1], [], []>} : vector<8x64xbf16>, vector<64x64xbf16>, vector<8x64xf32> -> vector<8x64xf32>
    %7 = arith.addf %3, %6 : vector<8x64xf32>
    %c0_6 = arith.constant 0 : index
    %c0_7 = arith.constant 0 : index
    %8 = vector.load %arg8[%c0_6, %c0_7] : memref<8x64xf32, #tpu.memory_space<vmem>>, vector<8x64xf32>
    tpu.vector_store %arg8[%c0_6, %c0_7], %7 {strides = array<i32>} : memref<8x64xf32, #tpu.memory_space<vmem>>, vector<8x64xf32>,
    %c0_i32_8 = arith.constant 0 : i32
    %9 = arith.cmpi eq, %arg2, %c0_i32_8 : i32
    %10 = arith.extui %9 : i1 to i32
    %c0_i32_9 = arith.constant 0 : i32
    %11 = arith.cmpi ne, %10, %c0_i32_9 : i32
    scf.if %11 {
      %c0_10 = arith.constant 0 : index
      %c0_11 = arith.constant 0 : index
      %12 = vector.load %arg8[%c0_10, %c0_11] : memref<8x64xf32, #tpu.memory_space<vmem>>, vector<8x64xf32>
      %c0_12 = arith.constant 0 : index
      %c0_13 = arith.constant 0 : index
      %13 = vector.load %arg5[%c0_12, %c0_13] : memref<1x64xf32, #tpu.memory_space<vmem>>, vector<1x64xf32>
      %14 = vector.broadcast %13 : vector<1x64xf32> to vector<8x64xf32>
      %15 = arith.addf %12, %14 : vector<8x64xf32>
      %c0_14 = arith.constant 0 : index
      %c0_15 = arith.constant 0 : index
      %16 = vector.load %arg6[%c0_14, %c0_15] : memref<8x64xbf16, #tpu.memory_space<vmem>>, vector<8x64xbf16>
      %17 = arith.extf %16 : vector<8x64xbf16> to vector<8x64xf32>
      %18 = arith.addf %15, %17 : vector<8x64xf32>
      %19 = arith.truncf %18 : vector<8x64xf32> to vector<8x64xbf16>
      %c0_16 = arith.constant 0 : index
      %c0_17 = arith.constant 0 : index
      %20 = vector.load %arg7[%c0_16, %c0_17] : memref<8x64xbf16, #tpu.memory_space<vmem>>, vector<8x64xbf16>
      tpu.vector_store %arg7[%c0_16, %c0_17], %19 {strides = array<i32>} : memref<8x64xbf16, #tpu.memory_space<vmem>>, vector<8x64xbf16>,
    } else {
    }
    return
  }
  func.func @transform_0(%arg0: i32, %arg1: i32, %arg2: i32) -> (i32, i32) {
    %c0_i32 = arith.constant 0 : i32
    return %arg0, %arg2 : i32, i32
  }
  func.func @transform_1(%arg0: i32, %arg1: i32, %arg2: i32) -> (i32, i32) {
    %c0_i32 = arith.constant 0 : i32
    return %arg2, %arg1 : i32, i32
  }
  func.func @transform_2(%arg0: i32, %arg1: i32, %arg2: i32) -> (i32, i32) {
    %c0_i32 = arith.constant 0 : i32
    %c0_i32_0 = arith.constant 0 : i32
    return %c0_i32, %arg1 : i32, i32
  }
  func.func @transform_3(%arg0: i32, %arg1: i32, %arg2: i32) -> (i32, i32) {
    %c0_i32 = arith.constant 0 : i32
    return %arg0, %arg1 : i32, i32
  }
  func.func @transform_4(%arg0: i32, %arg1: i32, %arg2: i32) -> (i32, i32) {
    %c0_i32 = arith.constant 0 : i32
    return %arg0, %arg1 : i32, i32
  }
}

module attributes {stable_mosaic.version = 11 : i64} {
  func.func @_ln_matmul_bias_kernel(%arg0: i32, %arg1: memref<8x64xbf16, #tpu.memory_space<vmem>>, %arg2: memref<1x64xf32, #tpu.memory_space<vmem>>, %arg3: memref<1x64xf32, #tpu.memory_space<vmem>>, %arg4: memref<64x128xbf16, #tpu.memory_space<vmem>>, %arg5: memref<1x128xf32, #tpu.memory_space<vmem>>, %arg6: memref<8x128xbf16, #tpu.memory_space<vmem>>) attributes {dimension_semantics = [#tpu.dimension_semantics<parallel>], iteration_bounds = array<i64: 1>, scalar_prefetch = 0 : i64, scratch_operands = 0 : i64, tpu.core_type = #tpu.core_type<tc>, window_params = [{transform_indices = @transform_0, window_bounds = array<i64: 8, 64>}, {pipeline_mode = #tpu.pipeline_mode<synchronous>, transform_indices = @transform_1, window_bounds = array<i64: 1, 64>}, {pipeline_mode = #tpu.pipeline_mode<synchronous>, transform_indices = @transform_2, window_bounds = array<i64: 1, 64>}, {pipeline_mode = #tpu.pipeline_mode<synchronous>, transform_indices = @transform_3, window_bounds = array<i64: 64, 128>}, {pipeline_mode = #tpu.pipeline_mode<synchronous>, transform_indices = @transform_4, window_bounds = array<i64: 1, 128>}, {transform_indices = @transform_5, window_bounds = array<i64: 8, 128>}]} {
    %c0 = arith.constant 0 : index
    %c0_0 = arith.constant 0 : index
    %0 = vector.load %arg1[%c0, %c0_0] : memref<8x64xbf16, #tpu.memory_space<vmem>>, vector<8x64xbf16>
    %1 = arith.extf %0 : vector<8x64xbf16> to vector<8x64xf32>
    %cst = arith.constant dense<0.000000e+00> : vector<8xf32>
    %2 = vector.multi_reduction <add>, %1, %cst [1] : vector<8x64xf32> to vector<8xf32>
    %3 = vector.shape_cast %2 : vector<8xf32> to vector<8x1xf32>
    %cst_1 = arith.constant 6.400000e+01 : f32
    %4 = vector.broadcast %cst_1 : f32 to vector<8x1xf32>
    %5 = arith.divf %3, %4 : vector<8x1xf32>
    %6 = vector.broadcast %5 : vector<8x1xf32> to vector<8x64xf32>
    %7 = arith.subf %1, %6 : vector<8x64xf32>
    %8 = arith.mulf %7, %7 : vector<8x64xf32>
    %cst_2 = arith.constant dense<0.000000e+00> : vector<8xf32>
    %9 = vector.multi_reduction <add>, %8, %cst_2 [1] : vector<8x64xf32> to vector<8xf32>
    %10 = vector.shape_cast %9 : vector<8xf32> to vector<8x1xf32>
    %cst_3 = arith.constant 6.400000e+01 : f32
    %11 = vector.broadcast %cst_3 : f32 to vector<8x1xf32>
    %12 = arith.divf %10, %11 : vector<8x1xf32>
    %cst_4 = arith.constant 9.99999974E-6 : f32
    %13 = vector.broadcast %cst_4 : f32 to vector<8x1xf32>
    %14 = arith.addf %12, %13 : vector<8x1xf32>
    %15 = math.rsqrt %14 : vector<8x1xf32>
    %16 = vector.broadcast %15 : vector<8x1xf32> to vector<8x64xf32>
    %17 = arith.mulf %7, %16 : vector<8x64xf32>
    %c0_5 = arith.constant 0 : index
    %c0_6 = arith.constant 0 : index
    %18 = vector.load %arg2[%c0_5, %c0_6] : memref<1x64xf32, #tpu.memory_space<vmem>>, vector<1x64xf32>
    %19 = vector.broadcast %18 : vector<1x64xf32> to vector<8x64xf32>
    %20 = arith.mulf %17, %19 : vector<8x64xf32>
    %c0_7 = arith.constant 0 : index
    %c0_8 = arith.constant 0 : index
    %21 = vector.load %arg3[%c0_7, %c0_8] : memref<1x64xf32, #tpu.memory_space<vmem>>, vector<1x64xf32>
    %22 = vector.broadcast %21 : vector<1x64xf32> to vector<8x64xf32>
    %23 = arith.addf %20, %22 : vector<8x64xf32>
    %24 = arith.truncf %23 : vector<8x64xf32> to vector<8x64xbf16>
    %c0_9 = arith.constant 0 : index
    %c0_10 = arith.constant 0 : index
    %25 = vector.load %arg4[%c0_9, %c0_10] : memref<64x128xbf16, #tpu.memory_space<vmem>>, vector<64x128xbf16>
    %cst_11 = arith.constant dense<0.000000e+00> : vector<8x128xf32>
    %26 = tpu.matmul %24, %25, %cst_11 {dimension_numbers = #tpu.dot_dimension_numbers<[1], [0], [0], [1], [0, 0, 1, 1], [], []>} : vector<8x64xbf16>, vector<64x128xbf16>, vector<8x128xf32> -> vector<8x128xf32>
    %c0_12 = arith.constant 0 : index
    %c0_13 = arith.constant 0 : index
    %27 = vector.load %arg5[%c0_12, %c0_13] : memref<1x128xf32, #tpu.memory_space<vmem>>, vector<1x128xf32>
    %28 = vector.broadcast %27 : vector<1x128xf32> to vector<8x128xf32>
    %29 = arith.addf %26, %28 : vector<8x128xf32>
    %30 = arith.mulf %29, %29 : vector<8x128xf32>
    %31 = arith.mulf %29, %30 : vector<8x128xf32>
    %cst_14 = arith.constant 4.471500e-02 : f32
    %32 = vector.broadcast %cst_14 : f32 to vector<8x128xf32>
    %33 = arith.mulf %32, %31 : vector<8x128xf32>
    %34 = arith.addf %29, %33 : vector<8x128xf32>
    %cst_15 = arith.constant 0.797884583 : f32
    %35 = vector.broadcast %cst_15 : f32 to vector<8x128xf32>
    %36 = arith.mulf %35, %34 : vector<8x128xf32>
    %37 = math.tanh %36 : vector<8x128xf32>
    %cst_16 = arith.constant 1.000000e+00 : f32
    %38 = vector.broadcast %cst_16 : f32 to vector<8x128xf32>
    %39 = arith.addf %38, %37 : vector<8x128xf32>
    %cst_17 = arith.constant 5.000000e-01 : f32
    %40 = vector.broadcast %cst_17 : f32 to vector<8x128xf32>
    %41 = arith.mulf %40, %39 : vector<8x128xf32>
    %42 = arith.mulf %29, %41 : vector<8x128xf32>
    %43 = arith.truncf %42 : vector<8x128xf32> to vector<8x128xbf16>
    %c0_18 = arith.constant 0 : index
    %c0_19 = arith.constant 0 : index
    %44 = vector.load %arg6[%c0_18, %c0_19] : memref<8x128xbf16, #tpu.memory_space<vmem>>, vector<8x128xbf16>
    tpu.vector_store %arg6[%c0_18, %c0_19], %43 {strides = array<i32>} : memref<8x128xbf16, #tpu.memory_space<vmem>>, vector<8x128xbf16>,
    return
  }
  func.func @transform_0(%arg0: i32) -> (i32, i32) {
    %c0_i32 = arith.constant 0 : i32
    %c0_i32_0 = arith.constant 0 : i32
    return %arg0, %c0_i32 : i32, i32
  }
  func.func @transform_1(%arg0: i32) -> (i32, i32) {
    %c0_i32 = arith.constant 0 : i32
    %c0_i32_0 = arith.constant 0 : i32
    %c0_i32_1 = arith.constant 0 : i32
    return %c0_i32, %c0_i32_0 : i32, i32
  }
  func.func @transform_2(%arg0: i32) -> (i32, i32) {
    %c0_i32 = arith.constant 0 : i32
    %c0_i32_0 = arith.constant 0 : i32
    %c0_i32_1 = arith.constant 0 : i32
    return %c0_i32, %c0_i32_0 : i32, i32
  }
  func.func @transform_3(%arg0: i32) -> (i32, i32) {
    %c0_i32 = arith.constant 0 : i32
    %c0_i32_0 = arith.constant 0 : i32
    %c0_i32_1 = arith.constant 0 : i32
    return %c0_i32, %c0_i32_0 : i32, i32
  }
  func.func @transform_4(%arg0: i32) -> (i32, i32) {
    %c0_i32 = arith.constant 0 : i32
    %c0_i32_0 = arith.constant 0 : i32
    %c0_i32_1 = arith.constant 0 : i32
    return %c0_i32, %c0_i32_0 : i32, i32
  }
  func.func @transform_5(%arg0: i32) -> (i32, i32) {
    %c0_i32 = arith.constant 0 : i32
    %c0_i32_0 = arith.constant 0 : i32
    return %arg0, %c0_i32 : i32, i32
  }
}

module attributes {stable_mosaic.version = 11 : i64} {
  func.func @_matmul_bias_kernel(%arg0: i32, %arg1: i32, %arg2: i32, %arg3: memref<8x128xbf16, #tpu.memory_space<vmem>>, %arg4: memref<128x64xbf16, #tpu.memory_space<vmem>>, %arg5: memref<1x64xf32, #tpu.memory_space<vmem>>, %arg6: memref<8x64xbf16, #tpu.memory_space<vmem>>, %arg7: memref<8x64xbf16, #tpu.memory_space<vmem>>, %arg8: memref<8x64xf32, #tpu.memory_space<vmem>>) attributes {dimension_semantics = [#tpu.dimension_semantics<parallel>, #tpu.dimension_semantics<parallel>, #tpu.dimension_semantics<arbitrary>], iteration_bounds = array<i64: 1, 1, 1>, scalar_prefetch = 0 : i64, scratch_operands = 1 : i64, tpu.core_type = #tpu.core_type<tc>, window_params = [{transform_indices = @transform_0, window_bounds = array<i64: 8, 128>}, {transform_indices = @transform_1, window_bounds = array<i64: 128, 64>}, {transform_indices = @transform_2, window_bounds = array<i64: 1, 64>}, {transform_indices = @transform_3, window_bounds = array<i64: 8, 64>}, {transform_indices = @transform_4, window_bounds = array<i64: 8, 64>}]} {
    %c0_i32 = arith.constant 0 : i32
    %0 = arith.cmpi eq, %arg2, %c0_i32 : i32
    %1 = arith.extui %0 : i1 to i32
    %c0_i32_0 = arith.constant 0 : i32
    %2 = arith.cmpi ne, %1, %c0_i32_0 : i32
    scf.if %2 {
      %cst_10 = arith.constant 0.000000e+00 : f32
      %12 = vector.broadcast %cst_10 : f32 to vector<8x64xf32>
      %c0_11 = arith.constant 0 : index
      %c0_12 = arith.constant 0 : index
      %13 = vector.load %arg8[%c0_11, %c0_12] : memref<8x64xf32, #tpu.memory_space<vmem>>, vector<8x64xf32>
      tpu.vector_store %arg8[%c0_11, %c0_12], %12 {strides = array<i32>} : memref<8x64xf32, #tpu.memory_space<vmem>>, vector<8x64xf32>,
    } else {
    }
    %c0 = arith.constant 0 : index
    %c0_1 = arith.constant 0 : index
    %3 = vector.load %arg8[%c0, %c0_1] : memref<8x64xf32, #tpu.memory_space<vmem>>, vector<8x64xf32>
    %c0_2 = arith.constant 0 : index
    %c0_3 = arith.constant 0 : index
    %4 = vector.load %arg3[%c0_2, %c0_3] : memref<8x128xbf16, #tpu.memory_space<vmem>>, vector<8x128xbf16>
    %c0_4 = arith.constant 0 : index
    %c0_5 = arith.constant 0 : index
    %5 = vector.load %arg4[%c0_4, %c0_5] : memref<128x64xbf16, #tpu.memory_space<vmem>>, vector<128x64xbf16>
    %cst = arith.constant dense<0.000000e+00> : vector<8x64xf32>
    %6 = tpu.matmul %4, %5, %cst {dimension_numbers = #tpu.dot_dimension_numbers<[1], [0], [0], [1], [0, 0, 1, 1], [], []>} : vector<8x128xbf16>, vector<128x64xbf16>, vector<8x64xf32> -> vector<8x64xf32>
    %7 = arith.addf %3, %6 : vector<8x64xf32>
    %c0_6 = arith.constant 0 : index
    %c0_7 = arith.constant 0 : index
    %8 = vector.load %arg8[%c0_6, %c0_7] : memref<8x64xf32, #tpu.memory_space<vmem>>, vector<8x64xf32>
    tpu.vector_store %arg8[%c0_6, %c0_7], %7 {strides = array<i32>} : memref<8x64xf32, #tpu.memory_space<vmem>>, vector<8x64xf32>,
    %c0_i32_8 = arith.constant 0 : i32
    %9 = arith.cmpi eq, %arg2, %c0_i32_8 : i32
    %10 = arith.extui %9 : i1 to i32
    %c0_i32_9 = arith.constant 0 : i32
    %11 = arith.cmpi ne, %10, %c0_i32_9 : i32
    scf.if %11 {
      %c0_10 = arith.constant 0 : index
      %c0_11 = arith.constant 0 : index
      %12 = vector.load %arg8[%c0_10, %c0_11] : memref<8x64xf32, #tpu.memory_space<vmem>>, vector<8x64xf32>
      %c0_12 = arith.constant 0 : index
      %c0_13 = arith.constant 0 : index
      %13 = vector.load %arg5[%c0_12, %c0_13] : memref<1x64xf32, #tpu.memory_space<vmem>>, vector<1x64xf32>
      %14 = vector.broadcast %13 : vector<1x64xf32> to vector<8x64xf32>
      %15 = arith.addf %12, %14 : vector<8x64xf32>
      %c0_14 = arith.constant 0 : index
      %c0_15 = arith.constant 0 : index
      %16 = vector.load %arg6[%c0_14, %c0_15] : memref<8x64xbf16, #tpu.memory_space<vmem>>, vector<8x64xbf16>
      %17 = arith.extf %16 : vector<8x64xbf16> to vector<8x64xf32>
      %18 = arith.addf %15, %17 : vector<8x64xf32>
      %19 = arith.truncf %18 : vector<8x64xf32> to vector<8x64xbf16>
      %c0_16 = arith.constant 0 : index
      %c0_17 = arith.constant 0 : index
      %20 = vector.load %arg7[%c0_16, %c0_17] : memref<8x64xbf16, #tpu.memory_space<vmem>>, vector<8x64xbf16>
      tpu.vector_store %arg7[%c0_16, %c0_17], %19 {strides = array<i32>} : memref<8x64xbf16, #tpu.memory_space<vmem>>, vector<8x64xbf16>,
    } else {
    }
    return
  }
  func.func @transform_0(%arg0: i32, %arg1: i32, %arg2: i32) -> (i32, i32) {
    %c0_i32 = arith.constant 0 : i32
    return %arg0, %arg2 : i32, i32
  }
  func.func @transform_1(%arg0: i32, %arg1: i32, %arg2: i32) -> (i32, i32) {
    %c0_i32 = arith.constant 0 : i32
    return %arg2, %arg1 : i32, i32
  }
  func.func @transform_2(%arg0: i32, %arg1: i32, %arg2: i32) -> (i32, i32) {
    %c0_i32 = arith.constant 0 : i32
    %c0_i32_0 = arith.constant 0 : i32
    return %c0_i32, %arg1 : i32, i32
  }
  func.func @transform_3(%arg0: i32, %arg1: i32, %arg2: i32) -> (i32, i32) {
    %c0_i32 = arith.constant 0 : i32
    return %arg0, %arg1 : i32, i32
  }
  func.func @transform_4(%arg0: i32, %arg1: i32, %arg2: i32) -> (i32, i32) {
    %c0_i32 = arith.constant 0 : i32
    return %arg0, %arg1 : i32, i32
  }
}

</mosaic_0001>

<llo_original>
// kernel: clap_audio_encoder_forward.12
$region0: #{clap_audio_encoder_forward.12}
  #allocation0 [shape = 'u32[]', space=smem, size = 0x4, offset = 0x4, fixed_abs, tag = 'smem constant byte address 0x4 - core index']
  #allocation1 [shape = 'u32[72,128]{1,0:T(1,128)}', space=vmem, size = 0x9000, scoped, tag = 'internal scratch']
  #allocation2 [shape = 'f32[32,32]{1,0:T(8,128)}', space=vmem, size = 0x4000, scoped, tag = 'scratch operand']
  %s0 = inlined_call_operand.vmem [shape: bf16[32,64], index: 0, kind: input, shape index: {}]
  %s1 = inlined_call_operand.vmem [shape: bf16[64,32], index: 1, kind: input, shape index: {}]
  %s2 = inlined_call_operand.vmem [shape: f32[1,32], index: 2, kind: input, shape index: {}]
  %s3 = inlined_call_operand.vmem [shape: bf16[32,32], index: 3, kind: output, shape index: {}]
  %s4 = sld [smem:[#allocation0]]
  $region30: #{clap_audio_encoder_forward.12} parent=0
    _
  %s6 = ssub.s32 1, %s4
  %s7 = scalar_select 0, %s6, %s4
  // Predicated region
  $region2: #{clap_audio_encoder_forward.12} parent=0 // pred_check
    _
  $region3: #{clap_audio_encoder_forward.12} parent=0 // pred_check_branch
    %9 = sbr.rel (0) target = $region5
  $region4: #{clap_audio_encoder_forward.12} parent=0 // pred_region
    _
  $region5: #{clap_audio_encoder_forward.12} parent=0 // pred_fallthru
    _
  // Predicated region
  $region6: #{clap_audio_encoder_forward.12} parent=0 // pred_check
    _
  $region7: #{clap_audio_encoder_forward.12} parent=0 // pred_check_branch
    %11 = sbr.rel (0) target = $region9
  $region8: #{clap_audio_encoder_forward.12} parent=0 // pred_region
    _
  $region9: #{clap_audio_encoder_forward.12} parent=0 // pred_fallthru
    _
  // Predicated region
  $region10: #{clap_audio_encoder_forward.12} parent=0 // pred_check
    _
  $region11: #{clap_audio_encoder_forward.12} parent=0 // pred_check_branch
    %13 = sbr.rel (0) target = $region13
  $region12: #{clap_audio_encoder_forward.12} parent=0 // pred_region
    _
  $region13: #{clap_audio_encoder_forward.12} parent=0 // pred_fallthru
    _
  %p15 = scmp.eq.s32.totalorder 0, 0
  // Predicated region
  $region14: #{clap_audio_encoder_forward.12} parent=0 // pred_check
    %p16 = pneg %p15
  $region15: #{clap_audio_encoder_forward.12} parent=0 // pred_check_branch
    %18 = sbr.rel (%p16) target = $region17
  $region16: #{clap_audio_encoder_forward.12} parent=0 // pred_region
    %vm19 = vcmask 261120
    %20 = vst.msk [vmem:[#allocation2] sm:$0xff] %vm19, 0.0
    %21 = vst.msk [vmem:[#allocation2 + $0x8] sm:$0xff] %vm19, 0.0
    %22 = vst.msk [vmem:[#allocation2 + $0x10] sm:$0xff] %vm19, 0.0
    %23 = vst.msk [vmem:[#allocation2 + $0x18] sm:$0xff] %vm19, 0.0
  $region17: #{clap_audio_encoder_forward.12} parent=0 // pred_fallthru
    _
  %v24 = vld [vmem:[#allocation2] sm:$0xff]
  %v25 = vld [vmem:[#allocation2 + $0x8] sm:$0xff]
  %v26 = vld [vmem:[#allocation2 + $0x10] sm:$0xff]
  %v27 = vld [vmem:[#allocation2 + $0x18] sm:$0xff]
  %v28 = vld [vmem:[%s0] sm:$0xf]
  %v29 = vld [vmem:[%s0 + $0x4] sm:$0xf]
  %v30 = vld [vmem:[%s0 + $0x8] sm:$0xf]
  %v31 = vld [vmem:[%s0 + $0xc] sm:$0xf]
  %v32 = vld [vmem:[%s1] sm:$0xf]
  %v33 = vld [vmem:[%s1 + $0x4] sm:$0xf]
  %v34 = vld [vmem:[%s1 + $0x8] sm:$0xf]
  %v35 = vld [vmem:[%s1 + $0xc] sm:$0xf]
  %v36 = vld [vmem:[%s1 + $0x10] sm:$0xf]
  %v37 = vld [vmem:[%s1 + $0x14] sm:$0xf]
  %v38 = vld [vmem:[%s1 + $0x18] sm:$0xf]
  %v39 = vld [vmem:[%s1 + $0x1c] sm:$0xf]
  %v44 = vunpack.c.l.b16 %v28
  %v45 = vunpack.c.l.b16 %v29
  %v46 = vunpack.c.l.b16 %v30
  %v47 = vunpack.c.l.b16 %v31
  %v48 = vpack.c.b16 %v45, %v44
  %v49 = vpack.c.b16 %v47, %v46
  %v58 = vunpack.c.l.b16 %v32
  %v59 = vunpack.c.l.b16 %v33
  %v60 = vunpack.c.l.b16 %v34
  %v61 = vunpack.c.l.b16 %v35
  %v62 = vunpack.c.l.b16 %v36
  %v63 = vunpack.c.l.b16 %v37
  %v64 = vunpack.c.l.b16 %v38
  %v65 = vunpack.c.l.b16 %v39
  %v66 = vpack.c.b16 %v59, %v58
  %v67 = vpack.c.b16 %v61, %v60
  %v68 = vpack.c.b16 %v63, %v62
  %v69 = vpack.c.b16 %v65, %v64
  %vm74 = vcmask 523264
  %v76 = vsel %vm74, %v48, 0
  %v79 = vsel %vm74, %v49, 0
  %81 = vmatpush.bf16.msra.mxu0 0
  %82 = vmatpush.bf16.msra.mxu0 0
  %83 = vmatpush.bf16.msra.mxu0 0
  %84 = vmatpush.bf16.msra.mxu0 0
  %85 = vmatpush.bf16.msra.mxu0 %v69
  %86 = vmatpush.bf16.msra.mxu0 %v68
  %87 = vmatpush.bf16.msra.mxu0 %v67
  %88 = vmatpush.bf16.msra.mxu0 %v66
  %89 = vmatmul.bf16.gmra.mxu0 %v76
  %v90 = vpop.f32.mrf.mxu0
  %v91 = vadd.f32 0.0, %v90
  %v92 = vpop.f32.mrf.mxu0
  %v93 = vadd.f32 0.0, %v92
  %94 = vmatmul.bf16.gmra.mxu0 %v79
  %v95 = vpop.f32.mrf.mxu0
  %v96 = vadd.f32 0.0, %v95
  %v97 = vpop.f32.mrf.mxu0
  %v98 = vadd.f32 0.0, %v97
  %99 = vdwg.mxu0
  %v100 = vadd.f32 %v24, %v91
  %v101 = vadd.f32 %v25, %v93
  %v102 = vadd.f32 %v26, %v96
  %v103 = vadd.f32 %v27, %v98
  %vm104 = vcmask 261120
  %105 = vst.msk [vmem:[#allocation2] sm:$0xff] %vm104, %v100
  %106 = vst.msk [vmem:[#allocation2 + $0x8] sm:$0xff] %vm104, %v101
  %107 = vst.msk [vmem:[#allocation2 + $0x10] sm:$0xff] %vm104, %v102
  %108 = vst.msk [vmem:[#allocation2 + $0x18] sm:$0xff] %vm104, %v103
  // Predicated region
  $region18: #{clap_audio_encoder_forward.12} parent=0 // pred_check
    %p109 = pneg %p15
  $region19: #{clap_audio_encoder_forward.12} parent=0 // pred_check_branch
    %111 = sbr.rel (%p109) target = $region21
  $region20: #{clap_audio_encoder_forward.12} parent=0 // pred_region
    %v112 = vld [vmem:[#allocation2] sm:$0xff]
    %v113 = vld [vmem:[#allocation2 + $0x8] sm:$0xff]
    %v114 = vld [vmem:[#allocation2 + $0x10] sm:$0xff]
    %v115 = vld [vmem:[#allocation2 + $0x18] sm:$0xff]
    %v116 = vld [vmem:[%s2] sm:$0x1]
    %v118 = vperm.slane %v116, 0
    %v120 = vadd.f32 %v112, %v118
    %v121 = vadd.f32 %v113, %v118
    %v122 = vadd.f32 %v114, %v118
    %v123 = vadd.f32 %v115, %v118
    %v124 = vpack.c.bf16 %v120, %v120
    %v125 = vpack.c.bf16 %v121, %v121
    %v126 = vpack.c.bf16 %v122, %v122
    %v127 = vpack.c.bf16 %v123, %v123
    %vm128 = vcmask 257024
    %129 = vst.msk [vmem:[%s3] sm:$0xf] %vm128, %v124
    %130 = vst.msk [vmem:[%s3 + $0x4] sm:$0xf] %vm128, %v125
    %131 = vst.msk [vmem:[%s3 + $0x8] sm:$0xf] %vm128, %v126
    %132 = vst.msk [vmem:[%s3 + $0xc] sm:$0xf] %vm128, %v127
  $region21: #{clap_audio_encoder_forward.12} parent=0 // pred_fallthru
    _
  // Predicated region
  $region22: #{clap_audio_encoder_forward.12} parent=0 // pred_check
    _
  $region23: #{clap_audio_encoder_forward.12} parent=0 // pred_check_branch
    %134 = sbr.rel (0) target = $region25
  $region24: #{clap_audio_encoder_forward.12} parent=0 // pred_region
    _
  $region25: #{clap_audio_encoder_forward.12} parent=0 // pred_fallthru
    _
  // Predicated region
  $region26: #{clap_audio_encoder_forward.12} parent=0 // pred_check
    _
  $region27: #{clap_audio_encoder_forward.12} parent=0 // pred_check_branch
    %136 = sbr.rel (0) target = $region29
  $region28: #{clap_audio_encoder_forward.12} parent=0 // pred_region
    _
  $region29: #{clap_audio_encoder_forward.12} parent=0 // pred_fallthru
    _

// kernel: clap_audio_encoder_forward.15
$region0: #{clap_audio_encoder_forward.15}
  #allocation0 [shape = 'u32[]', space=smem, size = 0x4, offset = 0x4, fixed_abs, tag = 'smem constant byte address 0x4 - core index']
  #allocation1 [shape = 'u32[72,128]{1,0:T(1,128)}', space=vmem, size = 0x9000, scoped, tag = 'internal scratch']
  #allocation2 [shape = 'f32[32,32]{1,0:T(8,128)}', space=vmem, size = 0x4000, scoped, tag = 'scratch operand']
  %s0 = inlined_call_operand.vmem [shape: bf16[32,32], index: 0, kind: input, shape index: {}]
  %s1 = inlined_call_operand.vmem [shape: bf16[32,32], index: 1, kind: input, shape index: {}]
  %s2 = inlined_call_operand.vmem [shape: f32[1,32], index: 2, kind: input, shape index: {}]
  %s3 = inlined_call_operand.vmem [shape: bf16[32,32], index: 3, kind: input, shape index: {}]
  %s4 = inlined_call_operand.vmem [shape: bf16[32,32], index: 4, kind: output, shape index: {}]
  %s5 = sld [smem:[#allocation0]]
  $region34: #{clap_audio_encoder_forward.15} parent=0
    _
  %s7 = ssub.s32 1, %s5
  %s8 = scalar_select 0, %s7, %s5
  // Predicated region
  $region2: #{clap_audio_encoder_forward.15} parent=0 // pred_check
    _
  $region3: #{clap_audio_encoder_forward.15} parent=0 // pred_check_branch
    %10 = sbr.rel (0) target = $region5
  $region4: #{clap_audio_encoder_forward.15} parent=0 // pred_region
    _
  $region5: #{clap_audio_encoder_forward.15} parent=0 // pred_fallthru
    _
  // Predicated region
  $region6: #{clap_audio_encoder_forward.15} parent=0 // pred_check
    _
  $region7: #{clap_audio_encoder_forward.15} parent=0 // pred_check_branch
    %12 = sbr.rel (0) target = $region9
  $region8: #{clap_audio_encoder_forward.15} parent=0 // pred_region
    _
  $region9: #{clap_audio_encoder_forward.15} parent=0 // pred_fallthru
    _
  // Predicated region
  $region10: #{clap_audio_encoder_forward.15} parent=0 // pred_check
    _
  $region11: #{clap_audio_encoder_forward.15} parent=0 // pred_check_branch
    %14 = sbr.rel (0) target = $region13
  $region12: #{clap_audio_encoder_forward.15} parent=0 // pred_region
    _
  $region13: #{clap_audio_encoder_forward.15} parent=0 // pred_fallthru
    _
  // Predicated region
  $region14: #{clap_audio_encoder_forward.15} parent=0 // pred_check
    _
  $region15: #{clap_audio_encoder_forward.15} parent=0 // pred_check_branch
    %16 = sbr.rel (0) target = $region17
  $region16: #{clap_audio_encoder_forward.15} parent=0 // pred_region
    _
  $region17: #{clap_audio_encoder_forward.15} parent=0 // pred_fallthru
    _
  %p18 = scmp.eq.s32.totalorder 0, 0
  // Predicated region
  $region18: #{clap_audio_encoder_forward.15} parent=0 // pred_check
    %p19 = pneg %p18
  $region19: #{clap_audio_encoder_forward.15} parent=0 // pred_check_branch
    %21 = sbr.rel (%p19) target = $region21
  $region20: #{clap_audio_encoder_forward.15} parent=0 // pred_region
    %vm22 = vcmask 261120
    %23 = vst.msk [vmem:[#allocation2] sm:$0xff] %vm22, 0.0
    %24 = vst.msk [vmem:[#allocation2 + $0x8] sm:$0xff] %vm22, 0.0
    %25 = vst.msk [vmem:[#allocation2 + $0x10] sm:$0xff] %vm22, 0.0
    %26 = vst.msk [vmem:[#allocation2 + $0x18] sm:$0xff] %vm22, 0.0
  $region21: #{clap_audio_encoder_forward.15} parent=0 // pred_fallthru
    _
  %v27 = vld [vmem:[#allocation2] sm:$0xff]
  %v28 = vld [vmem:[#allocation2 + $0x8] sm:$0xff]
  %v29 = vld [vmem:[#allocation2 + $0x10] sm:$0xff]
  %v30 = vld [vmem:[#allocation2 + $0x18] sm:$0xff]
  %v31 = vld [vmem:[%s0] sm:$0xf]
  %v32 = vld [vmem:[%s0 + $0x4] sm:$0xf]
  %v33 = vld [vmem:[%s0 + $0x8] sm:$0xf]
  %v34 = vld [vmem:[%s0 + $0xc] sm:$0xf]
  %v35 = vld [vmem:[%s1] sm:$0xf]
  %v36 = vld [vmem:[%s1 + $0x4] sm:$0xf]
  %v37 = vld [vmem:[%s1 + $0x8] sm:$0xf]
  %v38 = vld [vmem:[%s1 + $0xc] sm:$0xf]
  %v43 = vunpack.c.l.b16 %v31
  %v44 = vunpack.c.l.b16 %v32
  %v45 = vunpack.c.l.b16 %v33
  %v46 = vunpack.c.l.b16 %v34
  %v47 = vpack.c.b16 %v44, %v43
  %v48 = vpack.c.b16 %v46, %v45
  %v53 = vunpack.c.l.b16 %v35
  %v54 = vunpack.c.l.b16 %v36
  %v55 = vunpack.c.l.b16 %v37
  %v56 = vunpack.c.l.b16 %v38
  %v57 = vpack.c.b16 %v54, %v53
  %v58 = vpack.c.b16 %v56, %v55
  %vm61 = vcmask 261120
  %v63 = vsel %vm61, %v47, 0
  %v66 = vsel %vm61, %v48, 0
  %68 = vmatpush.bf16.msra.mxu0 0
  %69 = vmatpush.bf16.msra.mxu0 0
  %70 = vmatpush.bf16.msra.mxu0 0
  %71 = vmatpush.bf16.msra.mxu0 0
  %72 = vmatpush.bf16.msra.mxu0 0
  %73 = vmatpush.bf16.msra.mxu0 0
  %74 = vmatpush.bf16.msra.mxu0 %v58
  %75 = vmatpush.bf16.msra.mxu0 %v57
  %76 = vmatmul.bf16.gmra.mxu0 %v63
  %v77 = vpop.f32.mrf.mxu0
  %v78 = vadd.f32 0.0, %v77
  %v79 = vpop.f32.mrf.mxu0
  %v80 = vadd.f32 0.0, %v79
  %81 = vmatmul.bf16.gmra.mxu0 %v66
  %v82 = vpop.f32.mrf.mxu0
  %v83 = vadd.f32 0.0, %v82
  %v84 = vpop.f32.mrf.mxu0
  %v85 = vadd.f32 0.0, %v84
  %86 = vdwg.mxu0
  %v87 = vadd.f32 %v27, %v78
  %v88 = vadd.f32 %v28, %v80
  %v89 = vadd.f32 %v29, %v83
  %v90 = vadd.f32 %v30, %v85
  %91 = vst.msk [vmem:[#allocation2] sm:$0xff] %vm61, %v87
  %92 = vst.msk [vmem:[#allocation2 + $0x8] sm:$0xff] %vm61, %v88
  %93 = vst.msk [vmem:[#allocation2 + $0x10] sm:$0xff] %vm61, %v89
  %94 = vst.msk [vmem:[#allocation2 + $0x18] sm:$0xff] %vm61, %v90
  // Predicated region
  $region22: #{clap_audio_encoder_forward.15} parent=0 // pred_check
    %p95 = pneg %p18
  $region23: #{clap_audio_encoder_forward.15} parent=0 // pred_check_branch
    %97 = sbr.rel (%p95) target = $region25
  $region24: #{clap_audio_encoder_forward.15} parent=0 // pred_region
    %v98 = vld [vmem:[#allocation2] sm:$0xff]
    %v99 = vld [vmem:[#allocation2 + $0x8] sm:$0xff]
    %v100 = vld [vmem:[#allocation2 + $0x10] sm:$0xff]
    %v101 = vld [vmem:[#allocation2 + $0x18] sm:$0xff]
    %v102 = vld [vmem:[%s2] sm:$0x1]
    %v104 = vperm.slane %v102, 0
    %v106 = vadd.f32 %v98, %v104
    %v107 = vadd.f32 %v99, %v104
    %v108 = vadd.f32 %v100, %v104
    %v109 = vadd.f32 %v101, %v104
    %v110 = vld [vmem:[%s3] sm:$0xf]
    %v111 = vld [vmem:[%s3 + $0x4] sm:$0xf]
    %v112 = vld [vmem:[%s3 + $0x8] sm:$0xf]
    %v113 = vld [vmem:[%s3 + $0xc] sm:$0xf]
    %v114 = vunpack.c.l.bf16 %v110
    %v115 = vunpack.c.l.bf16 %v111
    %v116 = vunpack.c.l.bf16 %v112
    %v117 = vunpack.c.l.bf16 %v113
    %v118 = vadd.f32 %v106, %v114
    %v119 = vadd.f32 %v107, %v115
    %v120 = vadd.f32 %v108, %v116
    %v121 = vadd.f32 %v109, %v117
    %v122 = vpack.c.bf16 %v118, %v118
    %v123 = vpack.c.bf16 %v119, %v119
    %v124 = vpack.c.bf16 %v120, %v120
    %v125 = vpack.c.bf16 %v121, %v121
    %vm126 = vcmask 257024
    %127 = vst.msk [vmem:[%s4] sm:$0xf] %vm126, %v122
    %128 = vst.msk [vmem:[%s4 + $0x4] sm:$0xf] %vm126, %v123
    %129 = vst.msk [vmem:[%s4 + $0x8] sm:$0xf] %vm126, %v124
    %130 = vst.msk [vmem:[%s4 + $0xc] sm:$0xf] %vm126, %v125
  $region25: #{clap_audio_encoder_forward.15} parent=0 // pred_fallthru
    _
  // Predicated region
  $region26: #{clap_audio_encoder_forward.15} parent=0 // pred_check
    _
  $region27: #{clap_audio_encoder_forward.15} parent=0 // pred_check_branch
    %132 = sbr.rel (0) target = $region29
  $region28: #{clap_audio_encoder_forward.15} parent=0 // pred_region
    _
  $region29: #{clap_audio_encoder_forward.15} parent=0 // pred_fallthru
    _
  // Predicated region
  $region30: #{clap_audio_encoder_forward.15} parent=0 // pred_check
    _
  $region31: #{clap_audio_encoder_forward.15} parent=0 // pred_check_branch
    %134 = sbr.rel (0) target = $region33
  $region32: #{clap_audio_encoder_forward.15} parent=0 // pred_region
    _
  $region33: #{clap_audio_encoder_forward.15} parent=0 // pred_fallthru
    _

// kernel: clap_audio_encoder_forward.13
$region0: #{clap_audio_encoder_forward.13}
  #allocation0 [shape = 'u32[]', space=smem, size = 0x4, offset = 0x4, fixed_abs, tag = 'smem constant byte address 0x4 - core index']
  #allocation1 [shape = 'u32[72,128]{1,0:T(1,128)}', space=vmem, size = 0x9000, scoped, tag = 'internal scratch']
  %s0 = inlined_call_operand.vmem [shape: bf16[32,32], index: 0, kind: input, shape index: {}]
  %s1 = inlined_call_operand.vmem [shape: f32[1,32], index: 1, kind: input, shape index: {}]
  %s2 = inlined_call_operand.vmem [shape: f32[1,32], index: 2, kind: input, shape index: {}]
  %s3 = inlined_call_operand.vmem [shape: bf16[32,96], index: 3, kind: input, shape index: {}]
  %s4 = inlined_call_operand.vmem [shape: f32[1,96], index: 4, kind: input, shape index: {}]
  %s5 = inlined_call_operand.vmem [shape: bf16[32,32], index: 5, kind: output, shape index: {0}]
  %s6 = inlined_call_operand.vmem [shape: bf16[32,32], index: 6, kind: output, shape index: {1}]
  %s7 = inlined_call_operand.vmem [shape: bf16[32,32], index: 7, kind: output, shape index: {2}]
  %8 = xla_tuple %s5, %s6, %s7
  %s9 = sld [smem:[#allocation0]]
  $region46: #{clap_audio_encoder_forward.13} parent=0
    _
  %s11 = ssub.s32 1, %s9
  %s12 = scalar_select 0, %s11, %s9
  // Predicated region
  $region2: #{clap_audio_encoder_forward.13} parent=0 // pred_check
    _
  $region3: #{clap_audio_encoder_forward.13} parent=0 // pred_check_branch
    %14 = sbr.rel (0) target = $region5
  $region4: #{clap_audio_encoder_forward.13} parent=0 // pred_region
    _
  $region5: #{clap_audio_encoder_forward.13} parent=0 // pred_fallthru
    _
  // Predicated region
  $region6: #{clap_audio_encoder_forward.13} parent=0 // pred_check
    _
  $region7: #{clap_audio_encoder_forward.13} parent=0 // pred_check_branch
    %16 = sbr.rel (0) target = $region9
  $region8: #{clap_audio_encoder_forward.13} parent=0 // pred_region
    _
  $region9: #{clap_audio_encoder_forward.13} parent=0 // pred_fallthru
    _
  // Predicated region
  $region10: #{clap_audio_encoder_forward.13} parent=0 // pred_check
    _
  $region11: #{clap_audio_encoder_forward.13} parent=0 // pred_check_branch
    %18 = sbr.rel (0) target = $region13
  $region12: #{clap_audio_encoder_forward.13} parent=0 // pred_region
    _
  $region13: #{clap_audio_encoder_forward.13} parent=0 // pred_fallthru
    _
  // Predicated region
  $region14: #{clap_audio_encoder_forward.13} parent=0 // pred_check
    _
  $region15: #{clap_audio_encoder_forward.13} parent=0 // pred_check_branch
    %20 = sbr.rel (0) target = $region17
  $region16: #{clap_audio_encoder_forward.13} parent=0 // pred_region
    _
  $region17: #{clap_audio_encoder_forward.13} parent=0 // pred_fallthru
    _
  // Predicated region
  $region18: #{clap_audio_encoder_forward.13} parent=0 // pred_check
    _
  $region19: #{clap_audio_encoder_forward.13} parent=0 // pred_check_branch
    %22 = sbr.rel (0) target = $region21
  $region20: #{clap_audio_encoder_forward.13} parent=0 // pred_region
    _
  $region21: #{clap_audio_encoder_forward.13} parent=0 // pred_fallthru
    _
  %v24 = vld [vmem:[%s0] sm:$0xf]
  %v25 = vld [vmem:[%s0 + $0x4] sm:$0xf]
  %v26 = vld [vmem:[%s0 + $0x8] sm:$0xf]
  %v27 = vld [vmem:[%s0 + $0xc] sm:$0xf]
  %v28 = vunpack.c.l.bf16 %v24
  %v29 = vunpack.c.l.bf16 %v25
  %v30 = vunpack.c.l.bf16 %v26
  %v31 = vunpack.c.l.bf16 %v27
  %vm32 = vcmask 261120
  %v33 = vsel %vm32, %v28, 0.0
  %34 = vadd.xlane.f32.xlu0 %v33
  %v35 = vpop.xlane.xlu0 %34
  %v36 = vsel %vm32, %v29, 0.0
  %37 = vadd.xlane.f32.xlu0 %v36
  %v38 = vpop.xlane.xlu0 %37
  %v39 = vsel %vm32, %v30, 0.0
  %40 = vadd.xlane.f32.xlu0 %v39
  %v41 = vpop.xlane.xlu0 %40
  %v42 = vsel %vm32, %v31, 0.0
  %43 = vadd.xlane.f32.xlu0 %v42
  %v44 = vpop.xlane.xlu0 %43
  %v45 = vrcp.pop 32.0
  %v46 = vmul.f32 32.0, %v45
  %v47 = vsub.f32 1.0, %v46
  %v48 = vmul.f32 %v45, %v47
  %v49 = vadd.f32 %v45, %v48
  %vm50 = vweird.f32 %v45
  %v51 = vsel %vm50, %v45, %v49
  %v52 = vmul.f32 %v35, %v51
  %v53 = vmul.f32 %v38, %v51
  %v54 = vmul.f32 %v41, %v51
  %v55 = vmul.f32 %v44, %v51
  %v56 = vsub.f32 %v28, %v52
  %v57 = vsub.f32 %v29, %v53
  %v58 = vsub.f32 %v30, %v54
  %v59 = vsub.f32 %v31, %v55
  %v60 = vmul.f32 %v56, %v56
  %v61 = vmul.f32 %v57, %v57
  %v62 = vmul.f32 %v58, %v58
  %v63 = vmul.f32 %v59, %v59
  %v64 = vsel %vm32, %v60, 0.0
  %65 = vadd.xlane.f32.xlu0 %v64
  %v66 = vpop.xlane.xlu0 %65
  %v67 = vsel %vm32, %v61, 0.0
  %68 = vadd.xlane.f32.xlu0 %v67
  %v69 = vpop.xlane.xlu0 %68
  %v70 = vsel %vm32, %v62, 0.0
  %71 = vadd.xlane.f32.xlu0 %v70
  %v72 = vpop.xlane.xlu0 %71
  %v73 = vsel %vm32, %v63, 0.0
  %74 = vadd.xlane.f32.xlu0 %v73
  %v75 = vpop.xlane.xlu0 %74
  %v76 = vmul.f32 %v66, %v51
  %v77 = vmul.f32 %v69, %v51
  %v78 = vmul.f32 %v72, %v51
  %v79 = vmul.f32 %v75, %v51
  %v80 = vadd.f32 %v76, 1e-05
  %v81 = vadd.f32 %v77, 1e-05
  %v82 = vadd.f32 %v78, 1e-05
  %v83 = vadd.f32 %v79, 1e-05
  %v84 = vrsqrt.pop %v80
  %v85 = vmul.f32 %v84, %v80
  %v86 = vmul.f32 %v85, %v84
  %v87 = vmul.f32 0.5, %v86
  %v88 = vsub.f32 1.5, %v87
  %v89 = vmul.f32 %v84, %v88
  %vm90 = vweird.f32 %v80
  %vm91 = vweird.f32 %v84
  %vm92 = vmor %vm90, %vm91
  %v93 = vsel %vm92, %v84, %v89
  %v94 = vrsqrt.pop %v81
  %v95 = vmul.f32 %v94, %v81
  %v96 = vmul.f32 %v95, %v94
  %v97 = vmul.f32 0.5, %v96
  %v98 = vsub.f32 1.5, %v97
  %v99 = vmul.f32 %v94, %v98
  %vm100 = vweird.f32 %v81
  %vm101 = vweird.f32 %v94
  %vm102 = vmor %vm100, %vm101
  %v103 = vsel %vm102, %v94, %v99
  %v104 = vrsqrt.pop %v82
  %v105 = vmul.f32 %v104, %v82
  %v106 = vmul.f32 %v105, %v104
  %v107 = vmul.f32 0.5, %v106
  %v108 = vsub.f32 1.5, %v107
  %v109 = vmul.f32 %v104, %v108
  %vm110 = vweird.f32 %v82
  %vm111 = vweird.f32 %v104
  %vm112 = vmor %vm110, %vm111
  %v113 = vsel %vm112, %v104, %v109
  %v114 = vrsqrt.pop %v83
  %v115 = vmul.f32 %v114, %v83
  %v116 = vmul.f32 %v115, %v114
  %v117 = vmul.f32 0.5, %v116
  %v118 = vsub.f32 1.5, %v117
  %v119 = vmul.f32 %v114, %v118
  %vm120 = vweird.f32 %v83
  %vm121 = vweird.f32 %v114
  %vm122 = vmor %vm120, %vm121
  %v123 = vsel %vm122, %v114, %v119
  %v124 = vmul.f32 %v56, %v93
  %v125 = vmul.f32 %v57, %v103
  %v126 = vmul.f32 %v58, %v113
  %v127 = vmul.f32 %v59, %v123
  %v128 = vld [vmem:[%s1] sm:$0x1]
  %v130 = vperm.slane %v128, 0
  %v132 = vmul.f32 %v124, %v130
  %v133 = vmul.f32 %v125, %v130
  %v134 = vmul.f32 %v126, %v130
  %v135 = vmul.f32 %v127, %v130
  %v136 = vld [vmem:[%s2] sm:$0x1]
  %v138 = vperm.slane %v136, 0
  %v140 = vadd.f32 %v132, %v138
  %v141 = vadd.f32 %v133, %v138
  %v142 = vadd.f32 %v134, %v138
  %v143 = vadd.f32 %v135, %v138
  %v144 = vpack.c.bf16 %v141, %v140
  %v145 = vpack.c.bf16 %v143, %v142
  %v146 = vld [vmem:[%s3] sm:$0xf]
  %v147 = vld [vmem:[%s3 + $0x4] sm:$0xf]
  %v148 = vld [vmem:[%s3 + $0x8] sm:$0xf]
  %v149 = vld [vmem:[%s3 + $0xc] sm:$0xf]
  %v150 = vld [vmem:[%s4] sm:$0x1]
  %v152 = vperm.slane %v150, 0
  %v158 = vunpack.c.l.b16 %v146
  %v159 = vunpack.c.l.b16 %v147
  %v160 = vunpack.c.l.b16 %v148
  %v161 = vunpack.c.l.b16 %v149
  %v162 = vpack.c.b16 %v159, %v158
  %v163 = vpack.c.b16 %v161, %v160
  %v167 = vsel %vm32, %v144, 0
  %v170 = vsel %vm32, %v145, 0
  %172 = vmatpush.bf16.msra.mxu0 0
  %173 = vmatpush.bf16.msra.mxu0 0
  %174 = vmatpush.bf16.msra.mxu0 0
  %175 = vmatpush.bf16.msra.mxu0 0
  %176 = vmatpush.bf16.msra.mxu0 0
  %177 = vmatpush.bf16.msra.mxu0 0
  %178 = vmatpush.bf16.msra.mxu0 %v163
  %179 = vmatpush.bf16.msra.mxu0 %v162
  %180 = vmatmul.bf16.gmra.mxu0 %v167
  %v181 = vpop.f32.mrf.mxu0
  %v182 = vadd.f32 %v152, %v181
  %v183 = vpop.f32.mrf.mxu0
  %v184 = vadd.f32 %v152, %v183
  %185 = vmatmul.bf16.gmra.mxu0 %v170
  %v186 = vpop.f32.mrf.mxu0
  %v187 = vadd.f32 %v152, %v186
  %v188 = vpop.f32.mrf.mxu0
  %v189 = vadd.f32 %v152, %v188
  %190 = vdwg.mxu0
  %v191 = vpack.c.bf16 %v182, %v182
  %v192 = vpack.c.bf16 %v184, %v184
  %v193 = vpack.c.bf16 %v187, %v187
  %v194 = vpack.c.bf16 %v189, %v189
  %vm195 = vcmask 257024
  %196 = vst.msk [vmem:[%s5] sm:$0xf] %vm195, %v191
  %197 = vst.msk [vmem:[%s5 + $0x4] sm:$0xf] %vm195, %v192
  %198 = vst.msk [vmem:[%s5 + $0x8] sm:$0xf] %vm195, %v193
  %199 = vst.msk [vmem:[%s5 + $0xc] sm:$0xf] %vm195, %v194
  %204 = vrot.lane.b32.xlu0 %v191, 96
  %v205 = vpop.permute.xlu0 %204
  %206 = vrot.lane.b32.xlu0 %v192, 96
  %v207 = vpop.permute.xlu0 %206
  %208 = vrot.lane.b32.xlu0 %v193, 96
  %v209 = vpop.permute.xlu0 %208
  %210 = vrot.lane.b32.xlu0 %v194, 96
  %v211 = vpop.permute.xlu0 %210
  %216 = vst.msk [vmem:[%s6] sm:$0xf] %vm195, %v205
  %217 = vst.msk [vmem:[%s6 + $0x4] sm:$0xf] %vm195, %v207
  %218 = vst.msk [vmem:[%s6 + $0x8] sm:$0xf] %vm195, %v209
  %219 = vst.msk [vmem:[%s6 + $0xc] sm:$0xf] %vm195, %v211
  %220 = vrot.lane.b32.xlu0 %v191, 64
  %v221 = vpop.permute.xlu0 %220
  %222 = vrot.lane.b32.xlu0 %v192, 64
  %v223 = vpop.permute.xlu0 %222
  %224 = vrot.lane.b32.xlu0 %v193, 64
  %v225 = vpop.permute.xlu0 %224
  %226 = vrot.lane.b32.xlu0 %v194, 64
  %v227 = vpop.permute.xlu0 %226
  %232 = vst.msk [vmem:[%s7] sm:$0xf] %vm195, %v221
  %233 = vst.msk [vmem:[%s7 + $0x4] sm:$0xf] %vm195, %v223
  %234 = vst.msk [vmem:[%s7 + $0x8] sm:$0xf] %vm195, %v225
  %235 = vst.msk [vmem:[%s7 + $0xc] sm:$0xf] %vm195, %v227
  // Predicated region
  $region22: #{clap_audio_encoder_forward.13} parent=0 // pred_check
    _
  $region23: #{clap_audio_encoder_forward.13} parent=0 // pred_check_branch
    %237 = sbr.rel (0) target = $region25
  $region24: #{clap_audio_encoder_forward.13} parent=0 // pred_region
    _
  $region25: #{clap_audio_encoder_forward.13} parent=0 // pred_fallthru
    _
  // Predicated region
  $region26: #{clap_audio_encoder_forward.13} parent=0 // pred_check
    _
  $region27: #{clap_audio_encoder_forward.13} parent=0 // pred_check_branch
    %239 = sbr.rel (0) target = $region29
  $region28: #{clap_audio_encoder_forward.13} parent=0 // pred_region
    _
  $region29: #{clap_audio_encoder_forward.13} parent=0 // pred_fallthru
    _
  // Predicated region
  $region30: #{clap_audio_encoder_forward.13} parent=0 // pred_check
    _
  $region31: #{clap_audio_encoder_forward.13} parent=0 // pred_check_branch
    %241 = sbr.rel (0) target = $region33
  $region32: #{clap_audio_encoder_forward.13} parent=0 // pred_region
    _
  $region33: #{clap_audio_encoder_forward.13} parent=0 // pred_fallthru
    _
  // Predicated region
  $region34: #{clap_audio_encoder_forward.13} parent=0 // pred_check
    _
  $region35: #{clap_audio_encoder_forward.13} parent=0 // pred_check_branch
    %243 = sbr.rel (0) target = $region37
  $region36: #{clap_audio_encoder_forward.13} parent=0 // pred_region
    _
  $region37: #{clap_audio_encoder_forward.13} parent=0 // pred_fallthru
    _
  // Predicated region
  $region38: #{clap_audio_encoder_forward.13} parent=0 // pred_check
    _
  $region39: #{clap_audio_encoder_forward.13} parent=0 // pred_check_branch
    %245 = sbr.rel (0) target = $region41
  $region40: #{clap_audio_encoder_forward.13} parent=0 // pred_region
    _
  $region41: #{clap_audio_encoder_forward.13} parent=0 // pred_fallthru
    _
  // Predicated region
  $region42: #{clap_audio_encoder_forward.13} parent=0 // pred_check
    _
  $region43: #{clap_audio_encoder_forward.13} parent=0 // pred_check_branch
    %247 = sbr.rel (0) target = $region45
  $region44: #{clap_audio_encoder_forward.13} parent=0 // pred_region
    _
  $region45: #{clap_audio_encoder_forward.13} parent=0 // pred_fallthru
    _

// kernel: clap_audio_encoder_forward.14
$region0: #{clap_audio_encoder_forward.14}
  #allocation0 [shape = 'u32[]', space=smem, size = 0x4, offset = 0x4, fixed_abs, tag = 'smem constant byte address 0x4 - core index']
  #allocation1 [shape = 'u32[72,128]{1,0:T(1,128)}', space=vmem, size = 0x9000, scoped, tag = 'internal scratch']
  #allocation2 [shape = 'f32[4,16,1]{2,1,0:T(8,128)}', space=vmem, size = 0x8000, scoped, tag = 'scratch operand']
  #allocation3 [shape = 'f32[4,16,1]{2,1,0:T(8,128)}', space=vmem, size = 0x8000, scoped, tag = 'scratch operand']
  #allocation4 [shape = 'f32[16,32]{1,0:T(8,128)}', space=vmem, size = 0x2000, scoped, tag = 'scratch operand']
  %s0 = inlined_call_operand.vmem [shape: bf16[2,16,32], index: 0, kind: input, shape index: {}]
  %s1 = inlined_call_operand.vmem [shape: bf16[2,16,32], index: 1, kind: input, shape index: {}]
  %s2 = inlined_call_operand.vmem [shape: bf16[2,16,32], index: 2, kind: input, shape index: {}]
  %s3 = inlined_call_operand.vmem [shape: bf16[2,16,32], index: 3, kind: output, shape index: {}]
  %s4 = sld [smem:[#allocation0]]
  $region53: #{clap_audio_encoder_forward.14} parent=0
    _
  %s6 = ssub.s32 1, %s4
  %s7 = scalar_select 0, %s6, %s4
  loop: start=0, step=1, limit=4
  $region2: #{clap_audio_encoder_forward.14} parent=0 // loop_pre_header
    _
  $region3: #{clap_audio_encoder_forward.14} parent=0 // loop_header
    %s9 = sphi 0, %s13
    %p10 = scmp.ge.s32.totalorder %s9, 4
    %s16 = sphi 0, %s35
    %s17 = sphi 0, %s31
    %s18 = sphi 0, %s27
    %s19 = sphi 0, %s16
    %s20 = sphi 0, %s17
    %s21 = sphi 0, %s18
    %s22 = sphi 0, %s19
    %s23 = sphi 0, %s20
    %s24 = sphi 0, %s21
    %s40 = sphi 0, %s42
    %s43 = sphi 0, %s40
    %s44 = sphi 0, %s43
    %s60 = sphi 0, %s44
    %s68 = sphi 0, %s70
    %s71 = sphi 0, %s68
    %s72 = sphi 0, %s71
    %s88 = sphi 0, %s72
    %s96 = sphi 0, %s98
    %s99 = sphi 0, %s96
    %s100 = sphi 0, %s99
    %s116 = sphi 0, %s100
    %s124 = sphi 0, %s126
    %s127 = sphi 0, %s124
    %s128 = sphi 0, %s127
    %s144 = sphi 0, %s128
  $region4: #{clap_audio_encoder_forward.14} parent=0 // loop_header_branch
    %12 = sbr.rel (%p10) target = $region8
  $region5: #{clap_audio_encoder_forward.14} parent=0 // loop_body
    %s14 = ssub.s32 %s9, 1
    %s15 = ssub.s32 %s9, 2
    %s25 = sadd.s32 1, %s18
    %p26 = scmp.ge.s32.totalorder %s25, 1
    %s27 = scalar_select %p26, 0, %s25
    %s28 = sadd.s32 1, %s17
    %s29 = scalar_select %p26, %s28, %s17
    %p30 = scmp.ge.s32.totalorder %s29, 1
    %s31 = scalar_select %p30, 0, %s29
    %s32 = sadd.s32 1, %s16
    %s33 = scalar_select %p30, %s32, %s16
    %p34 = scmp.ge.s32.totalorder %s33, 2
    %s35 = scalar_select %p34, 0, %s33
    %s36 = ssub.s32 %s16, %s35
    %s37 = ssub.s32 %s17, %s31
    %s38 = sor.u32 %s36, %s37
    %p39 = scmp.eq.s32.totalorder %s38, 0
    %s41 = sadd.s32 %s40, 1
    %s42 = scalar_select %p39, %s40, %s41
    %p45 = pneg %p39
    %p46 = scmp.eq.s32.totalorder %s9, 1
    %p47 = por %p45, %p46
    %p48 = scmp.ne.s32.totalorder %s40, %s43
    %p49 = scmp.eq.s32.totalorder %s9, 0
    %p50 = por %p48, %p49
    %p51 = scmp.ne.s32.totalorder %s40, %s43
    %p52 = scmp.eq.s32.totalorder %s14, 1
    %p53 = por %p51, %p52
    %p54 = scmp.ne.s32.totalorder %s43, %s44
    %p55 = scmp.eq.s32.totalorder %s14, 0
    %p56 = por %p54, %p55
    %p57 = scmp.ne.s32.totalorder %s43, %s44
    %p58 = scmp.eq.s32.totalorder %s15, 1
    %p59 = por %p57, %p58
    %p61 = scmp.ne.s32.totalorder %s44, %s60
    %p62 = scmp.eq.s32.totalorder %s15, 0
    %p63 = por %p61, %p62
    %s64 = ssub.s32 %s16, %s35
    %s65 = ssub.s32 %s18, %s27
    %s66 = sor.u32 %s64, %s65
    %p67 = scmp.eq.s32.totalorder %s66, 0
    %s69 = sadd.s32 %s68, 1
    %s70 = scalar_select %p67, %s68, %s69
    %p73 = pneg %p67
    %p74 = scmp.eq.s32.totalorder %s9, 1
    %p75 = por %p73, %p74
    %p76 = scmp.ne.s32.totalorder %s68, %s71
    %p77 = scmp.eq.s32.totalorder %s9, 0
    %p78 = por %p76, %p77
    %p79 = scmp.ne.s32.totalorder %s68, %s71
    %p80 = scmp.eq.s32.totalorder %s14, 1
    %p81 = por %p79, %p80
    %p82 = scmp.ne.s32.totalorder %s71, %s72
    %p83 = scmp.eq.s32.totalorder %s14, 0
    %p84 = por %p82, %p83
    %p85 = scmp.ne.s32.totalorder %s71, %s72
    %p86 = scmp.eq.s32.totalorder %s15, 1
    %p87 = por %p85, %p86
    %p89 = scmp.ne.s32.totalorder %s72, %s88
    %p90 = scmp.eq.s32.totalorder %s15, 0
    %p91 = por %p89, %p90
    %s92 = ssub.s32 %s16, %s35
    %s93 = ssub.s32 %s18, %s27
    %s94 = sor.u32 %s92, %s93
    %p95 = scmp.eq.s32.totalorder %s94, 0
    %s97 = sadd.s32 %s96, 1
    %s98 = scalar_select %p95, %s96, %s97
    %p101 = pneg %p95
    %p102 = scmp.eq.s32.totalorder %s9, 1
    %p103 = por %p101, %p102
    %p104 = scmp.ne.s32.totalorder %s96, %s99
    %p105 = scmp.eq.s32.totalorder %s9, 0
    %p106 = por %p104, %p105
    %p107 = scmp.ne.s32.totalorder %s96, %s99
    %p108 = scmp.eq.s32.totalorder %s14, 1
    %p109 = por %p107, %p108
    %p110 = scmp.ne.s32.totalorder %s99, %s100
    %p111 = scmp.eq.s32.totalorder %s14, 0
    %p112 = por %p110, %p111
    %p113 = scmp.ne.s32.totalorder %s99, %s100
    %p114 = scmp.eq.s32.totalorder %s15, 1
    %p115 = por %p113, %p114
    %p117 = scmp.ne.s32.totalorder %s100, %s116
    %p118 = scmp.eq.s32.totalorder %s15, 0
    %p119 = por %p117, %p118
    %s120 = ssub.s32 %s16, %s35
    %s121 = ssub.s32 %s17, %s31
    %s122 = sor.u32 %s120, %s121
    %p123 = scmp.eq.s32.totalorder %s122, 0
    %s125 = sadd.s32 %s124, 1
    %s126 = scalar_select %p123, %s124, %s125
    %p129 = pneg %p123
    %p130 = scmp.eq.s32.totalorder %s9, 1
    %p131 = por %p129, %p130
    %p132 = scmp.ne.s32.totalorder %s124, %s127
    %p133 = scmp.eq.s32.totalorder %s9, 0
    %p134 = por %p132, %p133
    %p135 = scmp.ne.s32.totalorder %s124, %s127
    %p136 = scmp.eq.s32.totalorder %s14, 1
    %p137 = por %p135, %p136
    %p138 = scmp.ne.s32.totalorder %s127, %s128
    %p139 = scmp.eq.s32.totalorder %s14, 0
    %p140 = por %p138, %p139
    %p141 = scmp.ne.s32.totalorder %s127, %s128
    %p142 = scmp.eq.s32.totalorder %s15, 1
    %p143 = por %p141, %p142
    %p145 = scmp.ne.s32.totalorder %s128, %s144
    %p146 = scmp.eq.s32.totalorder %s15, 0
    %p147 = por %p145, %p146
    %p148 = scmp.le.s32.totalorder 1, %s9
    %p149 = scmp.lt.s32.totalorder %s9, 3
    %p150 = pnand %p148, %p149
    %p151 = pneg %p150
    // Predicated region
    $region9: #{clap_audio_encoder_forward.14} parent=5 // pred_check
      _
    $region10: #{clap_audio_encoder_forward.14} parent=5 // pred_check_branch
      %153 = sbr.rel (%p150) target = $region12
    $region11: #{clap_audio_encoder_forward.14} parent=5 // pred_region
      %s154 = ssub.s32 %s9, 1
    $region12: #{clap_audio_encoder_forward.14} parent=5 // pred_fallthru
      _
    %p155 = scmp.lt.s32.totalorder %s9, 2
    // Predicated region
    $region13: #{clap_audio_encoder_forward.14} parent=5 // pred_check
      %p156 = pneg %p155
    $region14: #{clap_audio_encoder_forward.14} parent=5 // pred_check_branch
      %158 = sbr.rel (%p156) target = $region16
    $region15: #{clap_audio_encoder_forward.14} parent=5 // pred_region
      // Predicated region
      $region17: #{clap_audio_encoder_forward.14} parent=15 // pred_check
        %p159 = pneg %p50
      $region18: #{clap_audio_encoder_forward.14} parent=15 // pred_check_branch
        %161 = sbr.rel (%p159) target = $region20
      $region19: #{clap_audio_encoder_forward.14} parent=15 // pred_region
        %s162 = smul.u32 2, %s17
        %p163 = scmp.lt.s32.totalorder %s16, 1
        %s164 = scalar_select %p163, %s16, 1
        %p165 = scmp.lt.s32.totalorder %s162, 1
        %s166 = scalar_select %p165, %s162, 1
        %s167 = smul.addr %s164, 2
        %s168 = sadd.s32 %s166, %s167
        %s169 = smul.addr %s168, 4
        %s170 = scalar_lea.vmem %s0, %s169
        %s171 = smul.u32 2, %s17
      $region20: #{clap_audio_encoder_forward.14} parent=15 // pred_fallthru
        _
      // Predicated region
      $region21: #{clap_audio_encoder_forward.14} parent=15 // pred_check
        %p172 = pneg %p78
      $region22: #{clap_audio_encoder_forward.14} parent=15 // pred_check_branch
        %174 = sbr.rel (%p172) target = $region24
      $region23: #{clap_audio_encoder_forward.14} parent=15 // pred_region
        %s175 = smul.u32 2, %s18
        %p176 = scmp.lt.s32.totalorder %s16, 1
        %s177 = scalar_select %p176, %s16, 1
        %p178 = scmp.lt.s32.totalorder %s175, 1
        %s179 = scalar_select %p178, %s175, 1
        %s180 = smul.addr %s177, 2
        %s181 = sadd.s32 %s179, %s180
        %s182 = smul.addr %s181, 4
        %s183 = scalar_lea.vmem %s1, %s182
        %s184 = smul.u32 2, %s18
      $region24: #{clap_audio_encoder_forward.14} parent=15 // pred_fallthru
        _
      // Predicated region
      $region25: #{clap_audio_encoder_forward.14} parent=15 // pred_check
        %p185 = pneg %p106
      $region26: #{clap_audio_encoder_forward.14} parent=15 // pred_check_branch
        %187 = sbr.rel (%p185) target = $region28
      $region27: #{clap_audio_encoder_forward.14} parent=15 // pred_region
        %s188 = smul.u32 2, %s18
        %p189 = scmp.lt.s32.totalorder %s16, 1
        %s190 = scalar_select %p189, %s16, 1
        %p191 = scmp.lt.s32.totalorder %s188, 1
        %s192 = scalar_select %p191, %s188, 1
        %s193 = smul.addr %s190, 2
        %s194 = sadd.s32 %s192, %s193
        %s195 = smul.addr %s194, 4
        %s196 = scalar_lea.vmem %s2, %s195
        %s197 = smul.u32 2, %s18
      $region28: #{clap_audio_encoder_forward.14} parent=15 // pred_fallthru
        _
    $region16: #{clap_audio_encoder_forward.14} parent=5 // pred_fallthru
      _
    %p198 = scmp.le.s32.totalorder 1, %s9
    %p199 = scmp.lt.s32.totalorder %s9, 3
    %p200 = pnand %p198, %p199
    %p201 = pneg %p200
    // Predicated region
    $region29: #{clap_audio_encoder_forward.14} parent=5 // pred_check
      _
    $region30: #{clap_audio_encoder_forward.14} parent=5 // pred_check_branch
      %203 = sbr.rel (%p200) target = $region32
    $region31: #{clap_audio_encoder_forward.14} parent=5 // pred_region
      %s204 = ssub.s32 %s9, 1
      %s205 = smul.u32 2, %s20
      %p206 = scmp.lt.s32.totalorder %s19, 1
      %s207 = scalar_select %p206, %s19, 1
      %p208 = scmp.lt.s32.totalorder %s205, 1
      %s209 = scalar_select %p208, %s205, 1
      %s210 = smul.addr %s207, 2
      %s211 = sadd.s32 %s209, %s210
      %s212 = smul.addr %s211, 4
      %s213 = scalar_lea.vmem %s0, %s212
      %p214 = pneg %p56
      %p215 = pneg %p53
      %s216 = smul.u32 2, %s21
      %p217 = scmp.lt.s32.totalorder %s19, 1
      %s218 = scalar_select %p217, %s19, 1
      %p219 = scmp.lt.s32.totalorder %s216, 1
      %s220 = scalar_select %p219, %s216, 1
      %s221 = smul.addr %s218, 2
      %s222 = sadd.s32 %s220, %s221
      %s223 = smul.addr %s222, 4
      %s224 = scalar_lea.vmem %s1, %s223
      %p225 = pneg %p84
      %p226 = pneg %p81
      %s227 = smul.u32 2, %s21
      %p228 = scmp.lt.s32.totalorder %s19, 1
      %s229 = scalar_select %p228, %s19, 1
      %p230 = scmp.lt.s32.totalorder %s227, 1
      %s231 = scalar_select %p230, %s227, 1
      %s232 = smul.addr %s229, 2
      %s233 = sadd.s32 %s231, %s232
      %s234 = smul.addr %s233, 4
      %s235 = scalar_lea.vmem %s2, %s234
      %p236 = pneg %p112
      %p237 = pneg %p109
      %p238 = pneg %p140
      %p239 = pneg %p137
      %s240 = smul.u32 2, %s20
      %p241 = scmp.lt.s32.totalorder %s19, 1
      %s242 = scalar_select %p241, %s19, 1
      %p243 = scmp.lt.s32.totalorder %s240, 1
      %s244 = scalar_select %p243, %s240, 1
      %s245 = smul.addr %s242, 2
      %s246 = sadd.s32 %s244, %s245
      %s247 = smul.addr %s246, 4
      %s248 = scalar_lea.vmem %s3, %s247
      %s249 = smul.u32 2, %s20
      %p250 = scmp.lt.s32.totalorder %s19, 1
      %s251 = scalar_select %p250, %s19, 1
      %p252 = scmp.lt.s32.totalorder %s249, 1
      %s253 = scalar_select %p252, %s249, 1
      %s254 = smul.addr %s251, 2
      %s255 = sadd.s32 %s253, %s254
      %s256 = smul.addr %s255, 4
      %s257 = scalar_lea.vmem %s0, %s256
      %s258 = smul.u32 2, %s20
      %s259 = smul.u32 2, %s21
      %p260 = scmp.lt.s32.totalorder %s19, 1
      %s261 = scalar_select %p260, %s19, 1
      %p262 = scmp.lt.s32.totalorder %s259, 1
      %s263 = scalar_select %p262, %s259, 1
      %s264 = smul.addr %s261, 2
      %s265 = sadd.s32 %s263, %s264
      %s266 = smul.addr %s265, 4
      %s267 = scalar_lea.vmem %s1, %s266
      %s268 = smul.u32 2, %s21
      %s269 = smul.u32 2, %s21
      %p270 = scmp.lt.s32.totalorder %s19, 1
      %s271 = scalar_select %p270, %s19, 1
      %p272 = scmp.lt.s32.totalorder %s269, 1
      %s273 = scalar_select %p272, %s269, 1
      %s274 = smul.addr %s271, 2
      %s275 = sadd.s32 %s273, %s274
      %s276 = smul.addr %s275, 4
      %s277 = scalar_lea.vmem %s2, %s276
      %s278 = smul.u32 2, %s21
      %s279 = smul.u32 2, %s20
      %p280 = scmp.lt.s32.totalorder %s19, 1
      %s281 = scalar_select %p280, %s19, 1
      %p282 = scmp.lt.s32.totalorder %s279, 1
      %s283 = scalar_select %p282, %s279, 1
      %s284 = smul.addr %s281, 2
      %s285 = sadd.s32 %s283, %s284
      %s286 = smul.addr %s285, 4
      %s287 = scalar_lea.vmem %s3, %s286
      %s288 = smul.u32 2, %s20
      %p290 = scmp.eq.s32.totalorder %s21, 0
      // Predicated region
      $region33: #{clap_audio_encoder_forward.14} parent=31 // pred_check
        %p291 = pneg %p290
      $region34: #{clap_audio_encoder_forward.14} parent=31 // pred_check_branch
        %293 = sbr.rel (%p291) target = $region36
      $region35: #{clap_audio_encoder_forward.14} parent=31 // pred_region
        %vm294 = vcmask 7168
        %295 = vst.msk [vmem:[#allocation2] sm:$0xff] %vm294, -inf
        %296 = vst.msk [vmem:[#allocation2 + $0x8] sm:$0xff] %vm294, -inf
        %297 = vst.msk [vmem:[#allocation2 + $0x10] sm:$0xff] %vm294, -inf
        %298 = vst.msk [vmem:[#allocation2 + $0x18] sm:$0xff] %vm294, -inf
        %299 = vst.msk [vmem:[#allocation2 + $0x20] sm:$0xff] %vm294, -inf
        %300 = vst.msk [vmem:[#allocation2 + $0x28] sm:$0xff] %vm294, -inf
        %301 = vst.msk [vmem:[#allocation2 + $0x30] sm:$0xff] %vm294, -inf
        %302 = vst.msk [vmem:[#allocation2 + $0x38] sm:$0xff] %vm294, -inf
        %303 = vst.msk [vmem:[#allocation3] sm:$0xff] %vm294, 0.0
        %304 = vst.msk [vmem:[#allocation3 + $0x8] sm:$0xff] %vm294, 0.0
        %305 = vst.msk [vmem:[#allocation3 + $0x10] sm:$0xff] %vm294, 0.0
        %306 = vst.msk [vmem:[#allocation3 + $0x18] sm:$0xff] %vm294, 0.0
        %307 = vst.msk [vmem:[#allocation3 + $0x20] sm:$0xff] %vm294, 0.0
        %308 = vst.msk [vmem:[#allocation3 + $0x28] sm:$0xff] %vm294, 0.0
        %309 = vst.msk [vmem:[#allocation3 + $0x30] sm:$0xff] %vm294, 0.0
        %310 = vst.msk [vmem:[#allocation3 + $0x38] sm:$0xff] %vm294, 0.0
        %vm311 = vcmask 261120
        %312 = vst.msk [vmem:[#allocation4] sm:$0xff] %vm311, 0.0
        %313 = vst.msk [vmem:[#allocation4 + $0x8] sm:$0xff] %vm311, 0.0
      $region36: #{clap_audio_encoder_forward.14} parent=31 // pred_fallthru
        _
      %v314 = vld [vmem:[%s257] sm:$0xf]
      %v315 = vld [vmem:[%s257 + $0x4] sm:$0xf]
      %v316 = vunpack.c.l.bf16 %v314
      %v317 = vunpack.c.l.bf16 %v315
      %v318 = vmul.f32 %v316, 0.35351563
      %v319 = vmul.f32 %v317, 0.35351563
      %v320 = vpack.c.bf16 %v319, %v318
      %v321 = vld [vmem:[%s267] sm:$0xf]
      %v322 = vld [vmem:[%s267 + $0x4] sm:$0xf]
      %v323 = vld [vmem:[%s277] sm:$0xf]
      %v324 = vld [vmem:[%s277 + $0x4] sm:$0xf]
      %v327 = vunpack.c.l.b16 %v321
      %v328 = vunpack.c.l.b16 %v322
      %v329 = vpack.c.b16 %v328, %v327
      %vm330 = vcmask 64512
      %v332 = vsel %vm330, %v320, 0
      %v335 = vsel %vm330, %v329, 0
      %337 = vmatpush.bf16.xpose.msra.mxu0 0
      %338 = vmatpush.bf16.xpose.msra.mxu0 0
      %339 = vmatpush.bf16.xpose.msra.mxu0 0
      %340 = vmatpush.bf16.xpose.msra.mxu0 0
      %341 = vmatpush.bf16.xpose.msra.mxu0 0
      %342 = vmatpush.bf16.xpose.msra.mxu0 0
      %343 = vmatpush.bf16.xpose.msra.mxu0 0
      %344 = vmatpush.bf16.xpose.msra.mxu0 %v335
      %345 = vmatmul.bf16.gmra.mxu0 %v332
      %v346 = vpop.f32.mrf.mxu0
      %v347 = vadd.f32 0.0, %v346
      %v348 = vpop.f32.mrf.mxu0
      %v349 = vadd.f32 0.0, %v348
      %350 = vdwg.mxu0
      %v351 = vld [vmem:[#allocation2] sm:$0xff]
      %v352 = vld [vmem:[#allocation2 + $0x8] sm:$0xff]
      %vm353 = vcmask 130048
      %v354 = vsel %vm353, %v347, -inf
      %355 = vmax.xlane.f32.xlu0 %v354
      %v356 = vpop.xlane.xlu0 %355
      %v357 = vsel %vm353, %v349, -inf
      %358 = vmax.xlane.f32.xlu0 %v357
      %v359 = vpop.xlane.xlu0 %358
      %v360 = vmax.f32 %v351, %v356
      %v361 = vmax.f32 %v352, %v359
      %v362 = vsub.f32 %v351, %v360
      %v363 = vsub.f32 %v352, %v361
      %v364 = vmul.f32 %v362, 1.442695
      %v365 = vpow.pop %v364
      %v366 = vmul.f32 %v363, 1.442695
      %v367 = vpow.pop %v366
      %369 = vset.pattern.permute.xlu0 0
      %370 = vperm.xlu0 %369, %v360
      %v371 = vpop.permute.xlu0 %370
      %374 = vset.pattern.permute.xlu0 0
      %375 = vperm.xlu0 %374, %v361
      %v376 = vpop.permute.xlu0 %375
      %v378 = vsub.f32 %v347, %v371
      %v379 = vsub.f32 %v349, %v376
      %v380 = vmul.f32 %v378, 1.442695
      %v381 = vpow.pop %v380
      %v382 = vmul.f32 %v379, 1.442695
      %v383 = vpow.pop %v382
      %v384 = vld [vmem:[#allocation3] sm:$0xff]
      %v385 = vld [vmem:[#allocation3 + $0x8] sm:$0xff]
      %v386 = vmul.f32 %v365, %v384
      %v387 = vmul.f32 %v367, %v385
      %v388 = vsel %vm353, %v381, 0.0
      %389 = vadd.xlane.f32.xlu0 %v388
      %v390 = vpop.xlane.xlu0 %389
      %v391 = vsel %vm353, %v383, 0.0
      %392 = vadd.xlane.f32.xlu0 %v391
      %v393 = vpop.xlane.xlu0 %392
      %v394 = vadd.f32 %v386, %v390
      %v395 = vadd.f32 %v387, %v393
      %vm396 = vcmask 7168
      %397 = vst.msk [vmem:[#allocation3] sm:$0xff] %vm396, %v394
      %398 = vst.msk [vmem:[#allocation3 + $0x8] sm:$0xff] %vm396, %v395
      %v399 = vld [vmem:[#allocation4] sm:$0xff]
      %v400 = vld [vmem:[#allocation4 + $0x8] sm:$0xff]
      %402 = vset.pattern.permute.xlu0 0
      %403 = vperm.xlu0 %402, %v365
      %v404 = vpop.permute.xlu0 %403
      %407 = vset.pattern.permute.xlu0 0
      %408 = vperm.xlu0 %407, %v367
      %v409 = vpop.permute.xlu0 %408
      %v411 = vmul.f32 %v404, %v399
      %v412 = vmul.f32 %v409, %v400
      %v413 = vpack.c.bf16 %v383, %v381
      %v416 = vunpack.c.l.b16 %v323
      %v417 = vunpack.c.l.b16 %v324
      %v418 = vpack.c.b16 %v417, %v416
      %v421 = vsel %vm353, %v413, 0
      %423 = vmatpush.bf16.msra.mxu0 0
      %424 = vmatpush.bf16.msra.mxu0 0
      %425 = vmatpush.bf16.msra.mxu0 0
      %426 = vmatpush.bf16.msra.mxu0 0
      %427 = vmatpush.bf16.msra.mxu0 0
      %428 = vmatpush.bf16.msra.mxu0 0
      %429 = vmatpush.bf16.msra.mxu0 0
      %430 = vmatpush.bf16.msra.mxu0 %v418
      %431 = vmatmul.bf16.gmra.mxu0 %v421
      %v432 = vpop.f32.mrf.mxu0
      %v433 = vadd.f32 0.0, %v432
      %v434 = vpop.f32.mrf.mxu0
      %v435 = vadd.f32 0.0, %v434
      %436 = vdwg.mxu0
      %v437 = vadd.f32 %v411, %v433
      %v438 = vadd.f32 %v412, %v435
      %439 = vst.msk [vmem:[#allocation4] sm:$0xff] %vm330, %v437
      %440 = vst.msk [vmem:[#allocation4 + $0x8] sm:$0xff] %vm330, %v438
      %441 = vst.msk [vmem:[#allocation2] sm:$0xff] %vm396, %v360
      %442 = vst.msk [vmem:[#allocation2 + $0x8] sm:$0xff] %vm396, %v361
      %v443 = vld [vmem:[%s257] sm:$0xf]
      %v444 = vld [vmem:[%s257 + $0x4] sm:$0xf]
      %v445 = vunpack.c.l.bf16 %v443
      %v446 = vunpack.c.l.bf16 %v444
      %v447 = vmul.f32 %v445, 0.35351563
      %v448 = vmul.f32 %v446, 0.35351563
      %v449 = vpack.c.bf16 %v448, %v447
      %v450 = vld [vmem:[%s267] sm:$0xf]
      %v451 = vld [vmem:[%s267 + $0x4] sm:$0xf]
      %v452 = vld [vmem:[%s277] sm:$0xf]
      %v453 = vld [vmem:[%s277 + $0x4] sm:$0xf]
      %455 = vrot.lane.b32.xlu0 %v449, 120
      %v456 = vpop.permute.xlu0 %455
      %v459 = vunpack.c.l.b16 %v450
      %v460 = vunpack.c.l.b16 %v451
      %v461 = vpack.c.b16 %v460, %v459
      %462 = vrot.lane.b32.xlu0 %v461, 120
      %v463 = vpop.permute.xlu0 %462
      %v465 = vsel %vm330, %v456, 0
      %v468 = vsel %vm330, %v463, 0
      %470 = vmatpush.bf16.xpose.msra.mxu0 0
      %471 = vmatpush.bf16.xpose.msra.mxu0 0
      %472 = vmatpush.bf16.xpose.msra.mxu0 0
      %473 = vmatpush.bf16.xpose.msra.mxu0 0
      %474 = vmatpush.bf16.xpose.msra.mxu0 0
      %475 = vmatpush.bf16.xpose.msra.mxu0 0
      %476 = vmatpush.bf16.xpose.msra.mxu0 0
      %477 = vmatpush.bf16.xpose.msra.mxu0 %v468
      %478 = vmatmul.bf16.gmra.mxu0 %v465
      %v479 = vpop.f32.mrf.mxu0
      %v480 = vadd.f32 0.0, %v479
      %v481 = vpop.f32.mrf.mxu0
      %v482 = vadd.f32 0.0, %v481
      %483 = vdwg.mxu0
      %s484 = scalar_lea.vmem [#allocation2], 16
      %v485 = vld [vmem:[%s484] sm:$0xff]
      %v486 = vld [vmem:[%s484 + $0x8] sm:$0xff]
      %v487 = vsel %vm353, %v480, -inf
      %488 = vmax.xlane.f32.xlu0 %v487
      %v489 = vpop.xlane.xlu0 %488
      %v490 = vsel %vm353, %v482, -inf
      %491 = vmax.xlane.f32.xlu0 %v490
      %v492 = vpop.xlane.xlu0 %491
      %v493 = vmax.f32 %v485, %v489
      %v494 = vmax.f32 %v486, %v492
      %v495 = vsub.f32 %v485, %v493
      %v496 = vsub.f32 %v486, %v494
      %v497 = vmul.f32 %v495, 1.442695
      %v498 = vpow.pop %v497
      %v499 = vmul.f32 %v496, 1.442695
      %v500 = vpow.pop %v499
      %502 = vset.pattern.permute.xlu0 0
      %503 = vperm.xlu0 %502, %v493
      %v504 = vpop.permute.xlu0 %503
      %507 = vset.pattern.permute.xlu0 0
      %508 = vperm.xlu0 %507, %v494
      %v509 = vpop.permute.xlu0 %508
      %v511 = vsub.f32 %v480, %v504
      %v512 = vsub.f32 %v482, %v509
      %v513 = vmul.f32 %v511, 1.442695
      %v514 = vpow.pop %v513
      %v515 = vmul.f32 %v512, 1.442695
      %v516 = vpow.pop %v515
      %s517 = scalar_lea.vmem [#allocation3], 16
      %v518 = vld [vmem:[%s517] sm:$0xff]
      %v519 = vld [vmem:[%s517 + $0x8] sm:$0xff]
      %v520 = vmul.f32 %v498, %v518
      %v521 = vmul.f32 %v500, %v519
      %v522 = vsel %vm353, %v514, 0.0
      %523 = vadd.xlane.f32.xlu0 %v522
      %v524 = vpop.xlane.xlu0 %523
      %v525 = vsel %vm353, %v516, 0.0
      %526 = vadd.xlane.f32.xlu0 %v525
      %v527 = vpop.xlane.xlu0 %526
      %v528 = vadd.f32 %v520, %v524
      %v529 = vadd.f32 %v521, %v527
      %530 = vst.msk [vmem:[%s517] sm:$0xff] %vm396, %v528
      %531 = vst.msk [vmem:[%s517 + $0x8] sm:$0xff] %vm396, %v529
      %v532 = vld [vmem:[#allocation4] sm:$0xff]
      %v533 = vld [vmem:[#allocation4 + $0x8] sm:$0xff]
      %535 = vset.pattern.permute.xlu0 0
      %536 = vperm.xlu0 %535, %v498
      %v537 = vpop.permute.xlu0 %536
      %540 = vset.pattern.permute.xlu0 0
      %541 = vperm.xlu0 %540, %v500
      %v542 = vpop.permute.xlu0 %541
      %v544 = vmul.f32 %v537, %v532
      %v545 = vmul.f32 %v542, %v533
      %v546 = vpack.c.bf16 %v516, %v514
      %v549 = vunpack.c.l.b16 %v452
      %v550 = vunpack.c.l.b16 %v453
      %v551 = vpack.c.b16 %v550, %v549
      %552 = vrot.lane.b32.xlu0 %v551, 120
      %v553 = vpop.permute.xlu0 %552
      %v556 = vsel %vm353, %v546, 0
      %558 = vmatpush.bf16.msra.mxu0 0
      %559 = vmatpush.bf16.msra.mxu0 0
      %560 = vmatpush.bf16.msra.mxu0 0
      %561 = vmatpush.bf16.msra.mxu0 0
      %562 = vmatpush.bf16.msra.mxu0 0
      %563 = vmatpush.bf16.msra.mxu0 0
      %564 = vmatpush.bf16.msra.mxu0 0
      %565 = vmatpush.bf16.msra.mxu0 %v553
      %566 = vmatmul.bf16.gmra.mxu0 %v556
      %v567 = vpop.f32.mrf.mxu0
      %v568 = vadd.f32 0.0, %v567
      %v569 = vpop.f32.mrf.mxu0
      %v570 = vadd.f32 0.0, %v569
      %571 = vdwg.mxu0
      %574 = vrot.lane.b32.xlu0 %v568, 8
      %v575 = vpop.permute.xlu0 %574
      %576 = vrot.lane.b32.xlu0 %v570, 8
      %v577 = vpop.permute.xlu0 %576
      %v580 = vadd.f32 %v544, %v575
      %v581 = vadd.f32 %v545, %v577
      %vm582 = vcmask 130112
      %583 = vst.msk [vmem:[#allocation4] sm:$0xff] %vm582, %v580
      %584 = vst.msk [vmem:[#allocation4 + $0x8] sm:$0xff] %vm582, %v581
      %585 = vst.msk [vmem:[%s484] sm:$0xff] %vm396, %v493
      %586 = vst.msk [vmem:[%s484 + $0x8] sm:$0xff] %vm396, %v494
      %v587 = vld [vmem:[%s257] sm:$0xf]
      %v588 = vld [vmem:[%s257 + $0x4] sm:$0xf]
      %v589 = vunpack.c.l.bf16 %v587
      %v590 = vunpack.c.l.bf16 %v588
      %v591 = vmul.f32 %v589, 0.35351563
      %v592 = vmul.f32 %v590, 0.35351563
      %v593 = vpack.c.bf16 %v592, %v591
      %v594 = vld [vmem:[%s267] sm:$0xf]
      %v595 = vld [vmem:[%s267 + $0x4] sm:$0xf]
      %v596 = vld [vmem:[%s277] sm:$0xf]
      %v597 = vld [vmem:[%s277 + $0x4] sm:$0xf]
      %599 = vrot.lane.b32.xlu0 %v593, 112
      %v600 = vpop.permute.xlu0 %599
      %v603 = vunpack.c.l.b16 %v594
      %v604 = vunpack.c.l.b16 %v595
      %v605 = vpack.c.b16 %v604, %v603
      %606 = vrot.lane.b32.xlu0 %v605, 112
      %v607 = vpop.permute.xlu0 %606
      %v609 = vsel %vm330, %v600, 0
      %v612 = vsel %vm330, %v607, 0
      %614 = vmatpush.bf16.xpose.msra.mxu0 0
      %615 = vmatpush.bf16.xpose.msra.mxu0 0
      %616 = vmatpush.bf16.xpose.msra.mxu0 0
      %617 = vmatpush.bf16.xpose.msra.mxu0 0
      %618 = vmatpush.bf16.xpose.msra.mxu0 0
      %619 = vmatpush.bf16.xpose.msra.mxu0 0
      %620 = vmatpush.bf16.xpose.msra.mxu0 0
      %621 = vmatpush.bf16.xpose.msra.mxu0 %v612
      %622 = vmatmul.bf16.gmra.mxu0 %v609
      %v623 = vpop.f32.mrf.mxu0
      %v624 = vadd.f32 0.0, %v623
      %v625 = vpop.f32.mrf.mxu0
      %v626 = vadd.f32 0.0, %v625
      %627 = vdwg.mxu0
      %s628 = scalar_lea.vmem [#allocation2], 32
      %v629 = vld [vmem:[%s628] sm:$0xff]
      %v630 = vld [vmem:[%s628 + $0x8] sm:$0xff]
      %v631 = vsel %vm353, %v624, -inf
      %632 = vmax.xlane.f32.xlu0 %v631
      %v633 = vpop.xlane.xlu0 %632
      %v634 = vsel %vm353, %v626, -inf
      %635 = vmax.xlane.f32.xlu0 %v634
      %v636 = vpop.xlane.xlu0 %635
      %v637 = vmax.f32 %v629, %v633
      %v638 = vmax.f32 %v630, %v636
      %v639 = vsub.f32 %v629, %v637
      %v640 = vsub.f32 %v630, %v638
      %v641 = vmul.f32 %v639, 1.442695
      %v642 = vpow.pop %v641
      %v643 = vmul.f32 %v640, 1.442695
      %v644 = vpow.pop %v643
      %646 = vset.pattern.permute.xlu0 0
      %647 = vperm.xlu0 %646, %v637
      %v648 = vpop.permute.xlu0 %647
      %651 = vset.pattern.permute.xlu0 0
      %652 = vperm.xlu0 %651, %v638
      %v653 = vpop.permute.xlu0 %652
      %v655 = vsub.f32 %v624, %v648
      %v656 = vsub.f32 %v626, %v653
      %v657 = vmul.f32 %v655, 1.442695
      %v658 = vpow.pop %v657
      %v659 = vmul.f32 %v656, 1.442695
      %v660 = vpow.pop %v659
      %s661 = scalar_lea.vmem [#allocation3], 32
      %v662 = vld [vmem:[%s661] sm:$0xff]
      %v663 = vld [vmem:[%s661 + $0x8] sm:$0xff]
      %v664 = vmul.f32 %v642, %v662
      %v665 = vmul.f32 %v644, %v663
      %v666 = vsel %vm353, %v658, 0.0
      %667 = vadd.xlane.f32.xlu0 %v666
      %v668 = vpop.xlane.xlu0 %667
      %v669 = vsel %vm353, %v660, 0.0
      %670 = vadd.xlane.f32.xlu0 %v669
      %v671 = vpop.xlane.xlu0 %670
      %v672 = vadd.f32 %v664, %v668
      %v673 = vadd.f32 %v665, %v671
      %674 = vst.msk [vmem:[%s661] sm:$0xff] %vm396, %v672
      %675 = vst.msk [vmem:[%s661 + $0x8] sm:$0xff] %vm396, %v673
      %v676 = vld [vmem:[#allocation4] sm:$0xff]
      %v677 = vld [vmem:[#allocation4 + $0x8] sm:$0xff]
      %679 = vset.pattern.permute.xlu0 0
      %680 = vperm.xlu0 %679, %v642
      %v681 = vpop.permute.xlu0 %680
      %684 = vset.pattern.permute.xlu0 0
      %685 = vperm.xlu0 %684, %v644
      %v686 = vpop.permute.xlu0 %685
      %v688 = vmul.f32 %v681, %v676
      %v689 = vmul.f32 %v686, %v677
      %v690 = vpack.c.bf16 %v660, %v658
      %v693 = vunpack.c.l.b16 %v596
      %v694 = vunpack.c.l.b16 %v597
      %v695 = vpack.c.b16 %v694, %v693
      %696 = vrot.lane.b32.xlu0 %v695, 112
      %v697 = vpop.permute.xlu0 %696
      %v700 = vsel %vm353, %v690, 0
      %702 = vmatpush.bf16.msra.mxu0 0
      %703 = vmatpush.bf16.msra.mxu0 0
      %704 = vmatpush.bf16.msra.mxu0 0
      %705 = vmatpush.bf16.msra.mxu0 0
      %706 = vmatpush.bf16.msra.mxu0 0
      %707 = vmatpush.bf16.msra.mxu0 0
      %708 = vmatpush.bf16.msra.mxu0 0
      %709 = vmatpush.bf16.msra.mxu0 %v697
      %710 = vmatmul.bf16.gmra.mxu0 %v700
      %v711 = vpop.f32.mrf.mxu0
      %v712 = vadd.f32 0.0, %v711
      %v713 = vpop.f32.mrf.mxu0
      %v714 = vadd.f32 0.0, %v713
      %715 = vdwg.mxu0
      %718 = vrot.lane.b32.xlu0 %v712, 16
      %v719 = vpop.permute.xlu0 %718
      %720 = vrot.lane.b32.xlu0 %v714, 16
      %v721 = vpop.permute.xlu0 %720
      %v724 = vadd.f32 %v688, %v719
      %v725 = vadd.f32 %v689, %v721
      %vm726 = vcmask 195712
      %727 = vst.msk [vmem:[#allocation4] sm:$0xff] %vm726, %v724
      %728 = vst.msk [vmem:[#allocation4 + $0x8] sm:$0xff] %vm726, %v725
      %729 = vst.msk [vmem:[%s628] sm:$0xff] %vm396, %v637
      %730 = vst.msk [vmem:[%s628 + $0x8] sm:$0xff] %vm396, %v638
      %v731 = vld [vmem:[%s257] sm:$0xf]
      %v732 = vld [vmem:[%s257 + $0x4] sm:$0xf]
      %v733 = vunpack.c.l.bf16 %v731
      %v734 = vunpack.c.l.bf16 %v732
      %v735 = vmul.f32 %v733, 0.35351563
      %v736 = vmul.f32 %v734, 0.35351563
      %v737 = vpack.c.bf16 %v736, %v735
      %v738 = vld [vmem:[%s267] sm:$0xf]
      %v739 = vld [vmem:[%s267 + $0x4] sm:$0xf]
      %v740 = vld [vmem:[%s277] sm:$0xf]
      %v741 = vld [vmem:[%s277 + $0x4] sm:$0xf]
      %743 = vrot.lane.b32.xlu0 %v737, 104
      %v744 = vpop.permute.xlu0 %743
      %v747 = vunpack.c.l.b16 %v738
      %v748 = vunpack.c.l.b16 %v739
      %v749 = vpack.c.b16 %v748, %v747
      %750 = vrot.lane.b32.xlu0 %v749, 104
      %v751 = vpop.permute.xlu0 %750
      %v753 = vsel %vm330, %v744, 0
      %v756 = vsel %vm330, %v751, 0
      %758 = vmatpush.bf16.xpose.msra.mxu0 0
      %759 = vmatpush.bf16.xpose.msra.mxu0 0
      %760 = vmatpush.bf16.xpose.msra.mxu0 0
      %761 = vmatpush.bf16.xpose.msra.mxu0 0
      %762 = vmatpush.bf16.xpose.msra.mxu0 0
      %763 = vmatpush.bf16.xpose.msra.mxu0 0
      %764 = vmatpush.bf16.xpose.msra.mxu0 0
      %765 = vmatpush.bf16.xpose.msra.mxu0 %v756
      %766 = vmatmul.bf16.gmra.mxu0 %v753
      %v767 = vpop.f32.mrf.mxu0
      %v768 = vadd.f32 0.0, %v767
      %v769 = vpop.f32.mrf.mxu0
      %v770 = vadd.f32 0.0, %v769
      %771 = vdwg.mxu0
      %s772 = scalar_lea.vmem [#allocation2], 48
      %v773 = vld [vmem:[%s772] sm:$0xff]
      %v774 = vld [vmem:[%s772 + $0x8] sm:$0xff]
      %v775 = vsel %vm353, %v768, -inf
      %776 = vmax.xlane.f32.xlu0 %v775
      %v777 = vpop.xlane.xlu0 %776
      %v778 = vsel %vm353, %v770, -inf
      %779 = vmax.xlane.f32.xlu0 %v778
      %v780 = vpop.xlane.xlu0 %779
      %v781 = vmax.f32 %v773, %v777
      %v782 = vmax.f32 %v774, %v780
      %v783 = vsub.f32 %v773, %v781
      %v784 = vsub.f32 %v774, %v782
      %v785 = vmul.f32 %v783, 1.442695
      %v786 = vpow.pop %v785
      %v787 = vmul.f32 %v784, 1.442695
      %v788 = vpow.pop %v787
      %790 = vset.pattern.permute.xlu0 0
      %791 = vperm.xlu0 %790, %v781
      %v792 = vpop.permute.xlu0 %791
      %795 = vset.pattern.permute.xlu0 0
      %796 = vperm.xlu0 %795, %v782
      %v797 = vpop.permute.xlu0 %796
      %v799 = vsub.f32 %v768, %v792
      %v800 = vsub.f32 %v770, %v797
      %v801 = vmul.f32 %v799, 1.442695
      %v802 = vpow.pop %v801
      %v803 = vmul.f32 %v800, 1.442695
      %v804 = vpow.pop %v803
      %s805 = scalar_lea.vmem [#allocation3], 48
      %v806 = vld [vmem:[%s805] sm:$0xff]
      %v807 = vld [vmem:[%s805 + $0x8] sm:$0xff]
      %v808 = vmul.f32 %v786, %v806
      %v809 = vmul.f32 %v788, %v807
      %v810 = vsel %vm353, %v802, 0.0
      %811 = vadd.xlane.f32.xlu0 %v810
      %v812 = vpop.xlane.xlu0 %811
      %v813 = vsel %vm353, %v804, 0.0
      %814 = vadd.xlane.f32.xlu0 %v813
      %v815 = vpop.xlane.xlu0 %814
      %v816 = vadd.f32 %v808, %v812
      %v817 = vadd.f32 %v809, %v815
      %818 = vst.msk [vmem:[%s805] sm:$0xff] %vm396, %v816
      %819 = vst.msk [vmem:[%s805 + $0x8] sm:$0xff] %vm396, %v817
      %v820 = vld [vmem:[#allocation4] sm:$0xff]
      %v821 = vld [vmem:[#allocation4 + $0x8] sm:$0xff]
      %823 = vset.pattern.permute.xlu0 0
      %824 = vperm.xlu0 %823, %v786
      %v825 = vpop.permute.xlu0 %824
      %828 = vset.pattern.permute.xlu0 0
      %829 = vperm.xlu0 %828, %v788
      %v830 = vpop.permute.xlu0 %829
      %v832 = vmul.f32 %v825, %v820
      %v833 = vmul.f32 %v830, %v821
      %v834 = vpack.c.bf16 %v804, %v802
      %v837 = vunpack.c.l.b16 %v740
      %v838 = vunpack.c.l.b16 %v741
      %v839 = vpack.c.b16 %v838, %v837
      %840 = vrot.lane.b32.xlu0 %v839, 104
      %v841 = vpop.permute.xlu0 %840
      %v844 = vsel %vm353, %v834, 0
      %846 = vmatpush.bf16.msra.mxu0 0
      %847 = vmatpush.bf16.msra.mxu0 0
      %848 = vmatpush.bf16.msra.mxu0 0
      %849 = vmatpush.bf16.msra.mxu0 0
      %850 = vmatpush.bf16.msra.mxu0 0
      %851 = vmatpush.bf16.msra.mxu0 0
      %852 = vmatpush.bf16.msra.mxu0 0
      %853 = vmatpush.bf16.msra.mxu0 %v841
      %854 = vmatmul.bf16.gmra.mxu0 %v844
      %v855 = vpop.f32.mrf.mxu0
      %v856 = vadd.f32 0.0, %v855
      %v857 = vpop.f32.mrf.mxu0
      %v858 = vadd.f32 0.0, %v857
      %859 = vdwg.mxu0
      %862 = vrot.lane.b32.xlu0 %v856, 24
      %v863 = vpop.permute.xlu0 %862
      %864 = vrot.lane.b32.xlu0 %v858, 24
      %v865 = vpop.permute.xlu0 %864
      %v868 = vadd.f32 %v832, %v863
      %v869 = vadd.f32 %v833, %v865
      %vm870 = vcmask 261312
      %871 = vst.msk [vmem:[#allocation4] sm:$0xff] %vm870, %v868
      %872 = vst.msk [vmem:[#allocation4 + $0x8] sm:$0xff] %vm870, %v869
      %873 = vst.msk [vmem:[%s772] sm:$0xff] %vm396, %v781
      %874 = vst.msk [vmem:[%s772 + $0x8] sm:$0xff] %vm396, %v782
      // Predicated region
      $region37: #{clap_audio_encoder_forward.14} parent=31 // pred_check
        %p875 = pneg %p290
      $region38: #{clap_audio_encoder_forward.14} parent=31 // pred_check_branch
        %877 = sbr.rel (%p875) target = $region40
      $region39: #{clap_audio_encoder_forward.14} parent=31 // pred_region
        %v878 = vld [vmem:[#allocation3] sm:$0xff]
        %v879 = vld [vmem:[#allocation3 + $0x8] sm:$0xff]
        %v880 = vrcp.pop %v878
        %v881 = vrcp.pop %v879
        %v882 = vld [vmem:[#allocation4] sm:$0xff]
        %v883 = vld [vmem:[#allocation4 + $0x8] sm:$0xff]
        %885 = vset.pattern.permute.xlu0 0
        %886 = vperm.xlu0 %885, %v880
        %v887 = vpop.permute.xlu0 %886
        %890 = vset.pattern.permute.xlu0 0
        %891 = vperm.xlu0 %890, %v881
        %v892 = vpop.permute.xlu0 %891
        %v894 = vmul.f32 %v882, %v887
        %v895 = vmul.f32 %v883, %v892
        %v896 = vpack.c.bf16 %v894, %v894
        %v897 = vpack.c.bf16 %v895, %v895
        %vm898 = vcmask 60416
        %899 = vst.msk [vmem:[%s287] sm:$0xf] %vm898, %v896
        %900 = vst.msk [vmem:[%s287 + $0x4] sm:$0xf] %vm898, %v897
        %v901 = vld [vmem:[%s517] sm:$0xff]
        %v902 = vld [vmem:[%s517 + $0x8] sm:$0xff]
        %v903 = vrcp.pop %v901
        %v904 = vrcp.pop %v902
        %v905 = vld [vmem:[#allocation4] sm:$0xff]
        %v906 = vld [vmem:[#allocation4 + $0x8] sm:$0xff]
        %908 = vset.pattern.permute.xlu0 0
        %909 = vperm.xlu0 %908, %v903
        %v910 = vpop.permute.xlu0 %909
        %913 = vset.pattern.permute.xlu0 0
        %914 = vperm.xlu0 %913, %v904
        %v915 = vpop.permute.xlu0 %914
        %v917 = vmul.f32 %v905, %v910
        %v918 = vmul.f32 %v906, %v915
        %v919 = vpack.c.bf16 %v917, %v917
        %v920 = vpack.c.bf16 %v918, %v918
        %vm921 = vcmask 126016
        %922 = vst.msk [vmem:[%s287] sm:$0xf] %vm921, %v919
        %923 = vst.msk [vmem:[%s287 + $0x4] sm:$0xf] %vm921, %v920
        %v924 = vld [vmem:[%s661] sm:$0xff]
        %v925 = vld [vmem:[%s661 + $0x8] sm:$0xff]
        %v926 = vrcp.pop %v924
        %v927 = vrcp.pop %v925
        %v928 = vld [vmem:[#allocation4] sm:$0xff]
        %v929 = vld [vmem:[#allocation4 + $0x8] sm:$0xff]
        %931 = vset.pattern.permute.xlu0 0
        %932 = vperm.xlu0 %931, %v926
        %v933 = vpop.permute.xlu0 %932
        %936 = vset.pattern.permute.xlu0 0
        %937 = vperm.xlu0 %936, %v927
        %v938 = vpop.permute.xlu0 %937
        %v940 = vmul.f32 %v928, %v933
        %v941 = vmul.f32 %v929, %v938
        %v942 = vpack.c.bf16 %v940, %v940
        %v943 = vpack.c.bf16 %v941, %v941
        %vm944 = vcmask 191616
        %945 = vst.msk [vmem:[%s287] sm:$0xf] %vm944, %v942
        %946 = vst.msk [vmem:[%s287 + $0x4] sm:$0xf] %vm944, %v943
        %v947 = vld [vmem:[%s805] sm:$0xff]
        %v948 = vld [vmem:[%s805 + $0x8] sm:$0xff]
        %v949 = vrcp.pop %v947
        %v950 = vrcp.pop %v948
        %v951 = vld [vmem:[#allocation4] sm:$0xff]
        %v952 = vld [vmem:[#allocation4 + $0x8] sm:$0xff]
        %954 = vset.pattern.permute.xlu0 0
        %955 = vperm.xlu0 %954, %v949
        %v956 = vpop.permute.xlu0 %955
        %959 = vset.pattern.permute.xlu0 0
        %960 = vperm.xlu0 %959, %v950
        %v961 = vpop.permute.xlu0 %960
        %v963 = vmul.f32 %v951, %v956
        %v964 = vmul.f32 %v952, %v961
        %v965 = vpack.c.bf16 %v963, %v963
        %v966 = vpack.c.bf16 %v964, %v964
        %vm967 = vcmask 257216
        %968 = vst.msk [vmem:[%s287] sm:$0xf] %vm967, %v965
        %969 = vst.msk [vmem:[%s287 + $0x4] sm:$0xf] %vm967, %v966
      $region40: #{clap_audio_encoder_forward.14} parent=31 // pred_fallthru
        _
      %s970 = smul.u32 2, %s20
      %p971 = scmp.lt.s32.totalorder %s19, 1
      %s972 = scalar_select %p971, %s19, 1
      %p973 = scmp.lt.s32.totalorder %s970, 1
      %s974 = scalar_select %p973, %s970, 1
      %s975 = smul.addr %s972, 2
      %s976 = sadd.s32 %s974, %s975
      %s977 = smul.addr %s976, 4
      %s978 = scalar_lea.vmem %s3, %s977
      // Predicated region
      $region41: #{clap_audio_encoder_forward.14} parent=31 // pred_check
        %p979 = pneg %p137
      $region42: #{clap_audio_encoder_forward.14} parent=31 // pred_check_branch
        %981 = sbr.rel (%p979) target = $region44
      $region43: #{clap_audio_encoder_forward.14} parent=31 // pred_region
        %s982 = smul.u32 2, %s20
      $region44: #{clap_audio_encoder_forward.14} parent=31 // pred_fallthru
        _
    $region32: #{clap_audio_encoder_forward.14} parent=5 // pred_fallthru
      _
    %p983 = scmp.le.s32.totalorder 2, %s9
    // Predicated region
    $region45: #{clap_audio_encoder_forward.14} parent=5 // pred_check
      %p984 = pneg %p983
    $region46: #{clap_audio_encoder_forward.14} parent=5 // pred_check_branch
      %986 = sbr.rel (%p984) target = $region48
    $region47: #{clap_audio_encoder_forward.14} parent=5 // pred_region
      %s987 = ssub.s32 %s9, 2
      // Predicated region
      $region49: #{clap_audio_encoder_forward.14} parent=47 // pred_check
        %p988 = pneg %p143
      $region50: #{clap_audio_encoder_forward.14} parent=47 // pred_check_branch
        %990 = sbr.rel (%p988) target = $region52
      $region51: #{clap_audio_encoder_forward.14} parent=47 // pred_region
        %s991 = smul.u32 2, %s23
        %p992 = scmp.lt.s32.totalorder %s22, 1
        %s993 = scalar_select %p992, %s22, 1
        %p994 = scmp.lt.s32.totalorder %s991, 1
        %s995 = scalar_select %p994, %s991, 1
        %s996 = smul.addr %s993, 2
        %s997 = sadd.s32 %s995, %s996
        %s998 = smul.addr %s997, 4
        %s999 = scalar_lea.vmem %s3, %s998
      $region52: #{clap_audio_encoder_forward.14} parent=47 // pred_fallthru
        _
    $region48: #{clap_audio_encoder_forward.14} parent=5 // pred_fallthru
      _
  $region6: #{clap_audio_encoder_forward.14} parent=0 // loop_footer
    %s13 = sadd.s32 1, %s9
  $region7: #{clap_audio_encoder_forward.14} parent=0 // loop_footer_branch
    %8 = sbr.rel target = $region3
  $region8: #{clap_audio_encoder_forward.14} parent=0 // loop_exit
    _

// kernel: clap_audio_encoder_forward.17
$region0: #{clap_audio_encoder_forward.17}
  #allocation0 [shape = 'u32[]', space=smem, size = 0x4, offset = 0x4, fixed_abs, tag = 'smem constant byte address 0x4 - core index']
  #allocation1 [shape = 'u32[72,128]{1,0:T(1,128)}', space=vmem, size = 0x9000, scoped, tag = 'internal scratch']
  #allocation2 [shape = 'f32[32,32]{1,0:T(8,128)}', space=vmem, size = 0x4000, scoped, tag = 'scratch operand']
  %s0 = inlined_call_operand.vmem [shape: bf16[32,64], index: 0, kind: input, shape index: {}]
  %s1 = inlined_call_operand.vmem [shape: bf16[64,32], index: 1, kind: input, shape index: {}]
  %s2 = inlined_call_operand.vmem [shape: f32[1,32], index: 2, kind: input, shape index: {}]
  %s3 = inlined_call_operand.vmem [shape: bf16[32,32], index: 3, kind: input, shape index: {}]
  %s4 = inlined_call_operand.vmem [shape: bf16[32,32], index: 4, kind: output, shape index: {}]
  %s5 = sld [smem:[#allocation0]]
  $region34: #{clap_audio_encoder_forward.17} parent=0
    _
  %s7 = ssub.s32 1, %s5
  %s8 = scalar_select 0, %s7, %s5
  // Predicated region
  $region2: #{clap_audio_encoder_forward.17} parent=0 // pred_check
    _
  $region3: #{clap_audio_encoder_forward.17} parent=0 // pred_check_branch
    %10 = sbr.rel (0) target = $region5
  $region4: #{clap_audio_encoder_forward.17} parent=0 // pred_region
    _
  $region5: #{clap_audio_encoder_forward.17} parent=0 // pred_fallthru
    _
  // Predicated region
  $region6: #{clap_audio_encoder_forward.17} parent=0 // pred_check
    _
  $region7: #{clap_audio_encoder_forward.17} parent=0 // pred_check_branch
    %12 = sbr.rel (0) target = $region9
  $region8: #{clap_audio_encoder_forward.17} parent=0 // pred_region
    _
  $region9: #{clap_audio_encoder_forward.17} parent=0 // pred_fallthru
    _
  // Predicated region
  $region10: #{clap_audio_encoder_forward.17} parent=0 // pred_check
    _
  $region11: #{clap_audio_encoder_forward.17} parent=0 // pred_check_branch
    %14 = sbr.rel (0) target = $region13
  $region12: #{clap_audio_encoder_forward.17} parent=0 // pred_region
    _
  $region13: #{clap_audio_encoder_forward.17} parent=0 // pred_fallthru
    _
  // Predicated region
  $region14: #{clap_audio_encoder_forward.17} parent=0 // pred_check
    _
  $region15: #{clap_audio_encoder_forward.17} parent=0 // pred_check_branch
    %16 = sbr.rel (0) target = $region17
  $region16: #{clap_audio_encoder_forward.17} parent=0 // pred_region
    _
  $region17: #{clap_audio_encoder_forward.17} parent=0 // pred_fallthru
    _
  %p18 = scmp.eq.s32.totalorder 0, 0
  // Predicated region
  $region18: #{clap_audio_encoder_forward.17} parent=0 // pred_check
    %p19 = pneg %p18
  $region19: #{clap_audio_encoder_forward.17} parent=0 // pred_check_branch
    %21 = sbr.rel (%p19) target = $region21
  $region20: #{clap_audio_encoder_forward.17} parent=0 // pred_region
    %vm22 = vcmask 261120
    %23 = vst.msk [vmem:[#allocation2] sm:$0xff] %vm22, 0.0
    %24 = vst.msk [vmem:[#allocation2 + $0x8] sm:$0xff] %vm22, 0.0
    %25 = vst.msk [vmem:[#allocation2 + $0x10] sm:$0xff] %vm22, 0.0
    %26 = vst.msk [vmem:[#allocation2 + $0x18] sm:$0xff] %vm22, 0.0
  $region21: #{clap_audio_encoder_forward.17} parent=0 // pred_fallthru
    _
  %v27 = vld [vmem:[#allocation2] sm:$0xff]
  %v28 = vld [vmem:[#allocation2 + $0x8] sm:$0xff]
  %v29 = vld [vmem:[#allocation2 + $0x10] sm:$0xff]
  %v30 = vld [vmem:[#allocation2 + $0x18] sm:$0xff]
  %v31 = vld [vmem:[%s0] sm:$0xf]
  %v32 = vld [vmem:[%s0 + $0x4] sm:$0xf]
  %v33 = vld [vmem:[%s0 + $0x8] sm:$0xf]
  %v34 = vld [vmem:[%s0 + $0xc] sm:$0xf]
  %v35 = vld [vmem:[%s1] sm:$0xf]
  %v36 = vld [vmem:[%s1 + $0x4] sm:$0xf]
  %v37 = vld [vmem:[%s1 + $0x8] sm:$0xf]
  %v38 = vld [vmem:[%s1 + $0xc] sm:$0xf]
  %v39 = vld [vmem:[%s1 + $0x10] sm:$0xf]
  %v40 = vld [vmem:[%s1 + $0x14] sm:$0xf]
  %v41 = vld [vmem:[%s1 + $0x18] sm:$0xf]
  %v42 = vld [vmem:[%s1 + $0x1c] sm:$0xf]
  %v47 = vunpack.c.l.b16 %v31
  %v48 = vunpack.c.l.b16 %v32
  %v49 = vunpack.c.l.b16 %v33
  %v50 = vunpack.c.l.b16 %v34
  %v51 = vpack.c.b16 %v48, %v47
  %v52 = vpack.c.b16 %v50, %v49
  %v61 = vunpack.c.l.b16 %v35
  %v62 = vunpack.c.l.b16 %v36
  %v63 = vunpack.c.l.b16 %v37
  %v64 = vunpack.c.l.b16 %v38
  %v65 = vunpack.c.l.b16 %v39
  %v66 = vunpack.c.l.b16 %v40
  %v67 = vunpack.c.l.b16 %v41
  %v68 = vunpack.c.l.b16 %v42
  %v69 = vpack.c.b16 %v62, %v61
  %v70 = vpack.c.b16 %v64, %v63
  %v71 = vpack.c.b16 %v66, %v65
  %v72 = vpack.c.b16 %v68, %v67
  %vm77 = vcmask 523264
  %v79 = vsel %vm77, %v51, 0
  %v82 = vsel %vm77, %v52, 0
  %84 = vmatpush.bf16.msra.mxu0 0
  %85 = vmatpush.bf16.msra.mxu0 0
  %86 = vmatpush.bf16.msra.mxu0 0
  %87 = vmatpush.bf16.msra.mxu0 0
  %88 = vmatpush.bf16.msra.mxu0 %v72
  %89 = vmatpush.bf16.msra.mxu0 %v71
  %90 = vmatpush.bf16.msra.mxu0 %v70
  %91 = vmatpush.bf16.msra.mxu0 %v69
  %92 = vmatmul.bf16.gmra.mxu0 %v79
  %v93 = vpop.f32.mrf.mxu0
  %v94 = vadd.f32 0.0, %v93
  %v95 = vpop.f32.mrf.mxu0
  %v96 = vadd.f32 0.0, %v95
  %97 = vmatmul.bf16.gmra.mxu0 %v82
  %v98 = vpop.f32.mrf.mxu0
  %v99 = vadd.f32 0.0, %v98
  %v100 = vpop.f32.mrf.mxu0
  %v101 = vadd.f32 0.0, %v100
  %102 = vdwg.mxu0
  %v103 = vadd.f32 %v27, %v94
  %v104 = vadd.f32 %v28, %v96
  %v105 = vadd.f32 %v29, %v99
  %v106 = vadd.f32 %v30, %v101
  %vm107 = vcmask 261120
  %108 = vst.msk [vmem:[#allocation2] sm:$0xff] %vm107, %v103
  %109 = vst.msk [vmem:[#allocation2 + $0x8] sm:$0xff] %vm107, %v104
  %110 = vst.msk [vmem:[#allocation2 + $0x10] sm:$0xff] %vm107, %v105
  %111 = vst.msk [vmem:[#allocation2 + $0x18] sm:$0xff] %vm107, %v106
  // Predicated region
  $region22: #{clap_audio_encoder_forward.17} parent=0 // pred_check
    %p112 = pneg %p18
  $region23: #{clap_audio_encoder_forward.17} parent=0 // pred_check_branch
    %114 = sbr.rel (%p112) target = $region25
  $region24: #{clap_audio_encoder_forward.17} parent=0 // pred_region
    %v115 = vld [vmem:[#allocation2] sm:$0xff]
    %v116 = vld [vmem:[#allocation2 + $0x8] sm:$0xff]
    %v117 = vld [vmem:[#allocation2 + $0x10] sm:$0xff]
    %v118 = vld [vmem:[#allocation2 + $0x18] sm:$0xff]
    %v119 = vld [vmem:[%s2] sm:$0x1]
    %v121 = vperm.slane %v119, 0
    %v123 = vadd.f32 %v115, %v121
    %v124 = vadd.f32 %v116, %v121
    %v125 = vadd.f32 %v117, %v121
    %v126 = vadd.f32 %v118, %v121
    %v127 = vld [vmem:[%s3] sm:$0xf]
    %v128 = vld [vmem:[%s3 + $0x4] sm:$0xf]
    %v129 = vld [vmem:[%s3 + $0x8] sm:$0xf]
    %v130 = vld [vmem:[%s3 + $0xc] sm:$0xf]
    %v131 = vunpack.c.l.bf16 %v127
    %v132 = vunpack.c.l.bf16 %v128
    %v133 = vunpack.c.l.bf16 %v129
    %v134 = vunpack.c.l.bf16 %v130
    %v135 = vadd.f32 %v123, %v131
    %v136 = vadd.f32 %v124, %v132
    %v137 = vadd.f32 %v125, %v133
    %v138 = vadd.f32 %v126, %v134
    %v139 = vpack.c.bf16 %v135, %v135
    %v140 = vpack.c.bf16 %v136, %v136
    %v141 = vpack.c.bf16 %v137, %v137
    %v142 = vpack.c.bf16 %v138, %v138
    %vm143 = vcmask 257024
    %144 = vst.msk [vmem:[%s4] sm:$0xf] %vm143, %v139
    %145 = vst.msk [vmem:[%s4 + $0x4] sm:$0xf] %vm143, %v140
    %146 = vst.msk [vmem:[%s4 + $0x8] sm:$0xf] %vm143, %v141
    %147 = vst.msk [vmem:[%s4 + $0xc] sm:$0xf] %vm143, %v142
  $region25: #{clap_audio_encoder_forward.17} parent=0 // pred_fallthru
    _
  // Predicated region
  $region26: #{clap_audio_encoder_forward.17} parent=0 // pred_check
    _
  $region27: #{clap_audio_encoder_forward.17} parent=0 // pred_check_branch
    %149 = sbr.rel (0) target = $region29
  $region28: #{clap_audio_encoder_forward.17} parent=0 // pred_region
    _
  $region29: #{clap_audio_encoder_forward.17} parent=0 // pred_fallthru
    _
  // Predicated region
  $region30: #{clap_audio_encoder_forward.17} parent=0 // pred_check
    _
  $region31: #{clap_audio_encoder_forward.17} parent=0 // pred_check_branch
    %151 = sbr.rel (0) target = $region33
  $region32: #{clap_audio_encoder_forward.17} parent=0 // pred_region
    _
  $region33: #{clap_audio_encoder_forward.17} parent=0 // pred_fallthru
    _

// kernel: clap_audio_encoder_forward.16
$region0: #{clap_audio_encoder_forward.16}
  #allocation0 [shape = 'u32[]', space=smem, size = 0x4, offset = 0x4, fixed_abs, tag = 'smem constant byte address 0x4 - core index']
  #allocation1 [shape = 'u32[72,128]{1,0:T(1,128)}', space=vmem, size = 0x9000, scoped, tag = 'internal scratch']
  %s0 = inlined_call_operand.vmem [shape: bf16[32,32], index: 0, kind: input, shape index: {}]
  %s1 = inlined_call_operand.vmem [shape: f32[1,32], index: 1, kind: input, shape index: {}]
  %s2 = inlined_call_operand.vmem [shape: f32[1,32], index: 2, kind: input, shape index: {}]
  %s3 = inlined_call_operand.vmem [shape: bf16[32,64], index: 3, kind: input, shape index: {}]
  %s4 = inlined_call_operand.vmem [shape: f32[1,64], index: 4, kind: input, shape index: {}]
  %s5 = inlined_call_operand.vmem [shape: bf16[32,64], index: 5, kind: output, shape index: {}]
  %s6 = sld [smem:[#allocation0]]
  $region30: #{clap_audio_encoder_forward.16} parent=0
    _
  %s8 = ssub.s32 1, %s6
  %s9 = scalar_select 0, %s8, %s6
  // Predicated region
  $region2: #{clap_audio_encoder_forward.16} parent=0 // pred_check
    _
  $region3: #{clap_audio_encoder_forward.16} parent=0 // pred_check_branch
    %11 = sbr.rel (0) target = $region5
  $region4: #{clap_audio_encoder_forward.16} parent=0 // pred_region
    _
  $region5: #{clap_audio_encoder_forward.16} parent=0 // pred_fallthru
    _
  // Predicated region
  $region6: #{clap_audio_encoder_forward.16} parent=0 // pred_check
    _
  $region7: #{clap_audio_encoder_forward.16} parent=0 // pred_check_branch
    %13 = sbr.rel (0) target = $region9
  $region8: #{clap_audio_encoder_forward.16} parent=0 // pred_region
    _
  $region9: #{clap_audio_encoder_forward.16} parent=0 // pred_fallthru
    _
  // Predicated region
  $region10: #{clap_audio_encoder_forward.16} parent=0 // pred_check
    _
  $region11: #{clap_audio_encoder_forward.16} parent=0 // pred_check_branch
    %15 = sbr.rel (0) target = $region13
  $region12: #{clap_audio_encoder_forward.16} parent=0 // pred_region
    _
  $region13: #{clap_audio_encoder_forward.16} parent=0 // pred_fallthru
    _
  // Predicated region
  $region14: #{clap_audio_encoder_forward.16} parent=0 // pred_check
    _
  $region15: #{clap_audio_encoder_forward.16} parent=0 // pred_check_branch
    %17 = sbr.rel (0) target = $region17
  $region16: #{clap_audio_encoder_forward.16} parent=0 // pred_region
    _
  $region17: #{clap_audio_encoder_forward.16} parent=0 // pred_fallthru
    _
  // Predicated region
  $region18: #{clap_audio_encoder_forward.16} parent=0 // pred_check
    _
  $region19: #{clap_audio_encoder_forward.16} parent=0 // pred_check_branch
    %19 = sbr.rel (0) target = $region21
  $region20: #{clap_audio_encoder_forward.16} parent=0 // pred_region
    _
  $region21: #{clap_audio_encoder_forward.16} parent=0 // pred_fallthru
    _
  %v21 = vld [vmem:[%s0] sm:$0xf]
  %v22 = vld [vmem:[%s0 + $0x4] sm:$0xf]
  %v23 = vld [vmem:[%s0 + $0x8] sm:$0xf]
  %v24 = vld [vmem:[%s0 + $0xc] sm:$0xf]
  %v25 = vunpack.c.l.bf16 %v21
  %v26 = vunpack.c.l.bf16 %v22
  %v27 = vunpack.c.l.bf16 %v23
  %v28 = vunpack.c.l.bf16 %v24
  %vm29 = vcmask 261120
  %v30 = vsel %vm29, %v25, 0.0
  %31 = vadd.xlane.f32.xlu0 %v30
  %v32 = vpop.xlane.xlu0 %31
  %v33 = vsel %vm29, %v26, 0.0
  %34 = vadd.xlane.f32.xlu0 %v33
  %v35 = vpop.xlane.xlu0 %34
  %v36 = vsel %vm29, %v27, 0.0
  %37 = vadd.xlane.f32.xlu0 %v36
  %v38 = vpop.xlane.xlu0 %37
  %v39 = vsel %vm29, %v28, 0.0
  %40 = vadd.xlane.f32.xlu0 %v39
  %v41 = vpop.xlane.xlu0 %40
  %v42 = vrcp.pop 32.0
  %v43 = vmul.f32 32.0, %v42
  %v44 = vsub.f32 1.0, %v43
  %v45 = vmul.f32 %v42, %v44
  %v46 = vadd.f32 %v42, %v45
  %vm47 = vweird.f32 %v42
  %v48 = vsel %vm47, %v42, %v46
  %v49 = vmul.f32 %v32, %v48
  %v50 = vmul.f32 %v35, %v48
  %v51 = vmul.f32 %v38, %v48
  %v52 = vmul.f32 %v41, %v48
  %v53 = vsub.f32 %v25, %v49
  %v54 = vsub.f32 %v26, %v50
  %v55 = vsub.f32 %v27, %v51
  %v56 = vsub.f32 %v28, %v52
  %v57 = vmul.f32 %v53, %v53
  %v58 = vmul.f32 %v54, %v54
  %v59 = vmul.f32 %v55, %v55
  %v60 = vmul.f32 %v56, %v56
  %v61 = vsel %vm29, %v57, 0.0
  %62 = vadd.xlane.f32.xlu0 %v61
  %v63 = vpop.xlane.xlu0 %62
  %v64 = vsel %vm29, %v58, 0.0
  %65 = vadd.xlane.f32.xlu0 %v64
  %v66 = vpop.xlane.xlu0 %65
  %v67 = vsel %vm29, %v59, 0.0
  %68 = vadd.xlane.f32.xlu0 %v67
  %v69 = vpop.xlane.xlu0 %68
  %v70 = vsel %vm29, %v60, 0.0
  %71 = vadd.xlane.f32.xlu0 %v70
  %v72 = vpop.xlane.xlu0 %71
  %v73 = vmul.f32 %v63, %v48
  %v74 = vmul.f32 %v66, %v48
  %v75 = vmul.f32 %v69, %v48
  %v76 = vmul.f32 %v72, %v48
  %v77 = vadd.f32 %v73, 1e-05
  %v78 = vadd.f32 %v74, 1e-05
  %v79 = vadd.f32 %v75, 1e-05
  %v80 = vadd.f32 %v76, 1e-05
  %v81 = vrsqrt.pop %v77
  %v82 = vmul.f32 %v81, %v77
  %v83 = vmul.f32 %v82, %v81
  %v84 = vmul.f32 0.5, %v83
  %v85 = vsub.f32 1.5, %v84
  %v86 = vmul.f32 %v81, %v85
  %vm87 = vweird.f32 %v77
  %vm88 = vweird.f32 %v81
  %vm89 = vmor %vm87, %vm88
  %v90 = vsel %vm89, %v81, %v86
  %v91 = vrsqrt.pop %v78
  %v92 = vmul.f32 %v91, %v78
  %v93 = vmul.f32 %v92, %v91
  %v94 = vmul.f32 0.5, %v93
  %v95 = vsub.f32 1.5, %v94
  %v96 = vmul.f32 %v91, %v95
  %vm97 = vweird.f32 %v78
  %vm98 = vweird.f32 %v91
  %vm99 = vmor %vm97, %vm98
  %v100 = vsel %vm99, %v91, %v96
  %v101 = vrsqrt.pop %v79
  %v102 = vmul.f32 %v101, %v79
  %v103 = vmul.f32 %v102, %v101
  %v104 = vmul.f32 0.5, %v103
  %v105 = vsub.f32 1.5, %v104
  %v106 = vmul.f32 %v101, %v105
  %vm107 = vweird.f32 %v79
  %vm108 = vweird.f32 %v101
  %vm109 = vmor %vm107, %vm108
  %v110 = vsel %vm109, %v101, %v106
  %v111 = vrsqrt.pop %v80
  %v112 = vmul.f32 %v111, %v80
  %v113 = vmul.f32 %v112, %v111
  %v114 = vmul.f32 0.5, %v113
  %v115 = vsub.f32 1.5, %v114
  %v116 = vmul.f32 %v111, %v115
  %vm117 = vweird.f32 %v80
  %vm118 = vweird.f32 %v111
  %vm119 = vmor %vm117, %vm118
  %v120 = vsel %vm119, %v111, %v116
  %v121 = vmul.f32 %v53, %v90
  %v122 = vmul.f32 %v54, %v100
  %v123 = vmul.f32 %v55, %v110
  %v124 = vmul.f32 %v56, %v120
  %v125 = vld [vmem:[%s1] sm:$0x1]
  %v127 = vperm.slane %v125, 0
  %v129 = vmul.f32 %v121, %v127
  %v130 = vmul.f32 %v122, %v127
  %v131 = vmul.f32 %v123, %v127
  %v132 = vmul.f32 %v124, %v127
  %v133 = vld [vmem:[%s2] sm:$0x1]
  %v135 = vperm.slane %v133, 0
  %v137 = vadd.f32 %v129, %v135
  %v138 = vadd.f32 %v130, %v135
  %v139 = vadd.f32 %v131, %v135
  %v140 = vadd.f32 %v132, %v135
  %v141 = vpack.c.bf16 %v138, %v137
  %v142 = vpack.c.bf16 %v140, %v139
  %v143 = vld [vmem:[%s3] sm:$0xf]
  %v144 = vld [vmem:[%s3 + $0x4] sm:$0xf]
  %v145 = vld [vmem:[%s3 + $0x8] sm:$0xf]
  %v146 = vld [vmem:[%s3 + $0xc] sm:$0xf]
  %v147 = vld [vmem:[%s4] sm:$0x1]
  %v149 = vperm.slane %v147, 0
  %v155 = vunpack.c.l.b16 %v143
  %v156 = vunpack.c.l.b16 %v144
  %v157 = vunpack.c.l.b16 %v145
  %v158 = vunpack.c.l.b16 %v146
  %v159 = vpack.c.b16 %v156, %v155
  %v160 = vpack.c.b16 %v158, %v157
  %v164 = vsel %vm29, %v141, 0
  %v167 = vsel %vm29, %v142, 0
  %169 = vmatpush.bf16.msra.mxu0 0
  %170 = vmatpush.bf16.msra.mxu0 0
  %171 = vmatpush.bf16.msra.mxu0 0
  %172 = vmatpush.bf16.msra.mxu0 0
  %173 = vmatpush.bf16.msra.mxu0 0
  %174 = vmatpush.bf16.msra.mxu0 0
  %175 = vmatpush.bf16.msra.mxu0 %v160
  %176 = vmatpush.bf16.msra.mxu0 %v159
  %177 = vmatmul.bf16.gmra.mxu0 %v164
  %v178 = vpop.f32.mrf.mxu0
  %v179 = vadd.f32 %v149, %v178
  %v180 = vpop.f32.mrf.mxu0
  %v181 = vadd.f32 %v149, %v180
  %182 = vmatmul.bf16.gmra.mxu0 %v167
  %v183 = vpop.f32.mrf.mxu0
  %v184 = vadd.f32 %v149, %v183
  %v185 = vpop.f32.mrf.mxu0
  %v186 = vadd.f32 %v149, %v185
  %187 = vdwg.mxu0
  %v188 = vmul.f32 %v179, %v179
  %v189 = vmul.f32 %v181, %v181
  %v190 = vmul.f32 %v184, %v184
  %v191 = vmul.f32 %v186, %v186
  %v192 = vmul.f32 %v179, %v188
  %v193 = vmul.f32 %v181, %v189
  %v194 = vmul.f32 %v184, %v190
  %v195 = vmul.f32 %v186, %v191
  %v196 = vmul.f32 %v192, 0.044715
  %v197 = vmul.f32 %v193, 0.044715
  %v198 = vmul.f32 %v194, 0.044715
  %v199 = vmul.f32 %v195, 0.044715
  %v200 = vadd.f32 %v179, %v196
  %v201 = vadd.f32 %v181, %v197
  %v202 = vadd.f32 %v184, %v198
  %v203 = vadd.f32 %v186, %v199
  %v204 = vmul.f32 %v200, 0.7978846
  %v205 = vmul.f32 %v201, 0.7978846
  %v206 = vmul.f32 %v202, 0.7978846
  %v207 = vmul.f32 %v203, 0.7978846
  %v208 = vtanh.pop %v204
  %v209 = vtanh.pop %v205
  %v210 = vtanh.pop %v206
  %v211 = vtanh.pop %v207
  %v212 = vadd.f32 %v208, 1.0
  %v213 = vadd.f32 %v209, 1.0
  %v214 = vadd.f32 %v210, 1.0
  %v215 = vadd.f32 %v211, 1.0
  %v216 = vmul.f32 %v212, 0.5
  %v217 = vmul.f32 %v213, 0.5
  %v218 = vmul.f32 %v214, 0.5
  %v219 = vmul.f32 %v215, 0.5
  %v220 = vmul.f32 %v179, %v216
  %v221 = vmul.f32 %v181, %v217
  %v222 = vmul.f32 %v184, %v218
  %v223 = vmul.f32 %v186, %v219
  %v224 = vpack.c.bf16 %v220, %v220
  %v225 = vpack.c.bf16 %v221, %v221
  %v226 = vpack.c.bf16 %v222, %v222
  %v227 = vpack.c.bf16 %v223, %v223
  %vm228 = vcmask 519168
  %229 = vst.msk [vmem:[%s5] sm:$0xf] %vm228, %v224
  %230 = vst.msk [vmem:[%s5 + $0x4] sm:$0xf] %vm228, %v225
  %231 = vst.msk [vmem:[%s5 + $0x8] sm:$0xf] %vm228, %v226
  %232 = vst.msk [vmem:[%s5 + $0xc] sm:$0xf] %vm228, %v227
  // Predicated region
  $region22: #{clap_audio_encoder_forward.16} parent=0 // pred_check
    _
  $region23: #{clap_audio_encoder_forward.16} parent=0 // pred_check_branch
    %234 = sbr.rel (0) target = $region25
  $region24: #{clap_audio_encoder_forward.16} parent=0 // pred_region
    _
  $region25: #{clap_audio_encoder_forward.16} parent=0 // pred_fallthru
    _
  // Predicated region
  $region26: #{clap_audio_encoder_forward.16} parent=0 // pred_check
    _
  $region27: #{clap_audio_encoder_forward.16} parent=0 // pred_check_branch
    %236 = sbr.rel (0) target = $region29
  $region28: #{clap_audio_encoder_forward.16} parent=0 // pred_region
    _
  $region29: #{clap_audio_encoder_forward.16} parent=0 // pred_fallthru
    _

// kernel: clap_audio_encoder_forward.18
$region0: #{clap_audio_encoder_forward.18}
  #allocation0 [shape = 'u32[]', space=smem, size = 0x4, offset = 0x4, fixed_abs, tag = 'smem constant byte address 0x4 - core index']
  #allocation1 [shape = 'u32[72,128]{1,0:T(1,128)}', space=vmem, size = 0x9000, scoped, tag = 'internal scratch']
  %s0 = inlined_call_operand.vmem [shape: bf16[8,128], index: 0, kind: input, shape index: {}]
  %s1 = inlined_call_operand.vmem [shape: f32[1,128], index: 1, kind: input, shape index: {}]
  %s2 = inlined_call_operand.vmem [shape: f32[1,128], index: 2, kind: input, shape index: {}]
  %s3 = inlined_call_operand.vmem [shape: bf16[128,64], index: 3, kind: input, shape index: {}]
  %s4 = inlined_call_operand.vmem [shape: f32[1,64], index: 4, kind: input, shape index: {}]
  %s5 = inlined_call_operand.vmem [shape: bf16[8,64], index: 5, kind: output, shape index: {}]
  %s6 = sld [smem:[#allocation0]]
  $region30: #{clap_audio_encoder_forward.18} parent=0
    _
  %s8 = ssub.s32 1, %s6
  %s9 = scalar_select 0, %s8, %s6
  // Predicated region
  $region2: #{clap_audio_encoder_forward.18} parent=0 // pred_check
    _
  $region3: #{clap_audio_encoder_forward.18} parent=0 // pred_check_branch
    %11 = sbr.rel (0) target = $region5
  $region4: #{clap_audio_encoder_forward.18} parent=0 // pred_region
    _
  $region5: #{clap_audio_encoder_forward.18} parent=0 // pred_fallthru
    _
  // Predicated region
  $region6: #{clap_audio_encoder_forward.18} parent=0 // pred_check
    _
  $region7: #{clap_audio_encoder_forward.18} parent=0 // pred_check_branch
    %13 = sbr.rel (0) target = $region9
  $region8: #{clap_audio_encoder_forward.18} parent=0 // pred_region
    _
  $region9: #{clap_audio_encoder_forward.18} parent=0 // pred_fallthru
    _
  // Predicated region
  $region10: #{clap_audio_encoder_forward.18} parent=0 // pred_check
    _
  $region11: #{clap_audio_encoder_forward.18} parent=0 // pred_check_branch
    %15 = sbr.rel (0) target = $region13
  $region12: #{clap_audio_encoder_forward.18} parent=0 // pred_region
    _
  $region13: #{clap_audio_encoder_forward.18} parent=0 // pred_fallthru
    _
  // Predicated region
  $region14: #{clap_audio_encoder_forward.18} parent=0 // pred_check
    _
  $region15: #{clap_audio_encoder_forward.18} parent=0 // pred_check_branch
    %17 = sbr.rel (0) target = $region17
  $region16: #{clap_audio_encoder_forward.18} parent=0 // pred_region
    _
  $region17: #{clap_audio_encoder_forward.18} parent=0 // pred_fallthru
    _
  // Predicated region
  $region18: #{clap_audio_encoder_forward.18} parent=0 // pred_check
    _
  $region19: #{clap_audio_encoder_forward.18} parent=0 // pred_check_branch
    %19 = sbr.rel (0) target = $region21
  $region20: #{clap_audio_encoder_forward.18} parent=0 // pred_region
    _
  $region21: #{clap_audio_encoder_forward.18} parent=0 // pred_fallthru
    _
  %v20 = vld [vmem:[%s0] sm:$0xf]
  %v21 = vunpack.c.l.bf16 %v20
  %22 = vadd.xlane.f32.xlu0 %v21
  %v23 = vpop.xlane.xlu0 %22
  %v24 = vrcp.pop 128.0
  %v25 = vmul.f32 128.0, %v24
  %v26 = vsub.f32 1.0, %v25
  %v27 = vmul.f32 %v24, %v26
  %v28 = vadd.f32 %v24, %v27
  %vm29 = vweird.f32 %v24
  %v30 = vsel %vm29, %v24, %v28
  %v31 = vmul.f32 %v23, %v30
  %v32 = vsub.f32 %v21, %v31
  %v33 = vmul.f32 %v32, %v32
  %34 = vadd.xlane.f32.xlu0 %v33
  %v35 = vpop.xlane.xlu0 %34
  %v36 = vmul.f32 %v35, %v30
  %v37 = vadd.f32 %v36, 1e-05
  %v38 = vrsqrt.pop %v37
  %v39 = vmul.f32 %v38, %v37
  %v40 = vmul.f32 %v39, %v38
  %v41 = vmul.f32 0.5, %v40
  %v42 = vsub.f32 1.5, %v41
  %v43 = vmul.f32 %v38, %v42
  %vm44 = vweird.f32 %v37
  %vm45 = vweird.f32 %v38
  %vm46 = vmor %vm44, %vm45
  %v47 = vsel %vm46, %v38, %v43
  %v48 = vmul.f32 %v32, %v47
  %v49 = vld [vmem:[%s1] sm:$0x1]
  %v51 = vperm.slane %v49, 0
  %v53 = vmul.f32 %v48, %v51
  %v54 = vld [vmem:[%s2] sm:$0x1]
  %v56 = vperm.slane %v54, 0
  %v58 = vadd.f32 %v53, %v56
  %v59 = vpack.c.bf16 %v58, %v58
  %v60 = vld [vmem:[%s3] sm:$0xf]
  %v61 = vld [vmem:[%s3 + $0x4] sm:$0xf]
  %v62 = vld [vmem:[%s3 + $0x8] sm:$0xf]
  %v63 = vld [vmem:[%s3 + $0xc] sm:$0xf]
  %v64 = vld [vmem:[%s3 + $0x10] sm:$0xf]
  %v65 = vld [vmem:[%s3 + $0x14] sm:$0xf]
  %v66 = vld [vmem:[%s3 + $0x18] sm:$0xf]
  %v67 = vld [vmem:[%s3 + $0x1c] sm:$0xf]
  %v68 = vld [vmem:[%s3 + $0x20] sm:$0xf]
  %v69 = vld [vmem:[%s3 + $0x24] sm:$0xf]
  %v70 = vld [vmem:[%s3 + $0x28] sm:$0xf]
  %v71 = vld [vmem:[%s3 + $0x2c] sm:$0xf]
  %v72 = vld [vmem:[%s3 + $0x30] sm:$0xf]
  %v73 = vld [vmem:[%s3 + $0x34] sm:$0xf]
  %v74 = vld [vmem:[%s3 + $0x38] sm:$0xf]
  %v75 = vld [vmem:[%s3 + $0x3c] sm:$0xf]
  %v76 = vld [vmem:[%s4] sm:$0x1]
  %v78 = vperm.slane %v76, 0
  %v96 = vunpack.c.l.b16 %v60
  %v97 = vunpack.c.l.b16 %v61
  %v98 = vunpack.c.l.b16 %v62
  %v99 = vunpack.c.l.b16 %v63
  %v100 = vunpack.c.l.b16 %v64
  %v101 = vunpack.c.l.b16 %v65
  %v102 = vunpack.c.l.b16 %v66
  %v103 = vunpack.c.l.b16 %v67
  %v104 = vunpack.c.l.b16 %v68
  %v105 = vunpack.c.l.b16 %v69
  %v106 = vunpack.c.l.b16 %v70
  %v107 = vunpack.c.l.b16 %v71
  %v108 = vunpack.c.l.b16 %v72
  %v109 = vunpack.c.l.b16 %v73
  %v110 = vunpack.c.l.b16 %v74
  %v111 = vunpack.c.l.b16 %v75
  %v112 = vpack.c.b16 %v97, %v96
  %v113 = vpack.c.b16 %v99, %v98
  %v114 = vpack.c.b16 %v101, %v100
  %v115 = vpack.c.b16 %v103, %v102
  %v116 = vpack.c.b16 %v105, %v104
  %v117 = vpack.c.b16 %v107, %v106
  %v118 = vpack.c.b16 %v109, %v108
  %v119 = vpack.c.b16 %v111, %v110
  %128 = vmatpush.bf16.msra.mxu0 %v119
  %129 = vmatpush.bf16.msra.mxu0 %v118
  %130 = vmatpush.bf16.msra.mxu0 %v117
  %131 = vmatpush.bf16.msra.mxu0 %v116
  %132 = vmatpush.bf16.msra.mxu0 %v115
  %133 = vmatpush.bf16.msra.mxu0 %v114
  %134 = vmatpush.bf16.msra.mxu0 %v113
  %135 = vmatpush.bf16.msra.mxu0 %v112
  %136 = vmatmul.bf16.gmra.mxu0 %v59
  %v137 = vpop.f32.mrf.mxu0
  %v138 = vadd.f32 %v78, %v137
  %v139 = vpop.f32.mrf.mxu0
  %140 = vdwg.mxu0
  %v141 = vpack.c.bf16 %v138, %v138
  %vm142 = vcmask 519168
  %143 = vst.msk [vmem:[%s5] sm:$0xf] %vm142, %v141
  // Predicated region
  $region22: #{clap_audio_encoder_forward.18} parent=0 // pred_check
    _
  $region23: #{clap_audio_encoder_forward.18} parent=0 // pred_check_branch
    %145 = sbr.rel (0) target = $region25
  $region24: #{clap_audio_encoder_forward.18} parent=0 // pred_region
    _
  $region25: #{clap_audio_encoder_forward.18} parent=0 // pred_fallthru
    _
  // Predicated region
  $region26: #{clap_audio_encoder_forward.18} parent=0 // pred_check
    _
  $region27: #{clap_audio_encoder_forward.18} parent=0 // pred_check_branch
    %147 = sbr.rel (0) target = $region29
  $region28: #{clap_audio_encoder_forward.18} parent=0 // pred_region
    _
  $region29: #{clap_audio_encoder_forward.18} parent=0 // pred_fallthru
    _

// kernel: clap_audio_encoder_forward.19
$region0: #{clap_audio_encoder_forward.19}
  #allocation0 [shape = 'u32[]', space=smem, size = 0x4, offset = 0x4, fixed_abs, tag = 'smem constant byte address 0x4 - core index']
  #allocation1 [shape = 'u32[72,128]{1,0:T(1,128)}', space=vmem, size = 0x9000, scoped, tag = 'internal scratch']
  %s0 = inlined_call_operand.vmem [shape: bf16[8,64], index: 0, kind: input, shape index: {}]
  %s1 = inlined_call_operand.vmem [shape: f32[1,64], index: 1, kind: input, shape index: {}]
  %s2 = inlined_call_operand.vmem [shape: f32[1,64], index: 2, kind: input, shape index: {}]
  %s3 = inlined_call_operand.vmem [shape: bf16[64,192], index: 3, kind: input, shape index: {}]
  %s4 = inlined_call_operand.vmem [shape: f32[1,192], index: 4, kind: input, shape index: {}]
  %s5 = inlined_call_operand.vmem [shape: bf16[8,64], index: 5, kind: output, shape index: {0}]
  %s6 = inlined_call_operand.vmem [shape: bf16[8,64], index: 6, kind: output, shape index: {1}]
  %s7 = inlined_call_operand.vmem [shape: bf16[8,64], index: 7, kind: output, shape index: {2}]
  %8 = xla_tuple %s5, %s6, %s7
  %s9 = sld [smem:[#allocation0]]
  $region46: #{clap_audio_encoder_forward.19} parent=0
    _
  %s11 = ssub.s32 1, %s9
  %s12 = scalar_select 0, %s11, %s9
  // Predicated region
  $region2: #{clap_audio_encoder_forward.19} parent=0 // pred_check
    _
  $region3: #{clap_audio_encoder_forward.19} parent=0 // pred_check_branch
    %14 = sbr.rel (0) target = $region5
  $region4: #{clap_audio_encoder_forward.19} parent=0 // pred_region
    _
  $region5: #{clap_audio_encoder_forward.19} parent=0 // pred_fallthru
    _
  // Predicated region
  $region6: #{clap_audio_encoder_forward.19} parent=0 // pred_check
    _
  $region7: #{clap_audio_encoder_forward.19} parent=0 // pred_check_branch
    %16 = sbr.rel (0) target = $region9
  $region8: #{clap_audio_encoder_forward.19} parent=0 // pred_region
    _
  $region9: #{clap_audio_encoder_forward.19} parent=0 // pred_fallthru
    _
  // Predicated region
  $region10: #{clap_audio_encoder_forward.19} parent=0 // pred_check
    _
  $region11: #{clap_audio_encoder_forward.19} parent=0 // pred_check_branch
    %18 = sbr.rel (0) target = $region13
  $region12: #{clap_audio_encoder_forward.19} parent=0 // pred_region
    _
  $region13: #{clap_audio_encoder_forward.19} parent=0 // pred_fallthru
    _
  // Predicated region
  $region14: #{clap_audio_encoder_forward.19} parent=0 // pred_check
    _
  $region15: #{clap_audio_encoder_forward.19} parent=0 // pred_check_branch
    %20 = sbr.rel (0) target = $region17
  $region16: #{clap_audio_encoder_forward.19} parent=0 // pred_region
    _
  $region17: #{clap_audio_encoder_forward.19} parent=0 // pred_fallthru
    _
  // Predicated region
  $region18: #{clap_audio_encoder_forward.19} parent=0 // pred_check
    _
  $region19: #{clap_audio_encoder_forward.19} parent=0 // pred_check_branch
    %22 = sbr.rel (0) target = $region21
  $region20: #{clap_audio_encoder_forward.19} parent=0 // pred_region
    _
  $region21: #{clap_audio_encoder_forward.19} parent=0 // pred_fallthru
    _
  %v24 = vld [vmem:[%s0] sm:$0xf]
  %v25 = vunpack.c.l.bf16 %v24
  %vm26 = vcmask 523264
  %v27 = vsel %vm26, %v25, 0.0
  %28 = vadd.xlane.f32.xlu0 %v27
  %v29 = vpop.xlane.xlu0 %28
  %v30 = vrcp.pop 64.0
  %v31 = vmul.f32 64.0, %v30
  %v32 = vsub.f32 1.0, %v31
  %v33 = vmul.f32 %v30, %v32
  %v34 = vadd.f32 %v30, %v33
  %vm35 = vweird.f32 %v30
  %v36 = vsel %vm35, %v30, %v34
  %v37 = vmul.f32 %v29, %v36
  %v38 = vsub.f32 %v25, %v37
  %v39 = vmul.f32 %v38, %v38
  %v40 = vsel %vm26, %v39, 0.0
  %41 = vadd.xlane.f32.xlu0 %v40
  %v42 = vpop.xlane.xlu0 %41
  %v43 = vmul.f32 %v42, %v36
  %v44 = vadd.f32 %v43, 1e-05
  %v45 = vrsqrt.pop %v44
  %v46 = vmul.f32 %v45, %v44
  %v47 = vmul.f32 %v46, %v45
  %v48 = vmul.f32 0.5, %v47
  %v49 = vsub.f32 1.5, %v48
  %v50 = vmul.f32 %v45, %v49
  %vm51 = vweird.f32 %v44
  %vm52 = vweird.f32 %v45
  %vm53 = vmor %vm51, %vm52
  %v54 = vsel %vm53, %v45, %v50
  %v55 = vmul.f32 %v38, %v54
  %v56 = vld [vmem:[%s1] sm:$0x1]
  %v58 = vperm.slane %v56, 0
  %v60 = vmul.f32 %v55, %v58
  %v61 = vld [vmem:[%s2] sm:$0x1]
  %v63 = vperm.slane %v61, 0
  %v65 = vadd.f32 %v60, %v63
  %v66 = vpack.c.bf16 %v65, %v65
  %v67 = vld [vmem:[%s3] sm:$0xff]
  %v68 = vld [vmem:[%s3 + $0x8] sm:$0xff]
  %v69 = vld [vmem:[%s3 + $0x10] sm:$0xff]
  %v70 = vld [vmem:[%s3 + $0x18] sm:$0xff]
  %v71 = vld [vmem:[%s3 + $0x20] sm:$0xff]
  %v72 = vld [vmem:[%s3 + $0x28] sm:$0xff]
  %v73 = vld [vmem:[%s3 + $0x30] sm:$0xff]
  %v74 = vld [vmem:[%s3 + $0x38] sm:$0xff]
  %v75 = vld [vmem:[%s4] sm:$0x3]
  %v77 = vperm.slane %v75, 0
  %v78 = vperm.slane %v75, 1
  %v89 = vunpack.c.l.b16 %v67
  %v90 = vunpack.c.h.b16 %v67
  %v91 = vunpack.c.l.b16 %v68
  %v92 = vunpack.c.h.b16 %v68
  %v93 = vunpack.c.l.b16 %v69
  %v94 = vunpack.c.h.b16 %v69
  %v95 = vunpack.c.l.b16 %v70
  %v96 = vunpack.c.h.b16 %v70
  %v97 = vunpack.c.l.b16 %v71
  %v98 = vunpack.c.h.b16 %v71
  %v99 = vunpack.c.l.b16 %v72
  %v100 = vunpack.c.h.b16 %v72
  %v101 = vunpack.c.l.b16 %v73
  %v102 = vunpack.c.h.b16 %v73
  %v103 = vunpack.c.l.b16 %v74
  %v104 = vunpack.c.h.b16 %v74
  %v105 = vpack.c.b16 %v91, %v89
  %v106 = vpack.c.b16 %v92, %v90
  %v107 = vpack.c.b16 %v95, %v93
  %v108 = vpack.c.b16 %v96, %v94
  %v109 = vpack.c.b16 %v99, %v97
  %v110 = vpack.c.b16 %v100, %v98
  %v111 = vpack.c.b16 %v103, %v101
  %v112 = vpack.c.b16 %v104, %v102
  %v122 = vsel %vm26, %v66, 0
  %124 = vmatpush.bf16.msra.mxu0 0
  %125 = vmatpush.bf16.msra.mxu0 0
  %126 = vmatpush.bf16.msra.mxu0 0
  %127 = vmatpush.bf16.msra.mxu0 0
  %128 = vmatpush.bf16.msra.mxu0 %v111
  %129 = vmatpush.bf16.msra.mxu0 %v109
  %130 = vmatpush.bf16.msra.mxu0 %v107
  %131 = vmatpush.bf16.msra.mxu0 %v105
  %132 = vmatmul.bf16.gmra.mxu0 %v122
  %v133 = vpop.f32.mrf.mxu0
  %v134 = vadd.f32 %v77, %v133
  %v135 = vpop.f32.mrf.mxu0
  %136 = vdwg.mxu0
  %137 = vmatpush.bf16.msra.mxu0 0
  %138 = vmatpush.bf16.msra.mxu0 0
  %139 = vmatpush.bf16.msra.mxu0 0
  %140 = vmatpush.bf16.msra.mxu0 0
  %141 = vmatpush.bf16.msra.mxu0 %v112
  %142 = vmatpush.bf16.msra.mxu0 %v110
  %143 = vmatpush.bf16.msra.mxu0 %v108
  %144 = vmatpush.bf16.msra.mxu0 %v106
  %145 = vmatmul.bf16.gmra.mxu0 %v122
  %v146 = vpop.f32.mrf.mxu0
  %v147 = vadd.f32 %v78, %v146
  %v148 = vpop.f32.mrf.mxu0
  %149 = vdwg.mxu0
  %v150 = vpack.c.bf16 %v134, %v134
  %vm151 = vcmask 519168
  %152 = vst.msk [vmem:[%s5] sm:$0xf] %vm151, %v150
  %154 = vrot.lane.b32.xlu0 %v150, 64
  %v155 = vpop.permute.xlu0 %154
  %157 = vst.msk [vmem:[%s6] sm:$0xf] %vm151, %v155
  %v158 = vpack.c.bf16 %v147, %v147
  %159 = vst.msk [vmem:[%s7] sm:$0xf] %vm151, %v158
  // Predicated region
  $region22: #{clap_audio_encoder_forward.19} parent=0 // pred_check
    _
  $region23: #{clap_audio_encoder_forward.19} parent=0 // pred_check_branch
    %161 = sbr.rel (0) target = $region25
  $region24: #{clap_audio_encoder_forward.19} parent=0 // pred_region
    _
  $region25: #{clap_audio_encoder_forward.19} parent=0 // pred_fallthru
    _
  // Predicated region
  $region26: #{clap_audio_encoder_forward.19} parent=0 // pred_check
    _
  $region27: #{clap_audio_encoder_forward.19} parent=0 // pred_check_branch
    %163 = sbr.rel (0) target = $region29
  $region28: #{clap_audio_encoder_forward.19} parent=0 // pred_region
    _
  $region29: #{clap_audio_encoder_forward.19} parent=0 // pred_fallthru
    _
  // Predicated region
  $region30: #{clap_audio_encoder_forward.19} parent=0 // pred_check
    _
  $region31: #{clap_audio_encoder_forward.19} parent=0 // pred_check_branch
    %165 = sbr.rel (0) target = $region33
  $region32: #{clap_audio_encoder_forward.19} parent=0 // pred_region
    _
  $region33: #{clap_audio_encoder_forward.19} parent=0 // pred_fallthru
    _
  // Predicated region
  $region34: #{clap_audio_encoder_forward.19} parent=0 // pred_check
    _
  $region35: #{clap_audio_encoder_forward.19} parent=0 // pred_check_branch
    %167 = sbr.rel (0) target = $region37
  $region36: #{clap_audio_encoder_forward.19} parent=0 // pred_region
    _
  $region37: #{clap_audio_encoder_forward.19} parent=0 // pred_fallthru
    _
  // Predicated region
  $region38: #{clap_audio_encoder_forward.19} parent=0 // pred_check
    _
  $region39: #{clap_audio_encoder_forward.19} parent=0 // pred_check_branch
    %169 = sbr.rel (0) target = $region41
  $region40: #{clap_audio_encoder_forward.19} parent=0 // pred_region
    _
  $region41: #{clap_audio_encoder_forward.19} parent=0 // pred_fallthru
    _
  // Predicated region
  $region42: #{clap_audio_encoder_forward.19} parent=0 // pred_check
    _
  $region43: #{clap_audio_encoder_forward.19} parent=0 // pred_check_branch
    %171 = sbr.rel (0) target = $region45
  $region44: #{clap_audio_encoder_forward.19} parent=0 // pred_region
    _
  $region45: #{clap_audio_encoder_forward.19} parent=0 // pred_fallthru
    _

// kernel: clap_audio_encoder_forward.21
$region0: #{clap_audio_encoder_forward.21}
  #allocation0 [shape = 'u32[]', space=smem, size = 0x4, offset = 0x4, fixed_abs, tag = 'smem constant byte address 0x4 - core index']
  #allocation1 [shape = 'u32[72,128]{1,0:T(1,128)}', space=vmem, size = 0x9000, scoped, tag = 'internal scratch']
  #allocation2 [shape = 'f32[8,64]{1,0:T(8,128)}', space=vmem, size = 0x1000, scoped, tag = 'scratch operand']
  %s0 = inlined_call_operand.vmem [shape: bf16[8,64], index: 0, kind: input, shape index: {}]
  %s1 = inlined_call_operand.vmem [shape: bf16[64,64], index: 1, kind: input, shape index: {}]
  %s2 = inlined_call_operand.vmem [shape: f32[1,64], index: 2, kind: input, shape index: {}]
  %s3 = inlined_call_operand.vmem [shape: bf16[8,64], index: 3, kind: input, shape index: {}]
  %s4 = inlined_call_operand.vmem [shape: bf16[8,64], index: 4, kind: output, shape index: {}]
  %s5 = sld [smem:[#allocation0]]
  $region34: #{clap_audio_encoder_forward.21} parent=0
    _
  %s7 = ssub.s32 1, %s5
  %s8 = scalar_select 0, %s7, %s5
  // Predicated region
  $region2: #{clap_audio_encoder_forward.21} parent=0 // pred_check
    _
  $region3: #{clap_audio_encoder_forward.21} parent=0 // pred_check_branch
    %10 = sbr.rel (0) target = $region5
  $region4: #{clap_audio_encoder_forward.21} parent=0 // pred_region
    _
  $region5: #{clap_audio_encoder_forward.21} parent=0 // pred_fallthru
    _
  // Predicated region
  $region6: #{clap_audio_encoder_forward.21} parent=0 // pred_check
    _
  $region7: #{clap_audio_encoder_forward.21} parent=0 // pred_check_branch
    %12 = sbr.rel (0) target = $region9
  $region8: #{clap_audio_encoder_forward.21} parent=0 // pred_region
    _
  $region9: #{clap_audio_encoder_forward.21} parent=0 // pred_fallthru
    _
  // Predicated region
  $region10: #{clap_audio_encoder_forward.21} parent=0 // pred_check
    _
  $region11: #{clap_audio_encoder_forward.21} parent=0 // pred_check_branch
    %14 = sbr.rel (0) target = $region13
  $region12: #{clap_audio_encoder_forward.21} parent=0 // pred_region
    _
  $region13: #{clap_audio_encoder_forward.21} parent=0 // pred_fallthru
    _
  // Predicated region
  $region14: #{clap_audio_encoder_forward.21} parent=0 // pred_check
    _
  $region15: #{clap_audio_encoder_forward.21} parent=0 // pred_check_branch
    %16 = sbr.rel (0) target = $region17
  $region16: #{clap_audio_encoder_forward.21} parent=0 // pred_region
    _
  $region17: #{clap_audio_encoder_forward.21} parent=0 // pred_fallthru
    _
  %p18 = scmp.eq.s32.totalorder 0, 0
  // Predicated region
  $region18: #{clap_audio_encoder_forward.21} parent=0 // pred_check
    %p19 = pneg %p18
  $region19: #{clap_audio_encoder_forward.21} parent=0 // pred_check_branch
    %21 = sbr.rel (%p19) target = $region21
  $region20: #{clap_audio_encoder_forward.21} parent=0 // pred_region
    %vm22 = vcmask 523264
    %23 = vst.msk [vmem:[#allocation2] sm:$0xff] %vm22, 0.0
  $region21: #{clap_audio_encoder_forward.21} parent=0 // pred_fallthru
    _
  %v24 = vld [vmem:[#allocation2] sm:$0xff]
  %v25 = vld [vmem:[%s0] sm:$0xf]
  %v26 = vld [vmem:[%s1] sm:$0xf]
  %v27 = vld [vmem:[%s1 + $0x4] sm:$0xf]
  %v28 = vld [vmem:[%s1 + $0x8] sm:$0xf]
  %v29 = vld [vmem:[%s1 + $0xc] sm:$0xf]
  %v30 = vld [vmem:[%s1 + $0x10] sm:$0xf]
  %v31 = vld [vmem:[%s1 + $0x14] sm:$0xf]
  %v32 = vld [vmem:[%s1 + $0x18] sm:$0xf]
  %v33 = vld [vmem:[%s1 + $0x1c] sm:$0xf]
  %v42 = vunpack.c.l.b16 %v26
  %v43 = vunpack.c.l.b16 %v27
  %v44 = vunpack.c.l.b16 %v28
  %v45 = vunpack.c.l.b16 %v29
  %v46 = vunpack.c.l.b16 %v30
  %v47 = vunpack.c.l.b16 %v31
  %v48 = vunpack.c.l.b16 %v32
  %v49 = vunpack.c.l.b16 %v33
  %v50 = vpack.c.b16 %v43, %v42
  %v51 = vpack.c.b16 %v45, %v44
  %v52 = vpack.c.b16 %v47, %v46
  %v53 = vpack.c.b16 %v49, %v48
  %vm58 = vcmask 523264
  %v60 = vsel %vm58, %v25, 0
  %62 = vmatpush.bf16.msra.mxu0 0
  %63 = vmatpush.bf16.msra.mxu0 0
  %64 = vmatpush.bf16.msra.mxu0 0
  %65 = vmatpush.bf16.msra.mxu0 0
  %66 = vmatpush.bf16.msra.mxu0 %v53
  %67 = vmatpush.bf16.msra.mxu0 %v52
  %68 = vmatpush.bf16.msra.mxu0 %v51
  %69 = vmatpush.bf16.msra.mxu0 %v50
  %70 = vmatmul.bf16.gmra.mxu0 %v60
  %v71 = vpop.f32.mrf.mxu0
  %v72 = vadd.f32 0.0, %v71
  %v73 = vpop.f32.mrf.mxu0
  %74 = vdwg.mxu0
  %v75 = vadd.f32 %v24, %v72
  %76 = vst.msk [vmem:[#allocation2] sm:$0xff] %vm58, %v75
  // Predicated region
  $region22: #{clap_audio_encoder_forward.21} parent=0 // pred_check
    %p77 = pneg %p18
  $region23: #{clap_audio_encoder_forward.21} parent=0 // pred_check_branch
    %79 = sbr.rel (%p77) target = $region25
  $region24: #{clap_audio_encoder_forward.21} parent=0 // pred_region
    %v80 = vld [vmem:[#allocation2] sm:$0xff]
    %v81 = vld [vmem:[%s2] sm:$0x1]
    %v83 = vperm.slane %v81, 0
    %v85 = vadd.f32 %v80, %v83
    %v86 = vld [vmem:[%s3] sm:$0xf]
    %v87 = vunpack.c.l.bf16 %v86
    %v88 = vadd.f32 %v85, %v87
    %v89 = vpack.c.bf16 %v88, %v88
    %vm90 = vcmask 519168
    %91 = vst.msk [vmem:[%s4] sm:$0xf] %vm90, %v89
  $region25: #{clap_audio_encoder_forward.21} parent=0 // pred_fallthru
    _
  // Predicated region
  $region26: #{clap_audio_encoder_forward.21} parent=0 // pred_check
    _
  $region27: #{clap_audio_encoder_forward.21} parent=0 // pred_check_branch
    %93 = sbr.rel (0) target = $region29
  $region28: #{clap_audio_encoder_forward.21} parent=0 // pred_region
    _
  $region29: #{clap_audio_encoder_forward.21} parent=0 // pred_fallthru
    _
  // Predicated region
  $region30: #{clap_audio_encoder_forward.21} parent=0 // pred_check
    _
  $region31: #{clap_audio_encoder_forward.21} parent=0 // pred_check_branch
    %95 = sbr.rel (0) target = $region33
  $region32: #{clap_audio_encoder_forward.21} parent=0 // pred_region
    _
  $region33: #{clap_audio_encoder_forward.21} parent=0 // pred_fallthru
    _

// kernel: clap_audio_encoder_forward.22
$region0: #{clap_audio_encoder_forward.22}
  #allocation0 [shape = 'u32[]', space=smem, size = 0x4, offset = 0x4, fixed_abs, tag = 'smem constant byte address 0x4 - core index']
  #allocation1 [shape = 'u32[72,128]{1,0:T(1,128)}', space=vmem, size = 0x9000, scoped, tag = 'internal scratch']
  %s0 = inlined_call_operand.vmem [shape: bf16[8,64], index: 0, kind: input, shape index: {}]
  %s1 = inlined_call_operand.vmem [shape: f32[1,64], index: 1, kind: input, shape index: {}]
  %s2 = inlined_call_operand.vmem [shape: f32[1,64], index: 2, kind: input, shape index: {}]
  %s3 = inlined_call_operand.vmem [shape: bf16[64,128], index: 3, kind: input, shape index: {}]
  %s4 = inlined_call_operand.vmem [shape: f32[1,128], index: 4, kind: input, shape index: {}]
  %s5 = inlined_call_operand.vmem [shape: bf16[8,128], index: 5, kind: output, shape index: {}]
  %s6 = sld [smem:[#allocation0]]
  $region30: #{clap_audio_encoder_forward.22} parent=0
    _
  %s8 = ssub.s32 1, %s6
  %s9 = scalar_select 0, %s8, %s6
  // Predicated region
  $region2: #{clap_audio_encoder_forward.22} parent=0 // pred_check
    _
  $region3: #{clap_audio_encoder_forward.22} parent=0 // pred_check_branch
    %11 = sbr.rel (0) target = $region5
  $region4: #{clap_audio_encoder_forward.22} parent=0 // pred_region
    _
  $region5: #{clap_audio_encoder_forward.22} parent=0 // pred_fallthru
    _
  // Predicated region
  $region6: #{clap_audio_encoder_forward.22} parent=0 // pred_check
    _
  $region7: #{clap_audio_encoder_forward.22} parent=0 // pred_check_branch
    %13 = sbr.rel (0) target = $region9
  $region8: #{clap_audio_encoder_forward.22} parent=0 // pred_region
    _
  $region9: #{clap_audio_encoder_forward.22} parent=0 // pred_fallthru
    _
  // Predicated region
  $region10: #{clap_audio_encoder_forward.22} parent=0 // pred_check
    _
  $region11: #{clap_audio_encoder_forward.22} parent=0 // pred_check_branch
    %15 = sbr.rel (0) target = $region13
  $region12: #{clap_audio_encoder_forward.22} parent=0 // pred_region
    _
  $region13: #{clap_audio_encoder_forward.22} parent=0 // pred_fallthru
    _
  // Predicated region
  $region14: #{clap_audio_encoder_forward.22} parent=0 // pred_check
    _
  $region15: #{clap_audio_encoder_forward.22} parent=0 // pred_check_branch
    %17 = sbr.rel (0) target = $region17
  $region16: #{clap_audio_encoder_forward.22} parent=0 // pred_region
    _
  $region17: #{clap_audio_encoder_forward.22} parent=0 // pred_fallthru
    _
  // Predicated region
  $region18: #{clap_audio_encoder_forward.22} parent=0 // pred_check
    _
  $region19: #{clap_audio_encoder_forward.22} parent=0 // pred_check_branch
    %19 = sbr.rel (0) target = $region21
  $region20: #{clap_audio_encoder_forward.22} parent=0 // pred_region
    _
  $region21: #{clap_audio_encoder_forward.22} parent=0 // pred_fallthru
    _
  %v21 = vld [vmem:[%s0] sm:$0xf]
  %v22 = vunpack.c.l.bf16 %v21
  %vm23 = vcmask 523264
  %v24 = vsel %vm23, %v22, 0.0
  %25 = vadd.xlane.f32.xlu0 %v24
  %v26 = vpop.xlane.xlu0 %25
  %v27 = vrcp.pop 64.0
  %v28 = vmul.f32 64.0, %v27
  %v29 = vsub.f32 1.0, %v28
  %v30 = vmul.f32 %v27, %v29
  %v31 = vadd.f32 %v27, %v30
  %vm32 = vweird.f32 %v27
  %v33 = vsel %vm32, %v27, %v31
  %v34 = vmul.f32 %v26, %v33
  %v35 = vsub.f32 %v22, %v34
  %v36 = vmul.f32 %v35, %v35
  %v37 = vsel %vm23, %v36, 0.0
  %38 = vadd.xlane.f32.xlu0 %v37
  %v39 = vpop.xlane.xlu0 %38
  %v40 = vmul.f32 %v39, %v33
  %v41 = vadd.f32 %v40, 1e-05
  %v42 = vrsqrt.pop %v41
  %v43 = vmul.f32 %v42, %v41
  %v44 = vmul.f32 %v43, %v42
  %v45 = vmul.f32 0.5, %v44
  %v46 = vsub.f32 1.5, %v45
  %v47 = vmul.f32 %v42, %v46
  %vm48 = vweird.f32 %v41
  %vm49 = vweird.f32 %v42
  %vm50 = vmor %vm48, %vm49
  %v51 = vsel %vm50, %v42, %v47
  %v52 = vmul.f32 %v35, %v51
  %v53 = vld [vmem:[%s1] sm:$0x1]
  %v55 = vperm.slane %v53, 0
  %v57 = vmul.f32 %v52, %v55
  %v58 = vld [vmem:[%s2] sm:$0x1]
  %v60 = vperm.slane %v58, 0
  %v62 = vadd.f32 %v57, %v60
  %v63 = vpack.c.bf16 %v62, %v62
  %v64 = vld [vmem:[%s3] sm:$0xf]
  %v65 = vld [vmem:[%s3 + $0x4] sm:$0xf]
  %v66 = vld [vmem:[%s3 + $0x8] sm:$0xf]
  %v67 = vld [vmem:[%s3 + $0xc] sm:$0xf]
  %v68 = vld [vmem:[%s3 + $0x10] sm:$0xf]
  %v69 = vld [vmem:[%s3 + $0x14] sm:$0xf]
  %v70 = vld [vmem:[%s3 + $0x18] sm:$0xf]
  %v71 = vld [vmem:[%s3 + $0x1c] sm:$0xf]
  %v72 = vld [vmem:[%s4] sm:$0x1]
  %v74 = vperm.slane %v72, 0
  %v84 = vunpack.c.l.b16 %v64
  %v85 = vunpack.c.l.b16 %v65
  %v86 = vunpack.c.l.b16 %v66
  %v87 = vunpack.c.l.b16 %v67
  %v88 = vunpack.c.l.b16 %v68
  %v89 = vunpack.c.l.b16 %v69
  %v90 = vunpack.c.l.b16 %v70
  %v91 = vunpack.c.l.b16 %v71
  %v92 = vpack.c.b16 %v85, %v84
  %v93 = vpack.c.b16 %v87, %v86
  %v94 = vpack.c.b16 %v89, %v88
  %v95 = vpack.c.b16 %v91, %v90
  %v101 = vsel %vm23, %v63, 0
  %103 = vmatpush.bf16.msra.mxu0 0
  %104 = vmatpush.bf16.msra.mxu0 0
  %105 = vmatpush.bf16.msra.mxu0 0
  %106 = vmatpush.bf16.msra.mxu0 0
  %107 = vmatpush.bf16.msra.mxu0 %v95
  %108 = vmatpush.bf16.msra.mxu0 %v94
  %109 = vmatpush.bf16.msra.mxu0 %v93
  %110 = vmatpush.bf16.msra.mxu0 %v92
  %111 = vmatmul.bf16.gmra.mxu0 %v101
  %v112 = vpop.f32.mrf.mxu0
  %v113 = vadd.f32 %v74, %v112
  %v114 = vpop.f32.mrf.mxu0
  %115 = vdwg.mxu0
  %v116 = vmul.f32 %v113, %v113
  %v117 = vmul.f32 %v113, %v116
  %v118 = vmul.f32 %v117, 0.044715
  %v119 = vadd.f32 %v113, %v118
  %v120 = vmul.f32 %v119, 0.7978846
  %v121 = vtanh.pop %v120
  %v122 = vadd.f32 %v121, 1.0
  %v123 = vmul.f32 %v122, 0.5
  %v124 = vmul.f32 %v113, %v123
  %v125 = vpack.c.bf16 %v124, %v124
  %126 = vst [vmem:[%s5] sm:$0xf] %v125
  // Predicated region
  $region22: #{clap_audio_encoder_forward.22} parent=0 // pred_check
    _
  $region23: #{clap_audio_encoder_forward.22} parent=0 // pred_check_branch
    %128 = sbr.rel (0) target = $region25
  $region24: #{clap_audio_encoder_forward.22} parent=0 // pred_region
    _
  $region25: #{clap_audio_encoder_forward.22} parent=0 // pred_fallthru
    _
  // Predicated region
  $region26: #{clap_audio_encoder_forward.22} parent=0 // pred_check
    _
  $region27: #{clap_audio_encoder_forward.22} parent=0 // pred_check_branch
    %130 = sbr.rel (0) target = $region29
  $region28: #{clap_audio_encoder_forward.22} parent=0 // pred_region
    _
  $region29: #{clap_audio_encoder_forward.22} parent=0 // pred_fallthru
    _

// kernel: clap_audio_encoder_forward.20
$region0: #{clap_audio_encoder_forward.20}
  #allocation0 [shape = 'u32[]', space=smem, size = 0x4, offset = 0x4, fixed_abs, tag = 'smem constant byte address 0x4 - core index']
  #allocation1 [shape = 'u32[72,128]{1,0:T(1,128)}', space=vmem, size = 0x9000, scoped, tag = 'internal scratch']
  #allocation2 [shape = 'f32[4,4,1]{2,1,0:T(4,128)}', space=vmem, size = 0x2000, scoped, tag = 'scratch operand']
  #allocation3 [shape = 'f32[4,4,1]{2,1,0:T(4,128)}', space=vmem, size = 0x2000, scoped, tag = 'scratch operand']
  #allocation4 [shape = 'f32[4,64]{1,0:T(4,128)}', space=vmem, size = 0x800, scoped, tag = 'scratch operand']
  %s0 = inlined_call_operand.vmem [shape: bf16[2,4,64], index: 0, kind: input, shape index: {}]
  %s1 = inlined_call_operand.vmem [shape: bf16[2,4,64], index: 1, kind: input, shape index: {}]
  %s2 = inlined_call_operand.vmem [shape: bf16[2,4,64], index: 2, kind: input, shape index: {}]
  %s3 = inlined_call_operand.vmem [shape: bf16[2,4,64], index: 3, kind: output, shape index: {}]
  %s4 = sld [smem:[#allocation0]]
  $region53: #{clap_audio_encoder_forward.20} parent=0
    _
  %s6 = ssub.s32 1, %s4
  %s7 = scalar_select 0, %s6, %s4
  loop: start=0, step=1, limit=4
  $region2: #{clap_audio_encoder_forward.20} parent=0 // loop_pre_header
    _
  $region3: #{clap_audio_encoder_forward.20} parent=0 // loop_header
    %s9 = sphi 0, %s13
    %p10 = scmp.ge.s32.totalorder %s9, 4
    %s16 = sphi 0, %s35
    %s17 = sphi 0, %s31
    %s18 = sphi 0, %s27
    %s19 = sphi 0, %s16
    %s20 = sphi 0, %s17
    %s21 = sphi 0, %s18
    %s22 = sphi 0, %s19
    %s23 = sphi 0, %s20
    %s24 = sphi 0, %s21
    %s40 = sphi 0, %s42
    %s43 = sphi 0, %s40
    %s44 = sphi 0, %s43
    %s60 = sphi 0, %s44
    %s68 = sphi 0, %s70
    %s71 = sphi 0, %s68
    %s72 = sphi 0, %s71
    %s88 = sphi 0, %s72
    %s96 = sphi 0, %s98
    %s99 = sphi 0, %s96
    %s100 = sphi 0, %s99
    %s116 = sphi 0, %s100
    %s124 = sphi 0, %s126
    %s127 = sphi 0, %s124
    %s128 = sphi 0, %s127
    %s144 = sphi 0, %s128
  $region4: #{clap_audio_encoder_forward.20} parent=0 // loop_header_branch
    %12 = sbr.rel (%p10) target = $region8
  $region5: #{clap_audio_encoder_forward.20} parent=0 // loop_body
    %s14 = ssub.s32 %s9, 1
    %s15 = ssub.s32 %s9, 2
    %s25 = sadd.s32 1, %s18
    %p26 = scmp.ge.s32.totalorder %s25, 1
    %s27 = scalar_select %p26, 0, %s25
    %s28 = sadd.s32 1, %s17
    %s29 = scalar_select %p26, %s28, %s17
    %p30 = scmp.ge.s32.totalorder %s29, 1
    %s31 = scalar_select %p30, 0, %s29
    %s32 = sadd.s32 1, %s16
    %s33 = scalar_select %p30, %s32, %s16
    %p34 = scmp.ge.s32.totalorder %s33, 2
    %s35 = scalar_select %p34, 0, %s33
    %s36 = ssub.s32 %s16, %s35
    %s37 = ssub.s32 %s17, %s31
    %s38 = sor.u32 %s36, %s37
    %p39 = scmp.eq.s32.totalorder %s38, 0
    %s41 = sadd.s32 %s40, 1
    %s42 = scalar_select %p39, %s40, %s41
    %p45 = pneg %p39
    %p46 = scmp.eq.s32.totalorder %s9, 1
    %p47 = por %p45, %p46
    %p48 = scmp.ne.s32.totalorder %s40, %s43
    %p49 = scmp.eq.s32.totalorder %s9, 0
    %p50 = por %p48, %p49
    %p51 = scmp.ne.s32.totalorder %s40, %s43
    %p52 = scmp.eq.s32.totalorder %s14, 1
    %p53 = por %p51, %p52
    %p54 = scmp.ne.s32.totalorder %s43, %s44
    %p55 = scmp.eq.s32.totalorder %s14, 0
    %p56 = por %p54, %p55
    %p57 = scmp.ne.s32.totalorder %s43, %s44
    %p58 = scmp.eq.s32.totalorder %s15, 1
    %p59 = por %p57, %p58
    %p61 = scmp.ne.s32.totalorder %s44, %s60
    %p62 = scmp.eq.s32.totalorder %s15, 0
    %p63 = por %p61, %p62
    %s64 = ssub.s32 %s16, %s35
    %s65 = ssub.s32 %s18, %s27
    %s66 = sor.u32 %s64, %s65
    %p67 = scmp.eq.s32.totalorder %s66, 0
    %s69 = sadd.s32 %s68, 1
    %s70 = scalar_select %p67, %s68, %s69
    %p73 = pneg %p67
    %p74 = scmp.eq.s32.totalorder %s9, 1
    %p75 = por %p73, %p74
    %p76 = scmp.ne.s32.totalorder %s68, %s71
    %p77 = scmp.eq.s32.totalorder %s9, 0
    %p78 = por %p76, %p77
    %p79 = scmp.ne.s32.totalorder %s68, %s71
    %p80 = scmp.eq.s32.totalorder %s14, 1
    %p81 = por %p79, %p80
    %p82 = scmp.ne.s32.totalorder %s71, %s72
    %p83 = scmp.eq.s32.totalorder %s14, 0
    %p84 = por %p82, %p83
    %p85 = scmp.ne.s32.totalorder %s71, %s72
    %p86 = scmp.eq.s32.totalorder %s15, 1
    %p87 = por %p85, %p86
    %p89 = scmp.ne.s32.totalorder %s72, %s88
    %p90 = scmp.eq.s32.totalorder %s15, 0
    %p91 = por %p89, %p90
    %s92 = ssub.s32 %s16, %s35
    %s93 = ssub.s32 %s18, %s27
    %s94 = sor.u32 %s92, %s93
    %p95 = scmp.eq.s32.totalorder %s94, 0
    %s97 = sadd.s32 %s96, 1
    %s98 = scalar_select %p95, %s96, %s97
    %p101 = pneg %p95
    %p102 = scmp.eq.s32.totalorder %s9, 1
    %p103 = por %p101, %p102
    %p104 = scmp.ne.s32.totalorder %s96, %s99
    %p105 = scmp.eq.s32.totalorder %s9, 0
    %p106 = por %p104, %p105
    %p107 = scmp.ne.s32.totalorder %s96, %s99
    %p108 = scmp.eq.s32.totalorder %s14, 1
    %p109 = por %p107, %p108
    %p110 = scmp.ne.s32.totalorder %s99, %s100
    %p111 = scmp.eq.s32.totalorder %s14, 0
    %p112 = por %p110, %p111
    %p113 = scmp.ne.s32.totalorder %s99, %s100
    %p114 = scmp.eq.s32.totalorder %s15, 1
    %p115 = por %p113, %p114
    %p117 = scmp.ne.s32.totalorder %s100, %s116
    %p118 = scmp.eq.s32.totalorder %s15, 0
    %p119 = por %p117, %p118
    %s120 = ssub.s32 %s16, %s35
    %s121 = ssub.s32 %s17, %s31
    %s122 = sor.u32 %s120, %s121
    %p123 = scmp.eq.s32.totalorder %s122, 0
    %s125 = sadd.s32 %s124, 1
    %s126 = scalar_select %p123, %s124, %s125
    %p129 = pneg %p123
    %p130 = scmp.eq.s32.totalorder %s9, 1
    %p131 = por %p129, %p130
    %p132 = scmp.ne.s32.totalorder %s124, %s127
    %p133 = scmp.eq.s32.totalorder %s9, 0
    %p134 = por %p132, %p133
    %p135 = scmp.ne.s32.totalorder %s124, %s127
    %p136 = scmp.eq.s32.totalorder %s14, 1
    %p137 = por %p135, %p136
    %p138 = scmp.ne.s32.totalorder %s127, %s128
    %p139 = scmp.eq.s32.totalorder %s14, 0
    %p140 = por %p138, %p139
    %p141 = scmp.ne.s32.totalorder %s127, %s128
    %p142 = scmp.eq.s32.totalorder %s15, 1
    %p143 = por %p141, %p142
    %p145 = scmp.ne.s32.totalorder %s128, %s144
    %p146 = scmp.eq.s32.totalorder %s15, 0
    %p147 = por %p145, %p146
    %p148 = scmp.le.s32.totalorder 1, %s9
    %p149 = scmp.lt.s32.totalorder %s9, 3
    %p150 = pnand %p148, %p149
    %p151 = pneg %p150
    // Predicated region
    $region9: #{clap_audio_encoder_forward.20} parent=5 // pred_check
      _
    $region10: #{clap_audio_encoder_forward.20} parent=5 // pred_check_branch
      %153 = sbr.rel (%p150) target = $region12
    $region11: #{clap_audio_encoder_forward.20} parent=5 // pred_region
      %s154 = ssub.s32 %s9, 1
    $region12: #{clap_audio_encoder_forward.20} parent=5 // pred_fallthru
      _
    %p155 = scmp.lt.s32.totalorder %s9, 2
    // Predicated region
    $region13: #{clap_audio_encoder_forward.20} parent=5 // pred_check
      %p156 = pneg %p155
    $region14: #{clap_audio_encoder_forward.20} parent=5 // pred_check_branch
      %158 = sbr.rel (%p156) target = $region16
    $region15: #{clap_audio_encoder_forward.20} parent=5 // pred_region
      // Predicated region
      $region17: #{clap_audio_encoder_forward.20} parent=15 // pred_check
        %p159 = pneg %p50
      $region18: #{clap_audio_encoder_forward.20} parent=15 // pred_check_branch
        %161 = sbr.rel (%p159) target = $region20
      $region19: #{clap_audio_encoder_forward.20} parent=15 // pred_region
        %p162 = scmp.lt.s32.totalorder %s16, 1
        %s163 = scalar_select %p162, %s16, 1
        %p164 = scmp.lt.s32.totalorder %s17, 0
        %s165 = scalar_select %p164, %s17, 0
        %s166 = sadd.s32 %s165, %s163
        %s167 = smul.addr %s166, 2
        %s168 = scalar_lea.vmem %s0, %s167
      $region20: #{clap_audio_encoder_forward.20} parent=15 // pred_fallthru
        _
      // Predicated region
      $region21: #{clap_audio_encoder_forward.20} parent=15 // pred_check
        %p169 = pneg %p78
      $region22: #{clap_audio_encoder_forward.20} parent=15 // pred_check_branch
        %171 = sbr.rel (%p169) target = $region24
      $region23: #{clap_audio_encoder_forward.20} parent=15 // pred_region
        %p172 = scmp.lt.s32.totalorder %s16, 1
        %s173 = scalar_select %p172, %s16, 1
        %p174 = scmp.lt.s32.totalorder %s18, 0
        %s175 = scalar_select %p174, %s18, 0
        %s176 = sadd.s32 %s175, %s173
        %s177 = smul.addr %s176, 2
        %s178 = scalar_lea.vmem %s1, %s177
      $region24: #{clap_audio_encoder_forward.20} parent=15 // pred_fallthru
        _
      // Predicated region
      $region25: #{clap_audio_encoder_forward.20} parent=15 // pred_check
        %p179 = pneg %p106
      $region26: #{clap_audio_encoder_forward.20} parent=15 // pred_check_branch
        %181 = sbr.rel (%p179) target = $region28
      $region27: #{clap_audio_encoder_forward.20} parent=15 // pred_region
        %p182 = scmp.lt.s32.totalorder %s16, 1
        %s183 = scalar_select %p182, %s16, 1
        %p184 = scmp.lt.s32.totalorder %s18, 0
        %s185 = scalar_select %p184, %s18, 0
        %s186 = sadd.s32 %s185, %s183
        %s187 = smul.addr %s186, 2
        %s188 = scalar_lea.vmem %s2, %s187
      $region28: #{clap_audio_encoder_forward.20} parent=15 // pred_fallthru
        _
    $region16: #{clap_audio_encoder_forward.20} parent=5 // pred_fallthru
      _
    %p189 = scmp.le.s32.totalorder 1, %s9
    %p190 = scmp.lt.s32.totalorder %s9, 3
    %p191 = pnand %p189, %p190
    %p192 = pneg %p191
    // Predicated region
    $region29: #{clap_audio_encoder_forward.20} parent=5 // pred_check
      _
    $region30: #{clap_audio_encoder_forward.20} parent=5 // pred_check_branch
      %194 = sbr.rel (%p191) target = $region32
    $region31: #{clap_audio_encoder_forward.20} parent=5 // pred_region
      %s195 = ssub.s32 %s9, 1
      %p196 = scmp.lt.s32.totalorder %s19, 1
      %s197 = scalar_select %p196, %s19, 1
      %p198 = scmp.lt.s32.totalorder %s20, 0
      %s199 = scalar_select %p198, %s20, 0
      %s200 = sadd.s32 %s199, %s197
      %s201 = smul.addr %s200, 2
      %s202 = scalar_lea.vmem %s0, %s201
      %p203 = pneg %p56
      %p204 = pneg %p53
      %p205 = scmp.lt.s32.totalorder %s19, 1
      %s206 = scalar_select %p205, %s19, 1
      %p207 = scmp.lt.s32.totalorder %s21, 0
      %s208 = scalar_select %p207, %s21, 0
      %s209 = sadd.s32 %s208, %s206
      %s210 = smul.addr %s209, 2
      %s211 = scalar_lea.vmem %s1, %s210
      %p212 = pneg %p84
      %p213 = pneg %p81
      %p214 = scmp.lt.s32.totalorder %s19, 1
      %s215 = scalar_select %p214, %s19, 1
      %p216 = scmp.lt.s32.totalorder %s21, 0
      %s217 = scalar_select %p216, %s21, 0
      %s218 = sadd.s32 %s217, %s215
      %s219 = smul.addr %s218, 2
      %s220 = scalar_lea.vmem %s2, %s219
      %p221 = pneg %p112
      %p222 = pneg %p109
      %p223 = pneg %p140
      %p224 = pneg %p137
      %p225 = scmp.lt.s32.totalorder %s19, 1
      %s226 = scalar_select %p225, %s19, 1
      %p227 = scmp.lt.s32.totalorder %s20, 0
      %s228 = scalar_select %p227, %s20, 0
      %s229 = sadd.s32 %s228, %s226
      %s230 = smul.addr %s229, 2
      %s231 = scalar_lea.vmem %s3, %s230
      %p232 = scmp.lt.s32.totalorder %s19, 1
      %s233 = scalar_select %p232, %s19, 1
      %p234 = scmp.lt.s32.totalorder %s20, 0
      %s235 = scalar_select %p234, %s20, 0
      %s236 = sadd.s32 %s235, %s233
      %s237 = smul.addr %s236, 2
      %s238 = scalar_lea.vmem %s0, %s237
      %p239 = scmp.lt.s32.totalorder %s19, 1
      %s240 = scalar_select %p239, %s19, 1
      %p241 = scmp.lt.s32.totalorder %s21, 0
      %s242 = scalar_select %p241, %s21, 0
      %s243 = sadd.s32 %s242, %s240
      %s244 = smul.addr %s243, 2
      %s245 = scalar_lea.vmem %s1, %s244
      %p246 = scmp.lt.s32.totalorder %s19, 1
      %s247 = scalar_select %p246, %s19, 1
      %p248 = scmp.lt.s32.totalorder %s21, 0
      %s249 = scalar_select %p248, %s21, 0
      %s250 = sadd.s32 %s249, %s247
      %s251 = smul.addr %s250, 2
      %s252 = scalar_lea.vmem %s2, %s251
      %p253 = scmp.lt.s32.totalorder %s19, 1
      %s254 = scalar_select %p253, %s19, 1
      %p255 = scmp.lt.s32.totalorder %s20, 0
      %s256 = scalar_select %p255, %s20, 0
      %s257 = sadd.s32 %s256, %s254
      %s258 = smul.addr %s257, 2
      %s259 = scalar_lea.vmem %s3, %s258
      %p261 = scmp.eq.s32.totalorder %s21, 0
      // Predicated region
      $region33: #{clap_audio_encoder_forward.20} parent=31 // pred_check
        %p262 = pneg %p261
      $region34: #{clap_audio_encoder_forward.20} parent=31 // pred_check_branch
        %264 = sbr.rel (%p262) target = $region36
      $region35: #{clap_audio_encoder_forward.20} parent=31 // pred_region
        %vm265 = vcmask 3072
        %266 = vst.msk [vmem:[#allocation2] sm:$0xf] %vm265, -inf
        %267 = vst.msk [vmem:[#allocation2 + $0x4] sm:$0xf] %vm265, -inf
        %268 = vst.msk [vmem:[#allocation2 + $0x8] sm:$0xf] %vm265, -inf
        %269 = vst.msk [vmem:[#allocation2 + $0xc] sm:$0xf] %vm265, -inf
        %270 = vst.msk [vmem:[#allocation3] sm:$0xf] %vm265, 0.0
        %271 = vst.msk [vmem:[#allocation3 + $0x4] sm:$0xf] %vm265, 0.0
        %272 = vst.msk [vmem:[#allocation3 + $0x8] sm:$0xf] %vm265, 0.0
        %273 = vst.msk [vmem:[#allocation3 + $0xc] sm:$0xf] %vm265, 0.0
        %vm274 = vcmask 519168
        %275 = vst.msk [vmem:[#allocation4] sm:$0xf] %vm274, 0.0
      $region36: #{clap_audio_encoder_forward.20} parent=31 // pred_fallthru
        _
      %v276 = vld [vmem:[%s238] sm:$0x3]
      %v277 = vunpack.c.l.bf16 %v276
      %v278 = vmul.f32 %v277, 0.25
      %v279 = vpack.c.bf16 %v278, %v278
      %v280 = vld [vmem:[%s245] sm:$0x3]
      %v281 = vld [vmem:[%s252] sm:$0x3]
      %vm282 = vcmask 130048
      %v284 = vsel %vm282, %v279, 0
      %v287 = vsel %vm282, %v280, 0
      %289 = vmatpush.bf16.xpose.msra.mxu0 0
      %290 = vmatpush.bf16.xpose.msra.mxu0 0
      %291 = vmatpush.bf16.xpose.msra.mxu0 0
      %292 = vmatpush.bf16.xpose.msra.mxu0 0
      %293 = vmatpush.bf16.xpose.msra.mxu0 0
      %294 = vmatpush.bf16.xpose.msra.mxu0 0
      %295 = vmatpush.bf16.xpose.msra.mxu0 0
      %296 = vmatpush.bf16.xpose.msra.mxu0 %v287
      %297 = vmatmul.bf16.gmra.mxu0 %v284
      %v298 = vpop.f32.mrf.mxu0
      %v299 = vadd.f32 0.0, %v298
      %v300 = vpop.f32.mrf.mxu0
      %301 = vdwg.mxu0
      %v302 = vld [vmem:[#allocation2] sm:$0xf]
      %vm303 = vcmask 27648
      %v304 = vsel %vm303, %v299, -inf
      %305 = vmax.xlane.f32.xlu0 %v304
      %v306 = vpop.xlane.xlu0 %305
      %v307 = vmax.f32 %v302, %v306
      %v308 = vsub.f32 %v302, %v307
      %v309 = vmul.f32 %v308, 1.442695
      %v310 = vpow.pop %v309
      %312 = vset.pattern.permute.xlu0 0
      %313 = vperm.xlu0 %312, %v307
      %v314 = vpop.permute.xlu0 %313
      %v316 = vsub.f32 %v299, %v314
      %v317 = vmul.f32 %v316, 1.442695
      %v318 = vpow.pop %v317
      %v319 = vld [vmem:[#allocation3] sm:$0xf]
      %v320 = vmul.f32 %v310, %v319
      %v321 = vsel %vm303, %v318, 0.0
      %322 = vadd.xlane.f32.xlu0 %v321
      %v323 = vpop.xlane.xlu0 %322
      %v324 = vadd.f32 %v320, %v323
      %vm325 = vcmask 3072
      %326 = vst.msk [vmem:[#allocation3] sm:$0xf] %vm325, %v324
      %v327 = vld [vmem:[#allocation4] sm:$0xf]
      %329 = vset.pattern.permute.xlu0 0
      %330 = vperm.xlu0 %329, %v310
      %v331 = vpop.permute.xlu0 %330
      %v333 = vmul.f32 %v331, %v327
      %v334 = vpack.c.bf16 %v318, %v318
      %vm335 = vcmask 31744
      %v337 = vsel %vm335, %v334, 0
      %vm339 = vcmask 1041408
      %v341 = vsel %vm339, %v281, 0
      %343 = vmatpush.bf16.msra.mxu0 0
      %344 = vmatpush.bf16.msra.mxu0 0
      %345 = vmatpush.bf16.msra.mxu0 0
      %346 = vmatpush.bf16.msra.mxu0 0
      %347 = vmatpush.bf16.msra.mxu0 0
      %348 = vmatpush.bf16.msra.mxu0 0
      %349 = vmatpush.bf16.msra.mxu0 0
      %350 = vmatpush.bf16.msra.mxu0 %v341
      %351 = vmatmul.bf16.gmra.mxu0 %v337
      %v352 = vpop.f32.mrf.mxu0
      %v353 = vadd.f32 0.0, %v352
      %v354 = vpop.f32.mrf.mxu0
      %355 = vdwg.mxu0
      %v356 = vadd.f32 %v333, %v353
      %vm357 = vcmask 125952
      %358 = vst.msk [vmem:[#allocation4] sm:$0xf] %vm357, %v356
      %359 = vst.msk [vmem:[#allocation2] sm:$0xf] %vm325, %v307
      %v360 = vld [vmem:[%s238] sm:$0x3]
      %v361 = vunpack.c.l.bf16 %v360
      %v362 = vmul.f32 %v361, 0.25
      %v363 = vpack.c.bf16 %v362, %v362
      %v364 = vld [vmem:[%s245] sm:$0x3]
      %v365 = vld [vmem:[%s252] sm:$0x3]
      %367 = vrot.lane.b32.xlu0 %v363, 112
      %v368 = vpop.permute.xlu0 %367
      %370 = vst [vmem:[#allocation1] ss:$4 sm:$0xff] %v364
      %v371 = vld.sshfl [vmem:[#allocation1] sm:$0xff pattern:$0x73625140]
      %373 = vrot.lane.b32.xlu0 %v371, 112
      %v374 = vpop.permute.xlu0 %373
      %v376 = vsel %vm282, %v368, 0
      %v379 = vsel %vm282, %v374, 0
      %381 = vmatpush.bf16.xpose.msra.mxu0 0
      %382 = vmatpush.bf16.xpose.msra.mxu0 0
      %383 = vmatpush.bf16.xpose.msra.mxu0 0
      %384 = vmatpush.bf16.xpose.msra.mxu0 0
      %385 = vmatpush.bf16.xpose.msra.mxu0 0
      %386 = vmatpush.bf16.xpose.msra.mxu0 0
      %387 = vmatpush.bf16.xpose.msra.mxu0 0
      %388 = vmatpush.bf16.xpose.msra.mxu0 %v379
      %389 = vmatmul.bf16.gmra.mxu0 %v376
      %v390 = vpop.f32.mrf.mxu0
      %v391 = vadd.f32 0.0, %v390
      %v392 = vpop.f32.mrf.mxu0
      %393 = vdwg.mxu0
      %s394 = scalar_lea.vmem [#allocation2], 4
      %v395 = vld [vmem:[%s394] sm:$0xf]
      %v396 = vsel %vm303, %v391, -inf
      %397 = vmax.xlane.f32.xlu0 %v396
      %v398 = vpop.xlane.xlu0 %397
      %v399 = vmax.f32 %v395, %v398
      %v400 = vsub.f32 %v395, %v399
      %v401 = vmul.f32 %v400, 1.442695
      %v402 = vpow.pop %v401
      %404 = vset.pattern.permute.xlu0 0
      %405 = vperm.xlu0 %404, %v399
      %v406 = vpop.permute.xlu0 %405
      %v408 = vsub.f32 %v391, %v406
      %v409 = vmul.f32 %v408, 1.442695
      %v410 = vpow.pop %v409
      %s411 = scalar_lea.vmem [#allocation3], 4
      %v412 = vld [vmem:[%s411] sm:$0xf]
      %v413 = vmul.f32 %v402, %v412
      %v414 = vsel %vm303, %v410, 0.0
      %415 = vadd.xlane.f32.xlu0 %v414
      %v416 = vpop.xlane.xlu0 %415
      %v417 = vadd.f32 %v413, %v416
      %418 = vst.msk [vmem:[%s411] sm:$0xf] %vm325, %v417
      %v419 = vld [vmem:[#allocation4] sm:$0xf]
      %421 = vset.pattern.permute.xlu0 0
      %422 = vperm.xlu0 %421, %v402
      %v423 = vpop.permute.xlu0 %422
      %v425 = vmul.f32 %v423, %v419
      %v426 = vpack.c.bf16 %v410, %v410
      %428 = vst [vmem:[#allocation1] ss:$4 sm:$0xff] %v365
      %v429 = vld.sshfl [vmem:[#allocation1] sm:$0xff pattern:$0x73625140]
      %431 = vrot.lane.b32.xlu0 %v429, 112
      %v432 = vpop.permute.xlu0 %431
      %v434 = vsel %vm335, %v426, 0
      %v437 = vsel %vm339, %v432, 0
      %439 = vmatpush.bf16.msra.mxu0 0
      %440 = vmatpush.bf16.msra.mxu0 0
      %441 = vmatpush.bf16.msra.mxu0 0
      %442 = vmatpush.bf16.msra.mxu0 0
      %443 = vmatpush.bf16.msra.mxu0 0
      %444 = vmatpush.bf16.msra.mxu0 0
      %445 = vmatpush.bf16.msra.mxu0 0
      %446 = vmatpush.bf16.msra.mxu0 %v437
      %447 = vmatmul.bf16.gmra.mxu0 %v434
      %v448 = vpop.f32.mrf.mxu0
      %v449 = vadd.f32 0.0, %v448
      %v450 = vpop.f32.mrf.mxu0
      %451 = vdwg.mxu0
      %453 = vrot.lane.b32.xlu0 %v449, 16
      %v454 = vpop.permute.xlu0 %453
      %v456 = vadd.f32 %v425, %v454
      %vm457 = vcmask 257152
      %458 = vst.msk [vmem:[#allocation4] sm:$0xf] %vm457, %v456
      %459 = vst.msk [vmem:[%s394] sm:$0xf] %vm325, %v399
      %v460 = vld [vmem:[%s238] sm:$0x3]
      %v461 = vunpack.c.l.bf16 %v460
      %v462 = vmul.f32 %v461, 0.25
      %v463 = vpack.c.bf16 %v462, %v462
      %v464 = vld [vmem:[%s245] sm:$0x3]
      %v465 = vld [vmem:[%s252] sm:$0x3]
      %467 = vrot.lane.b32.xlu0 %v463, 96
      %v468 = vpop.permute.xlu0 %467
      %470 = vst [vmem:[#allocation1] ss:$4 sm:$0xff] %v464
      %v471 = vld.sshfl [vmem:[#allocation1] sm:$0xff pattern:$0x73625140]
      %473 = vrot.lane.b32.xlu0 %v471, 96
      %v474 = vpop.permute.xlu0 %473
      %v476 = vsel %vm282, %v468, 0
      %v479 = vsel %vm282, %v474, 0
      %481 = vmatpush.bf16.xpose.msra.mxu0 0
      %482 = vmatpush.bf16.xpose.msra.mxu0 0
      %483 = vmatpush.bf16.xpose.msra.mxu0 0
      %484 = vmatpush.bf16.xpose.msra.mxu0 0
      %485 = vmatpush.bf16.xpose.msra.mxu0 0
      %486 = vmatpush.bf16.xpose.msra.mxu0 0
      %487 = vmatpush.bf16.xpose.msra.mxu0 0
      %488 = vmatpush.bf16.xpose.msra.mxu0 %v479
      %489 = vmatmul.bf16.gmra.mxu0 %v476
      %v490 = vpop.f32.mrf.mxu0
      %v491 = vadd.f32 0.0, %v490
      %v492 = vpop.f32.mrf.mxu0
      %493 = vdwg.mxu0
      %s494 = scalar_lea.vmem [#allocation2], 8
      %v495 = vld [vmem:[%s494] sm:$0xf]
      %v496 = vsel %vm303, %v491, -inf
      %497 = vmax.xlane.f32.xlu0 %v496
      %v498 = vpop.xlane.xlu0 %497
      %v499 = vmax.f32 %v495, %v498
      %v500 = vsub.f32 %v495, %v499
      %v501 = vmul.f32 %v500, 1.442695
      %v502 = vpow.pop %v501
      %504 = vset.pattern.permute.xlu0 0
      %505 = vperm.xlu0 %504, %v499
      %v506 = vpop.permute.xlu0 %505
      %v508 = vsub.f32 %v491, %v506
      %v509 = vmul.f32 %v508, 1.442695
      %v510 = vpow.pop %v509
      %s511 = scalar_lea.vmem [#allocation3], 8
      %v512 = vld [vmem:[%s511] sm:$0xf]
      %v513 = vmul.f32 %v502, %v512
      %v514 = vsel %vm303, %v510, 0.0
      %515 = vadd.xlane.f32.xlu0 %v514
      %v516 = vpop.xlane.xlu0 %515
      %v517 = vadd.f32 %v513, %v516
      %518 = vst.msk [vmem:[%s511] sm:$0xf] %vm325, %v517
      %v519 = vld [vmem:[#allocation4] sm:$0xf]
      %521 = vset.pattern.permute.xlu0 0
      %522 = vperm.xlu0 %521, %v502
      %v523 = vpop.permute.xlu0 %522
      %v525 = vmul.f32 %v523, %v519
      %v526 = vpack.c.bf16 %v510, %v510
      %528 = vst [vmem:[#allocation1] ss:$4 sm:$0xff] %v465
      %v529 = vld.sshfl [vmem:[#allocation1] sm:$0xff pattern:$0x73625140]
      %531 = vrot.lane.b32.xlu0 %v529, 96
      %v532 = vpop.permute.xlu0 %531
      %v534 = vsel %vm335, %v526, 0
      %v537 = vsel %vm339, %v532, 0
      %539 = vmatpush.bf16.msra.mxu0 0
      %540 = vmatpush.bf16.msra.mxu0 0
      %541 = vmatpush.bf16.msra.mxu0 0
      %542 = vmatpush.bf16.msra.mxu0 0
      %543 = vmatpush.bf16.msra.mxu0 0
      %544 = vmatpush.bf16.msra.mxu0 0
      %545 = vmatpush.bf16.msra.mxu0 0
      %546 = vmatpush.bf16.msra.mxu0 %v537
      %547 = vmatmul.bf16.gmra.mxu0 %v534
      %v548 = vpop.f32.mrf.mxu0
      %v549 = vadd.f32 0.0, %v548
      %v550 = vpop.f32.mrf.mxu0
      %551 = vdwg.mxu0
      %553 = vrot.lane.b32.xlu0 %v549, 32
      %v554 = vpop.permute.xlu0 %553
      %v556 = vadd.f32 %v525, %v554
      %vm557 = vcmask 388352
      %558 = vst.msk [vmem:[#allocation4] sm:$0xf] %vm557, %v556
      %559 = vst.msk [vmem:[%s494] sm:$0xf] %vm325, %v499
      %v560 = vld [vmem:[%s238] sm:$0x3]
      %v561 = vunpack.c.l.bf16 %v560
      %v562 = vmul.f32 %v561, 0.25
      %v563 = vpack.c.bf16 %v562, %v562
      %v564 = vld [vmem:[%s245] sm:$0x3]
      %v565 = vld [vmem:[%s252] sm:$0x3]
      %567 = vrot.lane.b32.xlu0 %v563, 80
      %v568 = vpop.permute.xlu0 %567
      %570 = vst [vmem:[#allocation1] ss:$4 sm:$0xff] %v564
      %v571 = vld.sshfl [vmem:[#allocation1] sm:$0xff pattern:$0x73625140]
      %573 = vrot.lane.b32.xlu0 %v571, 80
      %v574 = vpop.permute.xlu0 %573
      %v576 = vsel %vm282, %v568, 0
      %v579 = vsel %vm282, %v574, 0
      %581 = vmatpush.bf16.xpose.msra.mxu0 0
      %582 = vmatpush.bf16.xpose.msra.mxu0 0
      %583 = vmatpush.bf16.xpose.msra.mxu0 0
      %584 = vmatpush.bf16.xpose.msra.mxu0 0
      %585 = vmatpush.bf16.xpose.msra.mxu0 0
      %586 = vmatpush.bf16.xpose.msra.mxu0 0
      %587 = vmatpush.bf16.xpose.msra.mxu0 0
      %588 = vmatpush.bf16.xpose.msra.mxu0 %v579
      %589 = vmatmul.bf16.gmra.mxu0 %v576
      %v590 = vpop.f32.mrf.mxu0
      %v591 = vadd.f32 0.0, %v590
      %v592 = vpop.f32.mrf.mxu0
      %593 = vdwg.mxu0
      %s594 = scalar_lea.vmem [#allocation2], 12
      %v595 = vld [vmem:[%s594] sm:$0xf]
      %v596 = vsel %vm303, %v591, -inf
      %597 = vmax.xlane.f32.xlu0 %v596
      %v598 = vpop.xlane.xlu0 %597
      %v599 = vmax.f32 %v595, %v598
      %v600 = vsub.f32 %v595, %v599
      %v601 = vmul.f32 %v600, 1.442695
      %v602 = vpow.pop %v601
      %604 = vset.pattern.permute.xlu0 0
      %605 = vperm.xlu0 %604, %v599
      %v606 = vpop.permute.xlu0 %605
      %v608 = vsub.f32 %v591, %v606
      %v609 = vmul.f32 %v608, 1.442695
      %v610 = vpow.pop %v609
      %s611 = scalar_lea.vmem [#allocation3], 12
      %v612 = vld [vmem:[%s611] sm:$0xf]
      %v613 = vmul.f32 %v602, %v612
      %v614 = vsel %vm303, %v610, 0.0
      %615 = vadd.xlane.f32.xlu0 %v614
      %v616 = vpop.xlane.xlu0 %615
      %v617 = vadd.f32 %v613, %v616
      %618 = vst.msk [vmem:[%s611] sm:$0xf] %vm325, %v617
      %v619 = vld [vmem:[#allocation4] sm:$0xf]
      %621 = vset.pattern.permute.xlu0 0
      %622 = vperm.xlu0 %621, %v602
      %v623 = vpop.permute.xlu0 %622
      %v625 = vmul.f32 %v623, %v619
      %v626 = vpack.c.bf16 %v610, %v610
      %628 = vst [vmem:[#allocation1] ss:$4 sm:$0xff] %v565
      %v629 = vld.sshfl [vmem:[#allocation1] sm:$0xff pattern:$0x73625140]
      %631 = vrot.lane.b32.xlu0 %v629, 80
      %v632 = vpop.permute.xlu0 %631
      %v634 = vsel %vm335, %v626, 0
      %v637 = vsel %vm339, %v632, 0
      %639 = vmatpush.bf16.msra.mxu0 0
      %640 = vmatpush.bf16.msra.mxu0 0
      %641 = vmatpush.bf16.msra.mxu0 0
      %642 = vmatpush.bf16.msra.mxu0 0
      %643 = vmatpush.bf16.msra.mxu0 0
      %644 = vmatpush.bf16.msra.mxu0 0
      %645 = vmatpush.bf16.msra.mxu0 0
      %646 = vmatpush.bf16.msra.mxu0 %v637
      %647 = vmatmul.bf16.gmra.mxu0 %v634
      %v648 = vpop.f32.mrf.mxu0
      %v649 = vadd.f32 0.0, %v648
      %v650 = vpop.f32.mrf.mxu0
      %651 = vdwg.mxu0
      %653 = vrot.lane.b32.xlu0 %v649, 48
      %v654 = vpop.permute.xlu0 %653
      %v656 = vadd.f32 %v625, %v654
      %vm657 = vcmask 519552
      %658 = vst.msk [vmem:[#allocation4] sm:$0xf] %vm657, %v656
      %659 = vst.msk [vmem:[%s594] sm:$0xf] %vm325, %v599
      // Predicated region
      $region37: #{clap_audio_encoder_forward.20} parent=31 // pred_check
        %p660 = pneg %p261
      $region38: #{clap_audio_encoder_forward.20} parent=31 // pred_check_branch
        %662 = sbr.rel (%p660) target = $region40
      $region39: #{clap_audio_encoder_forward.20} parent=31 // pred_region
        %v663 = vld [vmem:[#allocation3] sm:$0xf]
        %v664 = vrcp.pop %v663
        %v665 = vld [vmem:[#allocation4] sm:$0xf]
        %667 = vset.pattern.permute.xlu0 0
        %668 = vperm.xlu0 %667, %v664
        %v669 = vpop.permute.xlu0 %668
        %v671 = vmul.f32 %v665, %v669
        %v672 = vpack.c.bf16 %v671, %v671
        %vm673 = vcmask 123904
        %674 = vst.msk [vmem:[%s259] sm:$0x3] %vm673, %v672
        %v675 = vld [vmem:[%s411] sm:$0xf]
        %v676 = vrcp.pop %v675
        %v677 = vld [vmem:[#allocation4] sm:$0xf]
        %679 = vset.pattern.permute.xlu0 0
        %680 = vperm.xlu0 %679, %v676
        %v681 = vpop.permute.xlu0 %680
        %v683 = vmul.f32 %v677, %v681
        %v684 = vpack.c.bf16 %v683, %v683
        %vm685 = vcmask 255104
        %686 = vst.msk [vmem:[%s259] sm:$0x3] %vm685, %v684
        %v687 = vld [vmem:[%s511] sm:$0xf]
        %v688 = vrcp.pop %v687
        %v689 = vld [vmem:[#allocation4] sm:$0xf]
        %691 = vset.pattern.permute.xlu0 0
        %692 = vperm.xlu0 %691, %v688
        %v693 = vpop.permute.xlu0 %692
        %v695 = vmul.f32 %v689, %v693
        %v696 = vpack.c.bf16 %v695, %v695
        %vm697 = vcmask 386304
        %698 = vst.msk [vmem:[%s259] sm:$0x3] %vm697, %v696
        %v699 = vld [vmem:[%s611] sm:$0xf]
        %v700 = vrcp.pop %v699
        %v701 = vld [vmem:[#allocation4] sm:$0xf]
        %703 = vset.pattern.permute.xlu0 0
        %704 = vperm.xlu0 %703, %v700
        %v705 = vpop.permute.xlu0 %704
        %v707 = vmul.f32 %v701, %v705
        %v708 = vpack.c.bf16 %v707, %v707
        %vm709 = vcmask 517504
        %710 = vst.msk [vmem:[%s259] sm:$0x3] %vm709, %v708
      $region40: #{clap_audio_encoder_forward.20} parent=31 // pred_fallthru
        _
      %p711 = scmp.lt.s32.totalorder %s19, 1
      %s712 = scalar_select %p711, %s19, 1
      %p713 = scmp.lt.s32.totalorder %s20, 0
      %s714 = scalar_select %p713, %s20, 0
      %s715 = sadd.s32 %s714, %s712
      %s716 = smul.addr %s715, 2
      %s717 = scalar_lea.vmem %s3, %s716
      // Predicated region
      $region41: #{clap_audio_encoder_forward.20} parent=31 // pred_check
        %p718 = pneg %p137
      $region42: #{clap_audio_encoder_forward.20} parent=31 // pred_check_branch
        %720 = sbr.rel (%p718) target = $region44
      $region43: #{clap_audio_encoder_forward.20} parent=31 // pred_region
        _
      $region44: #{clap_audio_encoder_forward.20} parent=31 // pred_fallthru
        _
    $region32: #{clap_audio_encoder_forward.20} parent=5 // pred_fallthru
      _
    %p721 = scmp.le.s32.totalorder 2, %s9
    // Predicated region
    $region45: #{clap_audio_encoder_forward.20} parent=5 // pred_check
      %p722 = pneg %p721
    $region46: #{clap_audio_encoder_forward.20} parent=5 // pred_check_branch
      %724 = sbr.rel (%p722) target = $region48
    $region47: #{clap_audio_encoder_forward.20} parent=5 // pred_region
      %s725 = ssub.s32 %s9, 2
      // Predicated region
      $region49: #{clap_audio_encoder_forward.20} parent=47 // pred_check
        %p726 = pneg %p143
      $region50: #{clap_audio_encoder_forward.20} parent=47 // pred_check_branch
        %728 = sbr.rel (%p726) target = $region52
      $region51: #{clap_audio_encoder_forward.20} parent=47 // pred_region
        %p729 = scmp.lt.s32.totalorder %s22, 1
        %s730 = scalar_select %p729, %s22, 1
        %p731 = scmp.lt.s32.totalorder %s23, 0
        %s732 = scalar_select %p731, %s23, 0
        %s733 = sadd.s32 %s732, %s730
        %s734 = smul.addr %s733, 2
        %s735 = scalar_lea.vmem %s3, %s734
      $region52: #{clap_audio_encoder_forward.20} parent=47 // pred_fallthru
        _
    $region48: #{clap_audio_encoder_forward.20} parent=5 // pred_fallthru
      _
  $region6: #{clap_audio_encoder_forward.20} parent=0 // loop_footer
    %s13 = sadd.s32 1, %s9
  $region7: #{clap_audio_encoder_forward.20} parent=0 // loop_footer_branch
    %8 = sbr.rel target = $region3
  $region8: #{clap_audio_encoder_forward.20} parent=0 // loop_exit
    _

// kernel: clap_audio_encoder_forward.23
$region0: #{clap_audio_encoder_forward.23}
  #allocation0 [shape = 'u32[]', space=smem, size = 0x4, offset = 0x4, fixed_abs, tag = 'smem constant byte address 0x4 - core index']
  #allocation1 [shape = 'u32[72,128]{1,0:T(1,128)}', space=vmem, size = 0x9000, scoped, tag = 'internal scratch']
  #allocation2 [shape = 'f32[8,64]{1,0:T(8,128)}', space=vmem, size = 0x1000, scoped, tag = 'scratch operand']
  %s0 = inlined_call_operand.vmem [shape: bf16[8,128], index: 0, kind: input, shape index: {}]
  %s1 = inlined_call_operand.vmem [shape: bf16[128,64], index: 1, kind: input, shape index: {}]
  %s2 = inlined_call_operand.vmem [shape: f32[1,64], index: 2, kind: input, shape index: {}]
  %s3 = inlined_call_operand.vmem [shape: bf16[8,64], index: 3, kind: input, shape index: {}]
  %s4 = inlined_call_operand.vmem [shape: bf16[8,64], index: 4, kind: output, shape index: {}]
  %s5 = sld [smem:[#allocation0]]
  $region34: #{clap_audio_encoder_forward.23} parent=0
    _
  %s7 = ssub.s32 1, %s5
  %s8 = scalar_select 0, %s7, %s5
  // Predicated region
  $region2: #{clap_audio_encoder_forward.23} parent=0 // pred_check
    _
  $region3: #{clap_audio_encoder_forward.23} parent=0 // pred_check_branch
    %10 = sbr.rel (0) target = $region5
  $region4: #{clap_audio_encoder_forward.23} parent=0 // pred_region
    _
  $region5: #{clap_audio_encoder_forward.23} parent=0 // pred_fallthru
    _
  // Predicated region
  $region6: #{clap_audio_encoder_forward.23} parent=0 // pred_check
    _
  $region7: #{clap_audio_encoder_forward.23} parent=0 // pred_check_branch
    %12 = sbr.rel (0) target = $region9
  $region8: #{clap_audio_encoder_forward.23} parent=0 // pred_region
    _
  $region9: #{clap_audio_encoder_forward.23} parent=0 // pred_fallthru
    _
  // Predicated region
  $region10: #{clap_audio_encoder_forward.23} parent=0 // pred_check
    _
  $region11: #{clap_audio_encoder_forward.23} parent=0 // pred_check_branch
    %14 = sbr.rel (0) target = $region13
  $region12: #{clap_audio_encoder_forward.23} parent=0 // pred_region
    _
  $region13: #{clap_audio_encoder_forward.23} parent=0 // pred_fallthru
    _
  // Predicated region
  $region14: #{clap_audio_encoder_forward.23} parent=0 // pred_check
    _
  $region15: #{clap_audio_encoder_forward.23} parent=0 // pred_check_branch
    %16 = sbr.rel (0) target = $region17
  $region16: #{clap_audio_encoder_forward.23} parent=0 // pred_region
    _
  $region17: #{clap_audio_encoder_forward.23} parent=0 // pred_fallthru
    _
  %p17 = scmp.eq.s32.totalorder 0, 0
  // Predicated region
  $region18: #{clap_audio_encoder_forward.23} parent=0 // pred_check
    %p18 = pneg %p17
  $region19: #{clap_audio_encoder_forward.23} parent=0 // pred_check_branch
    %20 = sbr.rel (%p18) target = $region21
  $region20: #{clap_audio_encoder_forward.23} parent=0 // pred_region
    %vm21 = vcmask 523264
    %22 = vst.msk [vmem:[#allocation2] sm:$0xff] %vm21, 0.0
  $region21: #{clap_audio_encoder_forward.23} parent=0 // pred_fallthru
    _
  %v23 = vld [vmem:[#allocation2] sm:$0xff]
  %v24 = vld [vmem:[%s0] sm:$0xf]
  %v25 = vld [vmem:[%s1] sm:$0xf]
  %v26 = vld [vmem:[%s1 + $0x4] sm:$0xf]
  %v27 = vld [vmem:[%s1 + $0x8] sm:$0xf]
  %v28 = vld [vmem:[%s1 + $0xc] sm:$0xf]
  %v29 = vld [vmem:[%s1 + $0x10] sm:$0xf]
  %v30 = vld [vmem:[%s1 + $0x14] sm:$0xf]
  %v31 = vld [vmem:[%s1 + $0x18] sm:$0xf]
  %v32 = vld [vmem:[%s1 + $0x1c] sm:$0xf]
  %v33 = vld [vmem:[%s1 + $0x20] sm:$0xf]
  %v34 = vld [vmem:[%s1 + $0x24] sm:$0xf]
  %v35 = vld [vmem:[%s1 + $0x28] sm:$0xf]
  %v36 = vld [vmem:[%s1 + $0x2c] sm:$0xf]
  %v37 = vld [vmem:[%s1 + $0x30] sm:$0xf]
  %v38 = vld [vmem:[%s1 + $0x34] sm:$0xf]
  %v39 = vld [vmem:[%s1 + $0x38] sm:$0xf]
  %v40 = vld [vmem:[%s1 + $0x3c] sm:$0xf]
  %v57 = vunpack.c.l.b16 %v25
  %v58 = vunpack.c.l.b16 %v26
  %v59 = vunpack.c.l.b16 %v27
  %v60 = vunpack.c.l.b16 %v28
  %v61 = vunpack.c.l.b16 %v29
  %v62 = vunpack.c.l.b16 %v30
  %v63 = vunpack.c.l.b16 %v31
  %v64 = vunpack.c.l.b16 %v32
  %v65 = vunpack.c.l.b16 %v33
  %v66 = vunpack.c.l.b16 %v34
  %v67 = vunpack.c.l.b16 %v35
  %v68 = vunpack.c.l.b16 %v36
  %v69 = vunpack.c.l.b16 %v37
  %v70 = vunpack.c.l.b16 %v38
  %v71 = vunpack.c.l.b16 %v39
  %v72 = vunpack.c.l.b16 %v40
  %v73 = vpack.c.b16 %v58, %v57
  %v74 = vpack.c.b16 %v60, %v59
  %v75 = vpack.c.b16 %v62, %v61
  %v76 = vpack.c.b16 %v64, %v63
  %v77 = vpack.c.b16 %v66, %v65
  %v78 = vpack.c.b16 %v68, %v67
  %v79 = vpack.c.b16 %v70, %v69
  %v80 = vpack.c.b16 %v72, %v71
  %89 = vmatpush.bf16.msra.mxu0 %v80
  %90 = vmatpush.bf16.msra.mxu0 %v79
  %91 = vmatpush.bf16.msra.mxu0 %v78
  %92 = vmatpush.bf16.msra.mxu0 %v77
  %93 = vmatpush.bf16.msra.mxu0 %v76
  %94 = vmatpush.bf16.msra.mxu0 %v75
  %95 = vmatpush.bf16.msra.mxu0 %v74
  %96 = vmatpush.bf16.msra.mxu0 %v73
  %97 = vmatmul.bf16.gmra.mxu0 %v24
  %v98 = vpop.f32.mrf.mxu0
  %v99 = vadd.f32 0.0, %v98
  %v100 = vpop.f32.mrf.mxu0
  %101 = vdwg.mxu0
  %v102 = vadd.f32 %v23, %v99
  %vm103 = vcmask 523264
  %104 = vst.msk [vmem:[#allocation2] sm:$0xff] %vm103, %v102
  // Predicated region
  $region22: #{clap_audio_encoder_forward.23} parent=0 // pred_check
    %p105 = pneg %p17
  $region23: #{clap_audio_encoder_forward.23} parent=0 // pred_check_branch
    %107 = sbr.rel (%p105) target = $region25
  $region24: #{clap_audio_encoder_forward.23} parent=0 // pred_region
    %v108 = vld [vmem:[#allocation2] sm:$0xff]
    %v109 = vld [vmem:[%s2] sm:$0x1]
    %v111 = vperm.slane %v109, 0
    %v113 = vadd.f32 %v108, %v111
    %v114 = vld [vmem:[%s3] sm:$0xf]
    %v115 = vunpack.c.l.bf16 %v114
    %v116 = vadd.f32 %v113, %v115
    %v117 = vpack.c.bf16 %v116, %v116
    %vm118 = vcmask 519168
    %119 = vst.msk [vmem:[%s4] sm:$0xf] %vm118, %v117
  $region25: #{clap_audio_encoder_forward.23} parent=0 // pred_fallthru
    _
  // Predicated region
  $region26: #{clap_audio_encoder_forward.23} parent=0 // pred_check
    _
  $region27: #{clap_audio_encoder_forward.23} parent=0 // pred_check_branch
    %121 = sbr.rel (0) target = $region29
  $region28: #{clap_audio_encoder_forward.23} parent=0 // pred_region
    _
  $region29: #{clap_audio_encoder_forward.23} parent=0 // pred_fallthru
    _
  // Predicated region
  $region30: #{clap_audio_encoder_forward.23} parent=0 // pred_check
    _
  $region31: #{clap_audio_encoder_forward.23} parent=0 // pred_check_branch
    %123 = sbr.rel (0) target = $region33
  $region32: #{clap_audio_encoder_forward.23} parent=0 // pred_region
    _
  $region33: #{clap_audio_encoder_forward.23} parent=0 // pred_fallthru
    _

</llo_original>
